<compile_context>
chip_gen: v7x
topology: tpu7x:2x2x1
jax: 0.10.0
libtpu: 0.0.40
codegen_flags: <defaults>
</compile_context>

<pallas_src>
import jax
import jax.numpy as jnp
from jax import lax
from jax.experimental import pallas as pl
from jax.experimental.pallas import tpu as pltpu


def _round_up(x, m):
    return ((x + m - 1) // m) * m


def _pad_gates_last(w, H, Hp):
    """Per-gate zero-pad the last (4*H) axis to 4*Hp (PyTorch i,f,g,o order)."""
    if Hp == H:
        return w
    parts = [w[..., k * H:(k + 1) * H] for k in range(4)]
    pad = [(0, 0)] * (w.ndim - 1) + [(0, Hp - H)]
    return jnp.concatenate([jnp.pad(p, pad) for p in parts], axis=-1)


# ---------------------------------------------------------------------------
# Kernel 1/3: lane-dense GEMM with fused bias (used for the hoisted input
# projection and the batched output Linear).
# ---------------------------------------------------------------------------
def matmul_bias_kernel(a_ref, b_ref, bias_ref, o_ref):
    o_ref[...] = (jnp.dot(a_ref[...], b_ref[...],
                          preferred_element_type=jnp.float32)
                  + bias_ref[...])


def pallas_matmul_bias(a, b, bias, *, compute_dtype=jnp.float32):
    """out = a @ b + bias as one Pallas GEMM tiled over N (parallel grid).

    a: (M, K), b: (K, N), bias: (1, N) -> (M, N) float32.
    M is zero-padded to a multiple of 8, K to a multiple of 128 and N to a
    multiple of the lane tile (512 for wide outputs, 128 otherwise), so every
    block is (8,128)-aligned and every store is an unmasked lane-dense vst.
    """
    M, K = a.shape
    K2, N = b.shape
    assert K2 == K and bias.shape == (1, N)
    # Widest lane-dense tile that doesn't over-pad small N (vocab GEMM gets 512
    # lanes -> fewer grid steps / less per-step overhead; tiny N stays at 128).
    tn = next(t for t in (512, 256, 128) if N >= t or t == 128)
    Mp, Kp, Np = _round_up(M, 8), _round_up(K, 128), _round_up(N, tn)
    a_p = jnp.pad(a, ((0, Mp - M), (0, Kp - K))).astype(compute_dtype)
    b_p = jnp.pad(b, ((0, Kp - K), (0, Np - N))).astype(compute_dtype)
    bias_p = jnp.pad(bias, ((0, 0), (0, Np - N))).astype(jnp.float32)

    out = pl.pallas_call(
        matmul_bias_kernel,
        out_shape=jax.ShapeDtypeStruct((Mp, Np), jnp.float32),
        grid_spec=pltpu.PrefetchScalarGridSpec(
            num_scalar_prefetch=0,
            grid=(Np // tn,),
            in_specs=[
                pl.BlockSpec((Mp, Kp), lambda j: (0, 0)),   # LHS: invariant/resident
                pl.BlockSpec((Kp, tn), lambda j: (0, j)),   # weight tile over N
                pl.BlockSpec((1, tn), lambda j: (0, j)),    # bias tile over N
            ],
            out_specs=pl.BlockSpec((Mp, tn), lambda j: (0, j)),
        ),
        compiler_params=pltpu.CompilerParams(
            dimension_semantics=("parallel",)),
    )(a_p, b_p, bias_p)
    return out[:M, :N]


# ---------------------------------------------------------------------------
# Kernel 2/3: the LSTM recurrence. Single invocation, in-kernel unrolled loop.
# ---------------------------------------------------------------------------
def lstm_recurrence_kernel(xw_ref, w_hh_ref, h_out_ref):
    """xw_ref   : (T, B, 4*Hp) f32 -- precomputed x_t @ W_ih + (b_ih + b_hh),
                  gate order i,f,g,o, each gate zero-padded to Hp lanes.
       w_hh_ref : (Hp, 4*Hp)       -- hidden->gates weights (pre-transposed).
       h_out_ref: (T, B, Hp) f32   -- hidden state for every timestep.

    Only h @ W_hh sits on the serial critical path. Padded gate columns are
    zero, so padded h/c lanes remain exactly zero for every step.
    """
    T, B, _ = xw_ref.shape
    Hp = w_hh_ref.shape[0]

    def step(t, carry):
        h, c = carry                                          # f32 (B, Hp)
        gates = xw_ref[t] + jnp.dot(h.astype(w_hh_ref.dtype), w_hh_ref[...],
                                    preferred_element_type=jnp.float32)
        i = jax.nn.sigmoid(gates[:, 0 * Hp:1 * Hp])
        f = jax.nn.sigmoid(gates[:, 1 * Hp:2 * Hp])
        g = jnp.tanh(gates[:, 2 * Hp:3 * Hp])
        o = jax.nn.sigmoid(gates[:, 3 * Hp:4 * Hp])
        c_new = f * c + i * g
        h_new = o * jnp.tanh(c_new)
        h_out_ref[t] = h_new
        return h_new, c_new

    zeros = jnp.zeros((B, Hp), jnp.float32)                   # zero init state
    lax.fori_loop(0, T, step, (zeros, zeros), unroll=True)


# ---------------------------------------------------------------------------
# Forward wrapper
# ---------------------------------------------------------------------------
def decoder_forward(features, captions, params, *, compute_dtype=jnp.float32):
    """features: (B, E) f32, captions: (B, Tcap) int32 -> logits (B, Tcap, V)."""
    embed_table, w_ih, w_hh, b, w_out, b_out = params
    H = w_hh.shape[0]
    V = w_out.shape[1]
    Hp = _round_up(H, 128)

    # ---- glue (embedding gather + concat + layout): plain JAX --------------
    emb_tok = jnp.take(embed_table, captions[:, :-1], axis=0)          # (B,T-1,E)
    emb = jnp.concatenate([features[:, None, :], emb_tok], axis=1)     # (B,T,E)
    emb_tm = jnp.transpose(emb, (1, 0, 2)).astype(jnp.float32)         # (T,B,E)
    T, B, E = emb_tm.shape
    Bp = _round_up(B, 8)
    if Bp != B:
        emb_tm = jnp.pad(emb_tm, ((0, 0), (0, Bp - B), (0, 0)))

    # ---- parameter padding: gate-aligned, 128-lane hidden ------------------
    w_ih_p = _pad_gates_last(w_ih, H, Hp)                               # (E, 4Hp)
    w_hh_p = _pad_gates_last(jnp.pad(w_hh, ((0, Hp - H), (0, 0))), H, Hp)  # (Hp,4Hp)
    b_p = _pad_gates_last(b.reshape(1, 4 * H), H, Hp)                   # (1, 4Hp)
    w_out_p = jnp.pad(w_out, ((0, Hp - H), (0, 0)))                     # (Hp, V)

    # ---- (1) hoisted input projection: one big GEMM over all T*B rows ------
    xw = pallas_matmul_bias(emb_tm.reshape(T * Bp, E), w_ih_p, b_p,
                            compute_dtype=compute_dtype)                # (T*Bp,4Hp)
    xw_tm = xw.reshape(T, Bp, 4 * Hp)

    # ---- (2) sequential LSTM recurrence: a single kernel invocation --------
    h_tm = pl.pallas_call(
        lstm_recurrence_kernel,
        out_shape=jax.ShapeDtypeStruct((T, Bp, Hp), jnp.float32),
        grid_spec=pltpu.PrefetchScalarGridSpec(
            num_scalar_prefetch=0,
            grid=(1,),                                  # whole sequence, one step
            in_specs=[
                pl.BlockSpec((T, Bp, 4 * Hp), lambda i: (0, 0, 0)),
                pl.BlockSpec((Hp, 4 * Hp), lambda i: (0, 0)),
            ],
            out_specs=pl.BlockSpec((T, Bp, Hp), lambda i: (0, 0, 0)),
        ),
        compiler_params=pltpu.CompilerParams(
            dimension_semantics=("arbitrary",)),        # recurrence is sequential
    )(xw_tm, w_hh_p.astype(compute_dtype))

    # ---- (3) output Linear: one big lane-dense GEMM over all B*T rows ------
    # Transpose only the H-wide tensor back to batch-major (never V-wide data).
    h_bm = jnp.transpose(h_tm, (1, 0, 2)).reshape(Bp * T, Hp)           # (Bp*T,Hp)
    logits = pallas_matmul_bias(h_bm, w_out_p, b_out.reshape(1, V),
                                compute_dtype=compute_dtype)            # (Bp*T,V)
    return logits.reshape(Bp, T, V)[:B]                                 # (B,T,V)


# ---------------------------------------------------------------------------
# Pure-JAX reference (lax.scan LSTM) for correctness checking.
# ---------------------------------------------------------------------------
def reference_forward(features, captions, params):
    embed_table, w_ih, w_hh, b, w_out, b_out = params
    emb_tok = jnp.take(embed_table, captions[:, :-1], axis=0)
    emb = jnp.concatenate([features[:, None, :], emb_tok], axis=1)
    H = w_hh.shape[0]
    B = emb.shape[0]

    def step(carry, x):
        h, c = carry
        gates = x @ w_ih + h @ w_hh + b
        i = jax.nn.sigmoid(gates[:, :H])
        f = jax.nn.sigmoid(gates[:, H:2 * H])
        g = jnp.tanh(gates[:, 2 * H:3 * H])
        o = jax.nn.sigmoid(gates[:, 3 * H:])
        c = f * c + i * g
        h = o * jnp.tanh(c)
        return (h, c), h

    h0 = jnp.zeros((B, H), jnp.float32)
    _, hs = lax.scan(step, (h0, h0), jnp.transpose(emb, (1, 0, 2)))
    logits = hs @ w_out + b_out
    return jnp.transpose(logits, (1, 0, 2))


def init_params(key, vocab_size, embed_size, hidden_size):
    """Synthetic parameters with PyTorch-equivalent shapes
    (LSTM / Linear weights stored pre-transposed for right-multiplication)."""
    ks = jax.random.split(key, 7)
    scale = 0.1
    embed_table = scale * jax.random.normal(ks[0], (vocab_size, embed_size), jnp.float32)
    w_ih = scale * jax.random.normal(ks[1], (embed_size, 4 * hidden_size), jnp.float32)
    w_hh = scale * jax.random.normal(ks[2], (hidden_size, 4 * hidden_size), jnp.float32)
    b_ih = scale * jax.random.normal(ks[3], (4 * hidden_size,), jnp.float32)
    b_hh = scale * jax.random.normal(ks[4], (4 * hidden_size,), jnp.float32)
    b = (b_ih + b_hh).reshape(1, 4 * hidden_size)
    w_out = scale * jax.random.normal(ks[5], (hidden_size, vocab_size), jnp.float32)
    b_out = scale * jax.random.normal(ks[6], (1, vocab_size), jnp.float32)
    return (embed_table, w_ih, w_hh, b, w_out, b_out)


if __name__ == "__main__":
    # Small shapes consistent with the module's forward:
    #   features (B, E), captions (B, Tcap) int -> logits (B, Tcap, V)
    B, Tcap = 8, 10
    vocab_size, embed_size, hidden_size = 64, 32, 32

    key = jax.random.PRNGKey(0)
    k_par, k_feat, k_cap = jax.random.split(key, 3)

    params = init_params(k_par, vocab_size, embed_size, hidden_size)
    features = jax.random.normal(k_feat, (B, embed_size), jnp.float32)
    captions = jax.random.randint(k_cap, (B, Tcap), 0, vocab_size, jnp.int32)

    fwd = jax.jit(decoder_forward)
    out = jax.block_until_ready(fwd(features, captions, params))

    ref = reference_forward(features, captions, params)
    assert out.shape == (B, Tcap, vocab_size)
    assert bool(jnp.all(jnp.isfinite(out)))
    assert bool(jnp.allclose(out, ref, atol=1e-2, rtol=1e-2)), "mismatch vs reference"

    # TODO(synk): _beam_search path (host-side priority-queue beam search with
    # data-dependent Python control flow) has no clean Pallas equivalent and is
    # not implemented; only the training-time _forward path is kernelized.
    print("KERNEL_OK")
</pallas_src>

<mosaic_0001>
module attributes {stable_mosaic.version = 11 : i64} {
  func.func @matmul_bias_kernel(%arg0: i32, %arg1: memref<80x128xf32, #tpu.memory_space<vmem>>, %arg2: memref<128x512xf32, #tpu.memory_space<vmem>>, %arg3: memref<1x512xf32, #tpu.memory_space<vmem>>, %arg4: memref<80x512xf32, #tpu.memory_space<vmem>>) attributes {dimension_semantics = [#tpu.dimension_semantics<parallel>], iteration_bounds = array<i64: 1>, scalar_prefetch = 0 : i64, scratch_operands = 0 : i64, tpu.core_type = #tpu.core_type<tc>, window_params = [{pipeline_mode = #tpu.pipeline_mode<synchronous>, transform_indices = @transform_0, window_bounds = array<i64: 80, 128>}, {transform_indices = @transform_1, window_bounds = array<i64: 128, 512>}, {transform_indices = @transform_2, window_bounds = array<i64: 1, 512>}, {transform_indices = @transform_3, window_bounds = array<i64: 80, 512>}]} {
    %c0 = arith.constant 0 : index
    %c0_0 = arith.constant 0 : index
    %0 = vector.load %arg1[%c0, %c0_0] : memref<80x128xf32, #tpu.memory_space<vmem>>, vector<80x128xf32>
    %c0_1 = arith.constant 0 : index
    %c0_2 = arith.constant 0 : index
    %1 = vector.load %arg2[%c0_1, %c0_2] : memref<128x512xf32, #tpu.memory_space<vmem>>, vector<128x512xf32>
    %cst = arith.constant dense<0.000000e+00> : vector<80x512xf32>
    %2 = tpu.matmul %0, %1, %cst {dimension_numbers = #tpu.dot_dimension_numbers<[1], [0], [0], [1], [0, 0, 1, 1], [], []>} : vector<80x128xf32>, vector<128x512xf32>, vector<80x512xf32> -> vector<80x512xf32>
    %c0_3 = arith.constant 0 : index
    %c0_4 = arith.constant 0 : index
    %3 = vector.load %arg3[%c0_3, %c0_4] : memref<1x512xf32, #tpu.memory_space<vmem>>, vector<1x512xf32>
    %4 = vector.broadcast %3 : vector<1x512xf32> to vector<80x512xf32>
    %5 = arith.addf %2, %4 : vector<80x512xf32>
    %c0_5 = arith.constant 0 : index
    %c0_6 = arith.constant 0 : index
    %6 = vector.load %arg4[%c0_5, %c0_6] : memref<80x512xf32, #tpu.memory_space<vmem>>, vector<80x512xf32>
    tpu.vector_store %arg4[%c0_5, %c0_6], %5 {strides = array<i32>} : memref<80x512xf32, #tpu.memory_space<vmem>>, vector<80x512xf32>,
    return
  }
  func.func @transform_0(%arg0: i32) -> (i32, i32) {
    %c0_i32 = arith.constant 0 : i32
    %c0_i32_0 = arith.constant 0 : i32
    %c0_i32_1 = arith.constant 0 : i32
    return %c0_i32, %c0_i32_0 : i32, i32
  }
  func.func @transform_1(%arg0: i32) -> (i32, i32) {
    %c0_i32 = arith.constant 0 : i32
    %c0_i32_0 = arith.constant 0 : i32
    return %c0_i32, %arg0 : i32, i32
  }
  func.func @transform_2(%arg0: i32) -> (i32, i32) {
    %c0_i32 = arith.constant 0 : i32
    %c0_i32_0 = arith.constant 0 : i32
    return %c0_i32, %arg0 : i32, i32
  }
  func.func @transform_3(%arg0: i32) -> (i32, i32) {
    %c0_i32 = arith.constant 0 : i32
    %c0_i32_0 = arith.constant 0 : i32
    return %c0_i32, %arg0 : i32, i32
  }
}

module attributes {stable_mosaic.version = 11 : i64} {
  func.func @lstm_recurrence_kernel(%arg0: i32, %arg1: memref<10x8x512xf32, #tpu.memory_space<vmem>>, %arg2: memref<128x512xf32, #tpu.memory_space<vmem>>, %arg3: memref<10x8x128xf32, #tpu.memory_space<vmem>>) attributes {dimension_semantics = [#tpu.dimension_semantics<arbitrary>], iteration_bounds = array<i64: 1>, scalar_prefetch = 0 : i64, scratch_operands = 0 : i64, tpu.core_type = #tpu.core_type<tc>, window_params = [{pipeline_mode = #tpu.pipeline_mode<synchronous>, transform_indices = @transform_0, window_bounds = array<i64: 10, 8, 512>}, {pipeline_mode = #tpu.pipeline_mode<synchronous>, transform_indices = @transform_1, window_bounds = array<i64: 128, 512>}, {pipeline_mode = #tpu.pipeline_mode<synchronous>, transform_indices = @transform_2, window_bounds = array<i64: 10, 8, 128>}]} {
    %cst = arith.constant 0.000000e+00 : f32
    %0 = vector.broadcast %cst : f32 to vector<8x128xf32>
    %c0_i32 = arith.constant 0 : i32
    %1 = arith.index_cast %c0_i32 : i32 to index
    %c0 = arith.constant 0 : index
    %c0_0 = arith.constant 0 : index
    %2 = vector.load %arg1[%1, %c0, %c0_0] : memref<10x8x512xf32, #tpu.memory_space<vmem>>, vector<1x8x512xf32>
    %3 = vector.shape_cast %2 : vector<1x8x512xf32> to vector<8x512xf32>
    %c0_1 = arith.constant 0 : index
    %c0_2 = arith.constant 0 : index
    %4 = vector.load %arg2[%c0_1, %c0_2] : memref<128x512xf32, #tpu.memory_space<vmem>>, vector<128x512xf32>
    %cst_3 = arith.constant dense<0.000000e+00> : vector<8x512xf32>
    %5 = tpu.matmul %0, %4, %cst_3 {dimension_numbers = #tpu.dot_dimension_numbers<[1], [0], [0], [1], [0, 0, 1, 1], [], []>} : vector<8x128xf32>, vector<128x512xf32>, vector<8x512xf32> -> vector<8x512xf32>
    %6 = arith.addf %3, %5 : vector<8x512xf32>
    %7 = vector.extract_strided_slice %6 {offsets = [0, 0], sizes = [8, 128], strides = [1, 1]} : vector<8x512xf32> to vector<8x128xf32>
    %8 = arith.negf %7 : vector<8x128xf32>
    %9 = math.exp %8 : vector<8x128xf32>
    %cst_4 = arith.constant 1.000000e+00 : f32
    %10 = vector.broadcast %cst_4 : f32 to vector<8x128xf32>
    %11 = arith.addf %10, %9 : vector<8x128xf32>
    %12 = arith.divf %10, %11 : vector<8x128xf32>
    %13 = vector.extract_strided_slice %6 {offsets = [0, 128], sizes = [8, 128], strides = [1, 1]} : vector<8x512xf32> to vector<8x128xf32>
    %14 = arith.negf %13 : vector<8x128xf32>
    %15 = math.exp %14 : vector<8x128xf32>
    %cst_5 = arith.constant 1.000000e+00 : f32
    %16 = vector.broadcast %cst_5 : f32 to vector<8x128xf32>
    %17 = arith.addf %16, %15 : vector<8x128xf32>
    %18 = arith.divf %16, %17 : vector<8x128xf32>
    %19 = vector.extract_strided_slice %6 {offsets = [0, 256], sizes = [8, 128], strides = [1, 1]} : vector<8x512xf32> to vector<8x128xf32>
    %20 = math.tanh %19 : vector<8x128xf32>
    %21 = vector.extract_strided_slice %6 {offsets = [0, 384], sizes = [8, 128], strides = [1, 1]} : vector<8x512xf32> to vector<8x128xf32>
    %22 = arith.negf %21 : vector<8x128xf32>
    %23 = math.exp %22 : vector<8x128xf32>
    %cst_6 = arith.constant 1.000000e+00 : f32
    %24 = vector.broadcast %cst_6 : f32 to vector<8x128xf32>
    %25 = arith.addf %24, %23 : vector<8x128xf32>
    %26 = arith.divf %24, %25 : vector<8x128xf32>
    %27 = arith.mulf %18, %0 : vector<8x128xf32>
    %28 = arith.mulf %12, %20 : vector<8x128xf32>
    %29 = arith.addf %27, %28 : vector<8x128xf32>
    %30 = math.tanh %29 : vector<8x128xf32>
    %31 = arith.mulf %26, %30 : vector<8x128xf32>
    %32 = arith.index_cast %c0_i32 : i32 to index
    %c0_7 = arith.constant 0 : index
    %c0_8 = arith.constant 0 : index
    %33 = vector.load %arg3[%32, %c0_7, %c0_8] : memref<10x8x128xf32, #tpu.memory_space<vmem>>, vector<1x8x128xf32>
    %34 = vector.shape_cast %33 : vector<1x8x128xf32> to vector<8x128xf32>
    %35 = vector.shape_cast %31 : vector<8x128xf32> to vector<1x8x128xf32>
    tpu.vector_store %arg3[%32, %c0_7, %c0_8], %35 {strides = array<i32>} : memref<10x8x128xf32, #tpu.memory_space<vmem>>, vector<1x8x128xf32>,
    %c1_i32 = arith.constant 1 : i32
    %36 = arith.index_cast %c1_i32 : i32 to index
    %c0_9 = arith.constant 0 : index
    %c0_10 = arith.constant 0 : index
    %37 = vector.load %arg1[%36, %c0_9, %c0_10] : memref<10x8x512xf32, #tpu.memory_space<vmem>>, vector<1x8x512xf32>
    %38 = vector.shape_cast %37 : vector<1x8x512xf32> to vector<8x512xf32>
    %c0_11 = arith.constant 0 : index
    %c0_12 = arith.constant 0 : index
    %39 = vector.load %arg2[%c0_11, %c0_12] : memref<128x512xf32, #tpu.memory_space<vmem>>, vector<128x512xf32>
    %cst_13 = arith.constant dense<0.000000e+00> : vector<8x512xf32>
    %40 = tpu.matmul %31, %39, %cst_13 {dimension_numbers = #tpu.dot_dimension_numbers<[1], [0], [0], [1], [0, 0, 1, 1], [], []>} : vector<8x128xf32>, vector<128x512xf32>, vector<8x512xf32> -> vector<8x512xf32>
    %41 = arith.addf %38, %40 : vector<8x512xf32>
    %42 = vector.extract_strided_slice %41 {offsets = [0, 0], sizes = [8, 128], strides = [1, 1]} : vector<8x512xf32> to vector<8x128xf32>
    %43 = arith.negf %42 : vector<8x128xf32>
    %44 = math.exp %43 : vector<8x128xf32>
    %cst_14 = arith.constant 1.000000e+00 : f32
    %45 = vector.broadcast %cst_14 : f32 to vector<8x128xf32>
    %46 = arith.addf %45, %44 : vector<8x128xf32>
    %47 = arith.divf %45, %46 : vector<8x128xf32>
    %48 = vector.extract_strided_slice %41 {offsets = [0, 128], sizes = [8, 128], strides = [1, 1]} : vector<8x512xf32> to vector<8x128xf32>
    %49 = arith.negf %48 : vector<8x128xf32>
    %50 = math.exp %49 : vector<8x128xf32>
    %cst_15 = arith.constant 1.000000e+00 : f32
    %51 = vector.broadcast %cst_15 : f32 to vector<8x128xf32>
    %52 = arith.addf %51, %50 : vector<8x128xf32>
    %53 = arith.divf %51, %52 : vector<8x128xf32>
    %54 = vector.extract_strided_slice %41 {offsets = [0, 256], sizes = [8, 128], strides = [1, 1]} : vector<8x512xf32> to vector<8x128xf32>
    %55 = math.tanh %54 : vector<8x128xf32>
    %56 = vector.extract_strided_slice %41 {offsets = [0, 384], sizes = [8, 128], strides = [1, 1]} : vector<8x512xf32> to vector<8x128xf32>
    %57 = arith.negf %56 : vector<8x128xf32>
    %58 = math.exp %57 : vector<8x128xf32>
    %cst_16 = arith.constant 1.000000e+00 : f32
    %59 = vector.broadcast %cst_16 : f32 to vector<8x128xf32>
    %60 = arith.addf %59, %58 : vector<8x128xf32>
    %61 = arith.divf %59, %60 : vector<8x128xf32>
    %62 = arith.mulf %53, %29 : vector<8x128xf32>
    %63 = arith.mulf %47, %55 : vector<8x128xf32>
    %64 = arith.addf %62, %63 : vector<8x128xf32>
    %65 = math.tanh %64 : vector<8x128xf32>
    %66 = arith.mulf %61, %65 : vector<8x128xf32>
    %67 = arith.index_cast %c1_i32 : i32 to index
    %c0_17 = arith.constant 0 : index
    %c0_18 = arith.constant 0 : index
    %68 = vector.load %arg3[%67, %c0_17, %c0_18] : memref<10x8x128xf32, #tpu.memory_space<vmem>>, vector<1x8x128xf32>
    %69 = vector.shape_cast %68 : vector<1x8x128xf32> to vector<8x128xf32>
    %70 = vector.shape_cast %66 : vector<8x128xf32> to vector<1x8x128xf32>
    tpu.vector_store %arg3[%67, %c0_17, %c0_18], %70 {strides = array<i32>} : memref<10x8x128xf32, #tpu.memory_space<vmem>>, vector<1x8x128xf32>,
    %c2_i32 = arith.constant 2 : i32
    %71 = arith.index_cast %c2_i32 : i32 to index
    %c0_19 = arith.constant 0 : index
    %c0_20 = arith.constant 0 : index
    %72 = vector.load %arg1[%71, %c0_19, %c0_20] : memref<10x8x512xf32, #tpu.memory_space<vmem>>, vector<1x8x512xf32>
    %73 = vector.shape_cast %72 : vector<1x8x512xf32> to vector<8x512xf32>
    %c0_21 = arith.constant 0 : index
    %c0_22 = arith.constant 0 : index
    %74 = vector.load %arg2[%c0_21, %c0_22] : memref<128x512xf32, #tpu.memory_space<vmem>>, vector<128x512xf32>
    %cst_23 = arith.constant dense<0.000000e+00> : vector<8x512xf32>
    %75 = tpu.matmul %66, %74, %cst_23 {dimension_numbers = #tpu.dot_dimension_numbers<[1], [0], [0], [1], [0, 0, 1, 1], [], []>} : vector<8x128xf32>, vector<128x512xf32>, vector<8x512xf32> -> vector<8x512xf32>
    %76 = arith.addf %73, %75 : vector<8x512xf32>
    %77 = vector.extract_strided_slice %76 {offsets = [0, 0], sizes = [8, 128], strides = [1, 1]} : vector<8x512xf32> to vector<8x128xf32>
    %78 = arith.negf %77 : vector<8x128xf32>
    %79 = math.exp %78 : vector<8x128xf32>
    %cst_24 = arith.constant 1.000000e+00 : f32
    %80 = vector.broadcast %cst_24 : f32 to vector<8x128xf32>
    %81 = arith.addf %80, %79 : vector<8x128xf32>
    %82 = arith.divf %80, %81 : vector<8x128xf32>
    %83 = vector.extract_strided_slice %76 {offsets = [0, 128], sizes = [8, 128], strides = [1, 1]} : vector<8x512xf32> to vector<8x128xf32>
    %84 = arith.negf %83 : vector<8x128xf32>
    %85 = math.exp %84 : vector<8x128xf32>
    %cst_25 = arith.constant 1.000000e+00 : f32
    %86 = vector.broadcast %cst_25 : f32 to vector<8x128xf32>
    %87 = arith.addf %86, %85 : vector<8x128xf32>
    %88 = arith.divf %86, %87 : vector<8x128xf32>
    %89 = vector.extract_strided_slice %76 {offsets = [0, 256], sizes = [8, 128], strides = [1, 1]} : vector<8x512xf32> to vector<8x128xf32>
    %90 = math.tanh %89 : vector<8x128xf32>
    %91 = vector.extract_strided_slice %76 {offsets = [0, 384], sizes = [8, 128], strides = [1, 1]} : vector<8x512xf32> to vector<8x128xf32>
    %92 = arith.negf %91 : vector<8x128xf32>
    %93 = math.exp %92 : vector<8x128xf32>
    %cst_26 = arith.constant 1.000000e+00 : f32
    %94 = vector.broadcast %cst_26 : f32 to vector<8x128xf32>
    %95 = arith.addf %94, %93 : vector<8x128xf32>
    %96 = arith.divf %94, %95 : vector<8x128xf32>
    %97 = arith.mulf %88, %64 : vector<8x128xf32>
    %98 = arith.mulf %82, %90 : vector<8x128xf32>
    %99 = arith.addf %97, %98 : vector<8x128xf32>
    %100 = math.tanh %99 : vector<8x128xf32>
    %101 = arith.mulf %96, %100 : vector<8x128xf32>
    %102 = arith.index_cast %c2_i32 : i32 to index
    %c0_27 = arith.constant 0 : index
    %c0_28 = arith.constant 0 : index
    %103 = vector.load %arg3[%102, %c0_27, %c0_28] : memref<10x8x128xf32, #tpu.memory_space<vmem>>, vector<1x8x128xf32>
    %104 = vector.shape_cast %103 : vector<1x8x128xf32> to vector<8x128xf32>
    %105 = vector.shape_cast %101 : vector<8x128xf32> to vector<1x8x128xf32>
    tpu.vector_store %arg3[%102, %c0_27, %c0_28], %105 {strides = array<i32>} : memref<10x8x128xf32, #tpu.memory_space<vmem>>, vector<1x8x128xf32>,
    %c3_i32 = arith.constant 3 : i32
    %106 = arith.index_cast %c3_i32 : i32 to index
    %c0_29 = arith.constant 0 : index
    %c0_30 = arith.constant 0 : index
    %107 = vector.load %arg1[%106, %c0_29, %c0_30] : memref<10x8x512xf32, #tpu.memory_space<vmem>>, vector<1x8x512xf32>
    %108 = vector.shape_cast %107 : vector<1x8x512xf32> to vector<8x512xf32>
    %c0_31 = arith.constant 0 : index
    %c0_32 = arith.constant 0 : index
    %109 = vector.load %arg2[%c0_31, %c0_32] : memref<128x512xf32, #tpu.memory_space<vmem>>, vector<128x512xf32>
    %cst_33 = arith.constant dense<0.000000e+00> : vector<8x512xf32>
    %110 = tpu.matmul %101, %109, %cst_33 {dimension_numbers = #tpu.dot_dimension_numbers<[1], [0], [0], [1], [0, 0, 1, 1], [], []>} : vector<8x128xf32>, vector<128x512xf32>, vector<8x512xf32> -> vector<8x512xf32>
    %111 = arith.addf %108, %110 : vector<8x512xf32>
    %112 = vector.extract_strided_slice %111 {offsets = [0, 0], sizes = [8, 128], strides = [1, 1]} : vector<8x512xf32> to vector<8x128xf32>
    %113 = arith.negf %112 : vector<8x128xf32>
    %114 = math.exp %113 : vector<8x128xf32>
    %cst_34 = arith.constant 1.000000e+00 : f32
    %115 = vector.broadcast %cst_34 : f32 to vector<8x128xf32>
    %116 = arith.addf %115, %114 : vector<8x128xf32>
    %117 = arith.divf %115, %116 : vector<8x128xf32>
    %118 = vector.extract_strided_slice %111 {offsets = [0, 128], sizes = [8, 128], strides = [1, 1]} : vector<8x512xf32> to vector<8x128xf32>
    %119 = arith.negf %118 : vector<8x128xf32>
    %120 = math.exp %119 : vector<8x128xf32>
    %cst_35 = arith.constant 1.000000e+00 : f32
    %121 = vector.broadcast %cst_35 : f32 to vector<8x128xf32>
    %122 = arith.addf %121, %120 : vector<8x128xf32>
    %123 = arith.divf %121, %122 : vector<8x128xf32>
    %124 = vector.extract_strided_slice %111 {offsets = [0, 256], sizes = [8, 128], strides = [1, 1]} : vector<8x512xf32> to vector<8x128xf32>
    %125 = math.tanh %124 : vector<8x128xf32>
    %126 = vector.extract_strided_slice %111 {offsets = [0, 384], sizes = [8, 128], strides = [1, 1]} : vector<8x512xf32> to vector<8x128xf32>
    %127 = arith.negf %126 : vector<8x128xf32>
    %128 = math.exp %127 : vector<8x128xf32>
    %cst_36 = arith.constant 1.000000e+00 : f32
    %129 = vector.broadcast %cst_36 : f32 to vector<8x128xf32>
    %130 = arith.addf %129, %128 : vector<8x128xf32>
    %131 = arith.divf %129, %130 : vector<8x128xf32>
    %132 = arith.mulf %123, %99 : vector<8x128xf32>
    %133 = arith.mulf %117, %125 : vector<8x128xf32>
    %134 = arith.addf %132, %133 : vector<8x128xf32>
    %135 = math.tanh %134 : vector<8x128xf32>
    %136 = arith.mulf %131, %135 : vector<8x128xf32>
    %137 = arith.index_cast %c3_i32 : i32 to index
    %c0_37 = arith.constant 0 : index
    %c0_38 = arith.constant 0 : index
    %138 = vector.load %arg3[%137, %c0_37, %c0_38] : memref<10x8x128xf32, #tpu.memory_space<vmem>>, vector<1x8x128xf32>
    %139 = vector.shape_cast %138 : vector<1x8x128xf32> to vector<8x128xf32>
    %140 = vector.shape_cast %136 : vector<8x128xf32> to vector<1x8x128xf32>
    tpu.vector_store %arg3[%137, %c0_37, %c0_38], %140 {strides = array<i32>} : memref<10x8x128xf32, #tpu.memory_space<vmem>>, vector<1x8x128xf32>,
    %c4_i32 = arith.constant 4 : i32
    %141 = arith.index_cast %c4_i32 : i32 to index
    %c0_39 = arith.constant 0 : index
    %c0_40 = arith.constant 0 : index
    %142 = vector.load %arg1[%141, %c0_39, %c0_40] : memref<10x8x512xf32, #tpu.memory_space<vmem>>, vector<1x8x512xf32>
    %143 = vector.shape_cast %142 : vector<1x8x512xf32> to vector<8x512xf32>
    %c0_41 = arith.constant 0 : index
    %c0_42 = arith.constant 0 : index
    %144 = vector.load %arg2[%c0_41, %c0_42] : memref<128x512xf32, #tpu.memory_space<vmem>>, vector<128x512xf32>
    %cst_43 = arith.constant dense<0.000000e+00> : vector<8x512xf32>
    %145 = tpu.matmul %136, %144, %cst_43 {dimension_numbers = #tpu.dot_dimension_numbers<[1], [0], [0], [1], [0, 0, 1, 1], [], []>} : vector<8x128xf32>, vector<128x512xf32>, vector<8x512xf32> -> vector<8x512xf32>
    %146 = arith.addf %143, %145 : vector<8x512xf32>
    %147 = vector.extract_strided_slice %146 {offsets = [0, 0], sizes = [8, 128], strides = [1, 1]} : vector<8x512xf32> to vector<8x128xf32>
    %148 = arith.negf %147 : vector<8x128xf32>
    %149 = math.exp %148 : vector<8x128xf32>
    %cst_44 = arith.constant 1.000000e+00 : f32
    %150 = vector.broadcast %cst_44 : f32 to vector<8x128xf32>
    %151 = arith.addf %150, %149 : vector<8x128xf32>
    %152 = arith.divf %150, %151 : vector<8x128xf32>
    %153 = vector.extract_strided_slice %146 {offsets = [0, 128], sizes = [8, 128], strides = [1, 1]} : vector<8x512xf32> to vector<8x128xf32>
    %154 = arith.negf %153 : vector<8x128xf32>
    %155 = math.exp %154 : vector<8x128xf32>
    %cst_45 = arith.constant 1.000000e+00 : f32
    %156 = vector.broadcast %cst_45 : f32 to vector<8x128xf32>
    %157 = arith.addf %156, %155 : vector<8x128xf32>
    %158 = arith.divf %156, %157 : vector<8x128xf32>
    %159 = vector.extract_strided_slice %146 {offsets = [0, 256], sizes = [8, 128], strides = [1, 1]} : vector<8x512xf32> to vector<8x128xf32>
    %160 = math.tanh %159 : vector<8x128xf32>
    %161 = vector.extract_strided_slice %146 {offsets = [0, 384], sizes = [8, 128], strides = [1, 1]} : vector<8x512xf32> to vector<8x128xf32>
    %162 = arith.negf %161 : vector<8x128xf32>
    %163 = math.exp %162 : vector<8x128xf32>
    %cst_46 = arith.constant 1.000000e+00 : f32
    %164 = vector.broadcast %cst_46 : f32 to vector<8x128xf32>
    %165 = arith.addf %164, %163 : vector<8x128xf32>
    %166 = arith.divf %164, %165 : vector<8x128xf32>
    %167 = arith.mulf %158, %134 : vector<8x128xf32>
    %168 = arith.mulf %152, %160 : vector<8x128xf32>
    %169 = arith.addf %167, %168 : vector<8x128xf32>
    %170 = math.tanh %169 : vector<8x128xf32>
    %171 = arith.mulf %166, %170 : vector<8x128xf32>
    %172 = arith.index_cast %c4_i32 : i32 to index
    %c0_47 = arith.constant 0 : index
    %c0_48 = arith.constant 0 : index
    %173 = vector.load %arg3[%172, %c0_47, %c0_48] : memref<10x8x128xf32, #tpu.memory_space<vmem>>, vector<1x8x128xf32>
    %174 = vector.shape_cast %173 : vector<1x8x128xf32> to vector<8x128xf32>
    %175 = vector.shape_cast %171 : vector<8x128xf32> to vector<1x8x128xf32>
    tpu.vector_store %arg3[%172, %c0_47, %c0_48], %175 {strides = array<i32>} : memref<10x8x128xf32, #tpu.memory_space<vmem>>, vector<1x8x128xf32>,
    %c5_i32 = arith.constant 5 : i32
    %176 = arith.index_cast %c5_i32 : i32 to index
    %c0_49 = arith.constant 0 : index
    %c0_50 = arith.constant 0 : index
    %177 = vector.load %arg1[%176, %c0_49, %c0_50] : memref<10x8x512xf32, #tpu.memory_space<vmem>>, vector<1x8x512xf32>
    %178 = vector.shape_cast %177 : vector<1x8x512xf32> to vector<8x512xf32>
    %c0_51 = arith.constant 0 : index
    %c0_52 = arith.constant 0 : index
    %179 = vector.load %arg2[%c0_51, %c0_52] : memref<128x512xf32, #tpu.memory_space<vmem>>, vector<128x512xf32>
    %cst_53 = arith.constant dense<0.000000e+00> : vector<8x512xf32>
    %180 = tpu.matmul %171, %179, %cst_53 {dimension_numbers = #tpu.dot_dimension_numbers<[1], [0], [0], [1], [0, 0, 1, 1], [], []>} : vector<8x128xf32>, vector<128x512xf32>, vector<8x512xf32> -> vector<8x512xf32>
    %181 = arith.addf %178, %180 : vector<8x512xf32>
    %182 = vector.extract_strided_slice %181 {offsets = [0, 0], sizes = [8, 128], strides = [1, 1]} : vector<8x512xf32> to vector<8x128xf32>
    %183 = arith.negf %182 : vector<8x128xf32>
    %184 = math.exp %183 : vector<8x128xf32>
    %cst_54 = arith.constant 1.000000e+00 : f32
    %185 = vector.broadcast %cst_54 : f32 to vector<8x128xf32>
    %186 = arith.addf %185, %184 : vector<8x128xf32>
    %187 = arith.divf %185, %186 : vector<8x128xf32>
    %188 = vector.extract_strided_slice %181 {offsets = [0, 128], sizes = [8, 128], strides = [1, 1]} : vector<8x512xf32> to vector<8x128xf32>
    %189 = arith.negf %188 : vector<8x128xf32>
    %190 = math.exp %189 : vector<8x128xf32>
    %cst_55 = arith.constant 1.000000e+00 : f32
    %191 = vector.broadcast %cst_55 : f32 to vector<8x128xf32>
    %192 = arith.addf %191, %190 : vector<8x128xf32>
    %193 = arith.divf %191, %192 : vector<8x128xf32>
    %194 = vector.extract_strided_slice %181 {offsets = [0, 256], sizes = [8, 128], strides = [1, 1]} : vector<8x512xf32> to vector<8x128xf32>
    %195 = math.tanh %194 : vector<8x128xf32>
    %196 = vector.extract_strided_slice %181 {offsets = [0, 384], sizes = [8, 128], strides = [1, 1]} : vector<8x512xf32> to vector<8x128xf32>
    %197 = arith.negf %196 : vector<8x128xf32>
    %198 = math.exp %197 : vector<8x128xf32>
    %cst_56 = arith.constant 1.000000e+00 : f32
    %199 = vector.broadcast %cst_56 : f32 to vector<8x128xf32>
    %200 = arith.addf %199, %198 : vector<8x128xf32>
    %201 = arith.divf %199, %200 : vector<8x128xf32>
    %202 = arith.mulf %193, %169 : vector<8x128xf32>
    %203 = arith.mulf %187, %195 : vector<8x128xf32>
    %204 = arith.addf %202, %203 : vector<8x128xf32>
    %205 = math.tanh %204 : vector<8x128xf32>
    %206 = arith.mulf %201, %205 : vector<8x128xf32>
    %207 = arith.index_cast %c5_i32 : i32 to index
    %c0_57 = arith.constant 0 : index
    %c0_58 = arith.constant 0 : index
    %208 = vector.load %arg3[%207, %c0_57, %c0_58] : memref<10x8x128xf32, #tpu.memory_space<vmem>>, vector<1x8x128xf32>
    %209 = vector.shape_cast %208 : vector<1x8x128xf32> to vector<8x128xf32>
    %210 = vector.shape_cast %206 : vector<8x128xf32> to vector<1x8x128xf32>
    tpu.vector_store %arg3[%207, %c0_57, %c0_58], %210 {strides = array<i32>} : memref<10x8x128xf32, #tpu.memory_space<vmem>>, vector<1x8x128xf32>,
    %c6_i32 = arith.constant 6 : i32
    %211 = arith.index_cast %c6_i32 : i32 to index
    %c0_59 = arith.constant 0 : index
    %c0_60 = arith.constant 0 : index
    %212 = vector.load %arg1[%211, %c0_59, %c0_60] : memref<10x8x512xf32, #tpu.memory_space<vmem>>, vector<1x8x512xf32>
    %213 = vector.shape_cast %212 : vector<1x8x512xf32> to vector<8x512xf32>
    %c0_61 = arith.constant 0 : index
    %c0_62 = arith.constant 0 : index
    %214 = vector.load %arg2[%c0_61, %c0_62] : memref<128x512xf32, #tpu.memory_space<vmem>>, vector<128x512xf32>
    %cst_63 = arith.constant dense<0.000000e+00> : vector<8x512xf32>
    %215 = tpu.matmul %206, %214, %cst_63 {dimension_numbers = #tpu.dot_dimension_numbers<[1], [0], [0], [1], [0, 0, 1, 1], [], []>} : vector<8x128xf32>, vector<128x512xf32>, vector<8x512xf32> -> vector<8x512xf32>
    %216 = arith.addf %213, %215 : vector<8x512xf32>
    %217 = vector.extract_strided_slice %216 {offsets = [0, 0], sizes = [8, 128], strides = [1, 1]} : vector<8x512xf32> to vector<8x128xf32>
    %218 = arith.negf %217 : vector<8x128xf32>
    %219 = math.exp %218 : vector<8x128xf32>
    %cst_64 = arith.constant 1.000000e+00 : f32
    %220 = vector.broadcast %cst_64 : f32 to vector<8x128xf32>
    %221 = arith.addf %220, %219 : vector<8x128xf32>
    %222 = arith.divf %220, %221 : vector<8x128xf32>
    %223 = vector.extract_strided_slice %216 {offsets = [0, 128], sizes = [8, 128], strides = [1, 1]} : vector<8x512xf32> to vector<8x128xf32>
    %224 = arith.negf %223 : vector<8x128xf32>
    %225 = math.exp %224 : vector<8x128xf32>
    %cst_65 = arith.constant 1.000000e+00 : f32
    %226 = vector.broadcast %cst_65 : f32 to vector<8x128xf32>
    %227 = arith.addf %226, %225 : vector<8x128xf32>
    %228 = arith.divf %226, %227 : vector<8x128xf32>
    %229 = vector.extract_strided_slice %216 {offsets = [0, 256], sizes = [8, 128], strides = [1, 1]} : vector<8x512xf32> to vector<8x128xf32>
    %230 = math.tanh %229 : vector<8x128xf32>
    %231 = vector.extract_strided_slice %216 {offsets = [0, 384], sizes = [8, 128], strides = [1, 1]} : vector<8x512xf32> to vector<8x128xf32>
    %232 = arith.negf %231 : vector<8x128xf32>
    %233 = math.exp %232 : vector<8x128xf32>
    %cst_66 = arith.constant 1.000000e+00 : f32
    %234 = vector.broadcast %cst_66 : f32 to vector<8x128xf32>
    %235 = arith.addf %234, %233 : vector<8x128xf32>
    %236 = arith.divf %234, %235 : vector<8x128xf32>
    %237 = arith.mulf %228, %204 : vector<8x128xf32>
    %238 = arith.mulf %222, %230 : vector<8x128xf32>
    %239 = arith.addf %237, %238 : vector<8x128xf32>
    %240 = math.tanh %239 : vector<8x128xf32>
    %241 = arith.mulf %236, %240 : vector<8x128xf32>
    %242 = arith.index_cast %c6_i32 : i32 to index
    %c0_67 = arith.constant 0 : index
    %c0_68 = arith.constant 0 : index
    %243 = vector.load %arg3[%242, %c0_67, %c0_68] : memref<10x8x128xf32, #tpu.memory_space<vmem>>, vector<1x8x128xf32>
    %244 = vector.shape_cast %243 : vector<1x8x128xf32> to vector<8x128xf32>
    %245 = vector.shape_cast %241 : vector<8x128xf32> to vector<1x8x128xf32>
    tpu.vector_store %arg3[%242, %c0_67, %c0_68], %245 {strides = array<i32>} : memref<10x8x128xf32, #tpu.memory_space<vmem>>, vector<1x8x128xf32>,
    %c7_i32 = arith.constant 7 : i32
    %246 = arith.index_cast %c7_i32 : i32 to index
    %c0_69 = arith.constant 0 : index
    %c0_70 = arith.constant 0 : index
    %247 = vector.load %arg1[%246, %c0_69, %c0_70] : memref<10x8x512xf32, #tpu.memory_space<vmem>>, vector<1x8x512xf32>
    %248 = vector.shape_cast %247 : vector<1x8x512xf32> to vector<8x512xf32>
    %c0_71 = arith.constant 0 : index
    %c0_72 = arith.constant 0 : index
    %249 = vector.load %arg2[%c0_71, %c0_72] : memref<128x512xf32, #tpu.memory_space<vmem>>, vector<128x512xf32>
    %cst_73 = arith.constant dense<0.000000e+00> : vector<8x512xf32>
    %250 = tpu.matmul %241, %249, %cst_73 {dimension_numbers = #tpu.dot_dimension_numbers<[1], [0], [0], [1], [0, 0, 1, 1], [], []>} : vector<8x128xf32>, vector<128x512xf32>, vector<8x512xf32> -> vector<8x512xf32>
    %251 = arith.addf %248, %250 : vector<8x512xf32>
    %252 = vector.extract_strided_slice %251 {offsets = [0, 0], sizes = [8, 128], strides = [1, 1]} : vector<8x512xf32> to vector<8x128xf32>
    %253 = arith.negf %252 : vector<8x128xf32>
    %254 = math.exp %253 : vector<8x128xf32>
    %cst_74 = arith.constant 1.000000e+00 : f32
    %255 = vector.broadcast %cst_74 : f32 to vector<8x128xf32>
    %256 = arith.addf %255, %254 : vector<8x128xf32>
    %257 = arith.divf %255, %256 : vector<8x128xf32>
    %258 = vector.extract_strided_slice %251 {offsets = [0, 128], sizes = [8, 128], strides = [1, 1]} : vector<8x512xf32> to vector<8x128xf32>
    %259 = arith.negf %258 : vector<8x128xf32>
    %260 = math.exp %259 : vector<8x128xf32>
    %cst_75 = arith.constant 1.000000e+00 : f32
    %261 = vector.broadcast %cst_75 : f32 to vector<8x128xf32>
    %262 = arith.addf %261, %260 : vector<8x128xf32>
    %263 = arith.divf %261, %262 : vector<8x128xf32>
    %264 = vector.extract_strided_slice %251 {offsets = [0, 256], sizes = [8, 128], strides = [1, 1]} : vector<8x512xf32> to vector<8x128xf32>
    %265 = math.tanh %264 : vector<8x128xf32>
    %266 = vector.extract_strided_slice %251 {offsets = [0, 384], sizes = [8, 128], strides = [1, 1]} : vector<8x512xf32> to vector<8x128xf32>
    %267 = arith.negf %266 : vector<8x128xf32>
    %268 = math.exp %267 : vector<8x128xf32>
    %cst_76 = arith.constant 1.000000e+00 : f32
    %269 = vector.broadcast %cst_76 : f32 to vector<8x128xf32>
    %270 = arith.addf %269, %268 : vector<8x128xf32>
    %271 = arith.divf %269, %270 : vector<8x128xf32>
    %272 = arith.mulf %263, %239 : vector<8x128xf32>
    %273 = arith.mulf %257, %265 : vector<8x128xf32>
    %274 = arith.addf %272, %273 : vector<8x128xf32>
    %275 = math.tanh %274 : vector<8x128xf32>
    %276 = arith.mulf %271, %275 : vector<8x128xf32>
    %277 = arith.index_cast %c7_i32 : i32 to index
    %c0_77 = arith.constant 0 : index
    %c0_78 = arith.constant 0 : index
    %278 = vector.load %arg3[%277, %c0_77, %c0_78] : memref<10x8x128xf32, #tpu.memory_space<vmem>>, vector<1x8x128xf32>
    %279 = vector.shape_cast %278 : vector<1x8x128xf32> to vector<8x128xf32>
    %280 = vector.shape_cast %276 : vector<8x128xf32> to vector<1x8x128xf32>
    tpu.vector_store %arg3[%277, %c0_77, %c0_78], %280 {strides = array<i32>} : memref<10x8x128xf32, #tpu.memory_space<vmem>>, vector<1x8x128xf32>,
    %c8_i32 = arith.constant 8 : i32
    %281 = arith.index_cast %c8_i32 : i32 to index
    %c0_79 = arith.constant 0 : index
    %c0_80 = arith.constant 0 : index
    %282 = vector.load %arg1[%281, %c0_79, %c0_80] : memref<10x8x512xf32, #tpu.memory_space<vmem>>, vector<1x8x512xf32>
    %283 = vector.shape_cast %282 : vector<1x8x512xf32> to vector<8x512xf32>
    %c0_81 = arith.constant 0 : index
    %c0_82 = arith.constant 0 : index
    %284 = vector.load %arg2[%c0_81, %c0_82] : memref<128x512xf32, #tpu.memory_space<vmem>>, vector<128x512xf32>
    %cst_83 = arith.constant dense<0.000000e+00> : vector<8x512xf32>
    %285 = tpu.matmul %276, %284, %cst_83 {dimension_numbers = #tpu.dot_dimension_numbers<[1], [0], [0], [1], [0, 0, 1, 1], [], []>} : vector<8x128xf32>, vector<128x512xf32>, vector<8x512xf32> -> vector<8x512xf32>
    %286 = arith.addf %283, %285 : vector<8x512xf32>
    %287 = vector.extract_strided_slice %286 {offsets = [0, 0], sizes = [8, 128], strides = [1, 1]} : vector<8x512xf32> to vector<8x128xf32>
    %288 = arith.negf %287 : vector<8x128xf32>
    %289 = math.exp %288 : vector<8x128xf32>
    %cst_84 = arith.constant 1.000000e+00 : f32
    %290 = vector.broadcast %cst_84 : f32 to vector<8x128xf32>
    %291 = arith.addf %290, %289 : vector<8x128xf32>
    %292 = arith.divf %290, %291 : vector<8x128xf32>
    %293 = vector.extract_strided_slice %286 {offsets = [0, 128], sizes = [8, 128], strides = [1, 1]} : vector<8x512xf32> to vector<8x128xf32>
    %294 = arith.negf %293 : vector<8x128xf32>
    %295 = math.exp %294 : vector<8x128xf32>
    %cst_85 = arith.constant 1.000000e+00 : f32
    %296 = vector.broadcast %cst_85 : f32 to vector<8x128xf32>
    %297 = arith.addf %296, %295 : vector<8x128xf32>
    %298 = arith.divf %296, %297 : vector<8x128xf32>
    %299 = vector.extract_strided_slice %286 {offsets = [0, 256], sizes = [8, 128], strides = [1, 1]} : vector<8x512xf32> to vector<8x128xf32>
    %300 = math.tanh %299 : vector<8x128xf32>
    %301 = vector.extract_strided_slice %286 {offsets = [0, 384], sizes = [8, 128], strides = [1, 1]} : vector<8x512xf32> to vector<8x128xf32>
    %302 = arith.negf %301 : vector<8x128xf32>
    %303 = math.exp %302 : vector<8x128xf32>
    %cst_86 = arith.constant 1.000000e+00 : f32
    %304 = vector.broadcast %cst_86 : f32 to vector<8x128xf32>
    %305 = arith.addf %304, %303 : vector<8x128xf32>
    %306 = arith.divf %304, %305 : vector<8x128xf32>
    %307 = arith.mulf %298, %274 : vector<8x128xf32>
    %308 = arith.mulf %292, %300 : vector<8x128xf32>
    %309 = arith.addf %307, %308 : vector<8x128xf32>
    %310 = math.tanh %309 : vector<8x128xf32>
    %311 = arith.mulf %306, %310 : vector<8x128xf32>
    %312 = arith.index_cast %c8_i32 : i32 to index
    %c0_87 = arith.constant 0 : index
    %c0_88 = arith.constant 0 : index
    %313 = vector.load %arg3[%312, %c0_87, %c0_88] : memref<10x8x128xf32, #tpu.memory_space<vmem>>, vector<1x8x128xf32>
    %314 = vector.shape_cast %313 : vector<1x8x128xf32> to vector<8x128xf32>
    %315 = vector.shape_cast %311 : vector<8x128xf32> to vector<1x8x128xf32>
    tpu.vector_store %arg3[%312, %c0_87, %c0_88], %315 {strides = array<i32>} : memref<10x8x128xf32, #tpu.memory_space<vmem>>, vector<1x8x128xf32>,
    %c9_i32 = arith.constant 9 : i32
    %316 = arith.index_cast %c9_i32 : i32 to index
    %c0_89 = arith.constant 0 : index
    %c0_90 = arith.constant 0 : index
    %317 = vector.load %arg1[%316, %c0_89, %c0_90] : memref<10x8x512xf32, #tpu.memory_space<vmem>>, vector<1x8x512xf32>
    %318 = vector.shape_cast %317 : vector<1x8x512xf32> to vector<8x512xf32>
    %c0_91 = arith.constant 0 : index
    %c0_92 = arith.constant 0 : index
    %319 = vector.load %arg2[%c0_91, %c0_92] : memref<128x512xf32, #tpu.memory_space<vmem>>, vector<128x512xf32>
    %cst_93 = arith.constant dense<0.000000e+00> : vector<8x512xf32>
    %320 = tpu.matmul %311, %319, %cst_93 {dimension_numbers = #tpu.dot_dimension_numbers<[1], [0], [0], [1], [0, 0, 1, 1], [], []>} : vector<8x128xf32>, vector<128x512xf32>, vector<8x512xf32> -> vector<8x512xf32>
    %321 = arith.addf %318, %320 : vector<8x512xf32>
    %322 = vector.extract_strided_slice %321 {offsets = [0, 0], sizes = [8, 128], strides = [1, 1]} : vector<8x512xf32> to vector<8x128xf32>
    %323 = arith.negf %322 : vector<8x128xf32>
    %324 = math.exp %323 : vector<8x128xf32>
    %cst_94 = arith.constant 1.000000e+00 : f32
    %325 = vector.broadcast %cst_94 : f32 to vector<8x128xf32>
    %326 = arith.addf %325, %324 : vector<8x128xf32>
    %327 = arith.divf %325, %326 : vector<8x128xf32>
    %328 = vector.extract_strided_slice %321 {offsets = [0, 128], sizes = [8, 128], strides = [1, 1]} : vector<8x512xf32> to vector<8x128xf32>
    %329 = arith.negf %328 : vector<8x128xf32>
    %330 = math.exp %329 : vector<8x128xf32>
    %cst_95 = arith.constant 1.000000e+00 : f32
    %331 = vector.broadcast %cst_95 : f32 to vector<8x128xf32>
    %332 = arith.addf %331, %330 : vector<8x128xf32>
    %333 = arith.divf %331, %332 : vector<8x128xf32>
    %334 = vector.extract_strided_slice %321 {offsets = [0, 256], sizes = [8, 128], strides = [1, 1]} : vector<8x512xf32> to vector<8x128xf32>
    %335 = math.tanh %334 : vector<8x128xf32>
    %336 = vector.extract_strided_slice %321 {offsets = [0, 384], sizes = [8, 128], strides = [1, 1]} : vector<8x512xf32> to vector<8x128xf32>
    %337 = arith.negf %336 : vector<8x128xf32>
    %338 = math.exp %337 : vector<8x128xf32>
    %cst_96 = arith.constant 1.000000e+00 : f32
    %339 = vector.broadcast %cst_96 : f32 to vector<8x128xf32>
    %340 = arith.addf %339, %338 : vector<8x128xf32>
    %341 = arith.divf %339, %340 : vector<8x128xf32>
    %342 = arith.mulf %333, %309 : vector<8x128xf32>
    %343 = arith.mulf %327, %335 : vector<8x128xf32>
    %344 = arith.addf %342, %343 : vector<8x128xf32>
    %345 = math.tanh %344 : vector<8x128xf32>
    %346 = arith.mulf %341, %345 : vector<8x128xf32>
    %347 = arith.index_cast %c9_i32 : i32 to index
    %c0_97 = arith.constant 0 : index
    %c0_98 = arith.constant 0 : index
    %348 = vector.load %arg3[%347, %c0_97, %c0_98] : memref<10x8x128xf32, #tpu.memory_space<vmem>>, vector<1x8x128xf32>
    %349 = vector.shape_cast %348 : vector<1x8x128xf32> to vector<8x128xf32>
    %350 = vector.shape_cast %346 : vector<8x128xf32> to vector<1x8x128xf32>
    tpu.vector_store %arg3[%347, %c0_97, %c0_98], %350 {strides = array<i32>} : memref<10x8x128xf32, #tpu.memory_space<vmem>>, vector<1x8x128xf32>,
    %c10_i32 = arith.constant 10 : i32
    return
  }
  func.func @transform_0(%arg0: i32) -> (i32, i32, i32) {
    %c0_i32 = arith.constant 0 : i32
    %c0_i32_0 = arith.constant 0 : i32
    %c0_i32_1 = arith.constant 0 : i32
    %c0_i32_2 = arith.constant 0 : i32
    return %c0_i32, %c0_i32_0, %c0_i32_1 : i32, i32, i32
  }
  func.func @transform_1(%arg0: i32) -> (i32, i32) {
    %c0_i32 = arith.constant 0 : i32
    %c0_i32_0 = arith.constant 0 : i32
    %c0_i32_1 = arith.constant 0 : i32
    return %c0_i32, %c0_i32_0 : i32, i32
  }
  func.func @transform_2(%arg0: i32) -> (i32, i32, i32) {
    %c0_i32 = arith.constant 0 : i32
    %c0_i32_0 = arith.constant 0 : i32
    %c0_i32_1 = arith.constant 0 : i32
    %c0_i32_2 = arith.constant 0 : i32
    return %c0_i32, %c0_i32_0, %c0_i32_1 : i32, i32, i32
  }
}

module attributes {stable_mosaic.version = 11 : i64} {
  func.func @matmul_bias_kernel(%arg0: i32, %arg1: memref<80x128xf32, #tpu.memory_space<vmem>>, %arg2: memref<128x128xf32, #tpu.memory_space<vmem>>, %arg3: memref<1x128xf32, #tpu.memory_space<vmem>>, %arg4: memref<80x128xf32, #tpu.memory_space<vmem>>) attributes {dimension_semantics = [#tpu.dimension_semantics<parallel>], iteration_bounds = array<i64: 1>, scalar_prefetch = 0 : i64, scratch_operands = 0 : i64, tpu.core_type = #tpu.core_type<tc>, window_params = [{pipeline_mode = #tpu.pipeline_mode<synchronous>, transform_indices = @transform_0, window_bounds = array<i64: 80, 128>}, {transform_indices = @transform_1, window_bounds = array<i64: 128, 128>}, {transform_indices = @transform_2, window_bounds = array<i64: 1, 128>}, {transform_indices = @transform_3, window_bounds = array<i64: 80, 128>}]} {
    %c0 = arith.constant 0 : index
    %c0_0 = arith.constant 0 : index
    %0 = vector.load %arg1[%c0, %c0_0] : memref<80x128xf32, #tpu.memory_space<vmem>>, vector<80x128xf32>
    %c0_1 = arith.constant 0 : index
    %c0_2 = arith.constant 0 : index
    %1 = vector.load %arg2[%c0_1, %c0_2] : memref<128x128xf32, #tpu.memory_space<vmem>>, vector<128x128xf32>
    %cst = arith.constant dense<0.000000e+00> : vector<80x128xf32>
    %2 = tpu.matmul %0, %1, %cst {dimension_numbers = #tpu.dot_dimension_numbers<[1], [0], [0], [1], [0, 0, 1, 1], [], []>} : vector<80x128xf32>, vector<128x128xf32>, vector<80x128xf32> -> vector<80x128xf32>
    %c0_3 = arith.constant 0 : index
    %c0_4 = arith.constant 0 : index
    %3 = vector.load %arg3[%c0_3, %c0_4] : memref<1x128xf32, #tpu.memory_space<vmem>>, vector<1x128xf32>
    %4 = vector.broadcast %3 : vector<1x128xf32> to vector<80x128xf32>
    %5 = arith.addf %2, %4 : vector<80x128xf32>
    %c0_5 = arith.constant 0 : index
    %c0_6 = arith.constant 0 : index
    %6 = vector.load %arg4[%c0_5, %c0_6] : memref<80x128xf32, #tpu.memory_space<vmem>>, vector<80x128xf32>
    tpu.vector_store %arg4[%c0_5, %c0_6], %5 {strides = array<i32>} : memref<80x128xf32, #tpu.memory_space<vmem>>, vector<80x128xf32>,
    return
  }
  func.func @transform_0(%arg0: i32) -> (i32, i32) {
    %c0_i32 = arith.constant 0 : i32
    %c0_i32_0 = arith.constant 0 : i32
    %c0_i32_1 = arith.constant 0 : i32
    return %c0_i32, %c0_i32_0 : i32, i32
  }
  func.func @transform_1(%arg0: i32) -> (i32, i32) {
    %c0_i32 = arith.constant 0 : i32
    %c0_i32_0 = arith.constant 0 : i32
    return %c0_i32, %arg0 : i32, i32
  }
  func.func @transform_2(%arg0: i32) -> (i32, i32) {
    %c0_i32 = arith.constant 0 : i32
    %c0_i32_0 = arith.constant 0 : i32
    return %c0_i32, %arg0 : i32, i32
  }
  func.func @transform_3(%arg0: i32) -> (i32, i32) {
    %c0_i32 = arith.constant 0 : i32
    %c0_i32_0 = arith.constant 0 : i32
    return %c0_i32, %arg0 : i32, i32
  }
}

</mosaic_0001>

<llo_original>
// kernel: decoder_forward.5
$region0: #{decoder_forward.5}
  #allocation0 [shape = 'u32[]', space=smem, size = 0x4, offset = 0x4, fixed_abs, tag = 'smem constant byte address 0x4 - core index']
  #allocation1 [shape = 'u32[144,128]{1,0:T(1,128)}', space=vmem, size = 0x12000, scoped, tag = 'internal scratch']
  %s0 = inlined_call_operand.vmem [shape: f32[80,128], index: 0, kind: input, shape index: {}]
  %s1 = inlined_call_operand.vmem [shape: f32[128,128], index: 1, kind: input, shape index: {}]
  %s2 = inlined_call_operand.vmem [shape: f32[1,128], index: 2, kind: input, shape index: {}]
  %s3 = inlined_call_operand.vmem [shape: f32[80,128], index: 3, kind: output, shape index: {}]
  %s4 = sld [smem:[#allocation0]]
  $region22: #{decoder_forward.5} parent=0
    _
  %s6 = ssub.s32 1, %s4
  %s7 = scalar_select 0, %s6, %s4
  // Predicated region
  $region2: #{decoder_forward.5} parent=0 // pred_check
    _
  $region3: #{decoder_forward.5} parent=0 // pred_check_branch
    %9 = sbr.rel (0) target = $region5
  $region4: #{decoder_forward.5} parent=0 // pred_region
    _
  $region5: #{decoder_forward.5} parent=0 // pred_fallthru
    _
  // Predicated region
  $region6: #{decoder_forward.5} parent=0 // pred_check
    _
  $region7: #{decoder_forward.5} parent=0 // pred_check_branch
    %11 = sbr.rel (0) target = $region9
  $region8: #{decoder_forward.5} parent=0 // pred_region
    _
  $region9: #{decoder_forward.5} parent=0 // pred_fallthru
    _
  // Predicated region
  $region10: #{decoder_forward.5} parent=0 // pred_check
    _
  $region11: #{decoder_forward.5} parent=0 // pred_check_branch
    %13 = sbr.rel (0) target = $region13
  $region12: #{decoder_forward.5} parent=0 // pred_region
    _
  $region13: #{decoder_forward.5} parent=0 // pred_fallthru
    _
  %v14 = vld [vmem:[%s0] sm:$0xff]
  %v15 = vld [vmem:[%s0 + $0x8] sm:$0xff]
  %v16 = vld [vmem:[%s0 + $0x10] sm:$0xff]
  %v17 = vld [vmem:[%s0 + $0x18] sm:$0xff]
  %v18 = vld [vmem:[%s0 + $0x20] sm:$0xff]
  %v19 = vld [vmem:[%s0 + $0x28] sm:$0xff]
  %v20 = vld [vmem:[%s0 + $0x30] sm:$0xff]
  %v21 = vld [vmem:[%s0 + $0x38] sm:$0xff]
  %v22 = vld [vmem:[%s0 + $0x40] sm:$0xff]
  %v23 = vld [vmem:[%s0 + $0x48] sm:$0xff]
  %v24 = vld [vmem:[%s1] sm:$0xff]
  %v25 = vld [vmem:[%s1 + $0x8] sm:$0xff]
  %v26 = vld [vmem:[%s1 + $0x10] sm:$0xff]
  %v27 = vld [vmem:[%s1 + $0x18] sm:$0xff]
  %v28 = vld [vmem:[%s1 + $0x20] sm:$0xff]
  %v29 = vld [vmem:[%s1 + $0x28] sm:$0xff]
  %v30 = vld [vmem:[%s1 + $0x30] sm:$0xff]
  %v31 = vld [vmem:[%s1 + $0x38] sm:$0xff]
  %v32 = vld [vmem:[%s1 + $0x40] sm:$0xff]
  %v33 = vld [vmem:[%s1 + $0x48] sm:$0xff]
  %v34 = vld [vmem:[%s1 + $0x50] sm:$0xff]
  %v35 = vld [vmem:[%s1 + $0x58] sm:$0xff]
  %v36 = vld [vmem:[%s1 + $0x60] sm:$0xff]
  %v37 = vld [vmem:[%s1 + $0x68] sm:$0xff]
  %v38 = vld [vmem:[%s1 + $0x70] sm:$0xff]
  %v39 = vld [vmem:[%s1 + $0x78] sm:$0xff]
  %v40 = vld [vmem:[%s2] sm:$0x1]
  %v42 = vlaneseq
  %v43 = vshrl.u32 %v42, 7
  %v44 = vsub.s32 0, %v43
  %v45 = vrot.slane %v40, %v44
  %47 = vmatprep.subr.mxu0 0.0
  %48 = vmatpush1.msra.mxu0 %v24
  %49 = vmatprep.subr.mxu0 0.0
  %50 = vmatpush1.msra.mxu0 %v25
  %51 = vmatprep.subr.mxu0 0.0
  %52 = vmatpush1.msra.mxu0 %v26
  %53 = vmatprep.subr.mxu0 0.0
  %54 = vmatpush1.msra.mxu0 %v27
  %55 = vmatprep.subr.mxu0 0.0
  %56 = vmatpush1.msra.mxu0 %v28
  %57 = vmatprep.subr.mxu0 0.0
  %58 = vmatpush1.msra.mxu0 %v29
  %59 = vmatprep.subr.mxu0 0.0
  %60 = vmatpush1.msra.mxu0 %v30
  %61 = vmatprep.subr.mxu0 0.0
  %62 = vmatpush1.msra.mxu0 %v31
  %63 = vmatprep.subr.mxu0 0.0
  %64 = vmatpush1.msra.mxu0 %v32
  %65 = vmatprep.subr.mxu0 0.0
  %66 = vmatpush1.msra.mxu0 %v33
  %67 = vmatprep.subr.mxu0 0.0
  %68 = vmatpush1.msra.mxu0 %v34
  %69 = vmatprep.subr.mxu0 0.0
  %70 = vmatpush1.msra.mxu0 %v35
  %71 = vmatprep.subr.mxu0 0.0
  %72 = vmatpush1.msra.mxu0 %v36
  %73 = vmatprep.subr.mxu0 0.0
  %74 = vmatpush1.msra.mxu0 %v37
  %75 = vmatprep.subr.mxu0 0.0
  %76 = vmatpush1.msra.mxu0 %v38
  %77 = vmatprep.subr.mxu0 0.0
  %78 = vmatpush1.msra.mxu0 %v39
  %79 = vmatprep.subr.mxu0 0.0
  %80 = vmatpush1.msra.mxu0 0.0
  %81 = vmatprep.subr.mxu0 0.0
  %82 = vmatpush1.msra.mxu0 0.0
  %83 = vmatprep.subr.mxu0 0.0
  %84 = vmatpush1.msra.mxu0 0.0
  %85 = vmatprep.subr.mxu0 0.0
  %86 = vmatpush1.msra.mxu0 0.0
  %87 = vmatprep.subr.mxu0 0.0
  %88 = vmatpush1.msra.mxu0 0.0
  %89 = vmatprep.subr.mxu0 0.0
  %90 = vmatpush1.msra.mxu0 0.0
  %91 = vmatprep.subr.mxu0 0.0
  %92 = vmatpush1.msra.mxu0 0.0
  %93 = vmatprep.subr.mxu0 0.0
  %94 = vmatpush1.msra.mxu0 0.0
  %95 = vmatprep.subr.mxu0 0.0
  %96 = vmatpush1.msra.mxu0 0.0
  %97 = vmatprep.subr.mxu0 0.0
  %98 = vmatpush1.msra.mxu0 0.0
  %99 = vmatprep.subr.mxu0 0.0
  %100 = vmatpush1.msra.mxu0 0.0
  %101 = vmatprep.subr.mxu0 0.0
  %102 = vmatpush1.msra.mxu0 0.0
  %103 = vmatprep.subr.mxu0 0.0
  %104 = vmatpush1.msra.mxu0 0.0
  %105 = vmatprep.subr.mxu0 0.0
  %106 = vmatpush1.msra.mxu0 0.0
  %107 = vmatprep.subr.mxu0 0.0
  %108 = vmatpush1.msra.mxu0 0.0
  %109 = vmatprep.subr.mxu0 0.0
  %110 = vmatpush1.msra.mxu0 0.0
  %111 = vmatprep.mubr.f32.mxu0 0.0
  %112 = vmatmul.mubr.f32.gmra.mrb[0].mxu0 %v14
  %v113 = vpop.f32.mrb[0].mxu0
  %v114 = vadd.f32 %v45, %v113
  %v115 = vpop.f32.mrb[0].mxu0
  %116 = vmatprep.mubr.f32.mxu0 0.0
  %117 = vmatmul.mubr.f32.gmra.mrb[0].mxu0 %v15
  %v118 = vpop.f32.mrb[0].mxu0
  %v119 = vadd.f32 %v45, %v118
  %v120 = vpop.f32.mrb[0].mxu0
  %121 = vmatprep.mubr.f32.mxu0 0.0
  %122 = vmatmul.mubr.f32.gmra.mrb[0].mxu0 %v16
  %v123 = vpop.f32.mrb[0].mxu0
  %v124 = vadd.f32 %v45, %v123
  %v125 = vpop.f32.mrb[0].mxu0
  %126 = vmatprep.mubr.f32.mxu0 0.0
  %127 = vmatmul.mubr.f32.gmra.mrb[0].mxu0 %v17
  %v128 = vpop.f32.mrb[0].mxu0
  %v129 = vadd.f32 %v45, %v128
  %v130 = vpop.f32.mrb[0].mxu0
  %131 = vmatprep.mubr.f32.mxu0 0.0
  %132 = vmatmul.mubr.f32.gmra.mrb[0].mxu0 %v18
  %v133 = vpop.f32.mrb[0].mxu0
  %v134 = vadd.f32 %v45, %v133
  %v135 = vpop.f32.mrb[0].mxu0
  %136 = vmatprep.mubr.f32.mxu0 0.0
  %137 = vmatmul.mubr.f32.gmra.mrb[0].mxu0 %v19
  %v138 = vpop.f32.mrb[0].mxu0
  %v139 = vadd.f32 %v45, %v138
  %v140 = vpop.f32.mrb[0].mxu0
  %141 = vmatprep.mubr.f32.mxu0 0.0
  %142 = vmatmul.mubr.f32.gmra.mrb[0].mxu0 %v20
  %v143 = vpop.f32.mrb[0].mxu0
  %v144 = vadd.f32 %v45, %v143
  %v145 = vpop.f32.mrb[0].mxu0
  %146 = vmatprep.mubr.f32.mxu0 0.0
  %147 = vmatmul.mubr.f32.gmra.mrb[0].mxu0 %v21
  %v148 = vpop.f32.mrb[0].mxu0
  %v149 = vadd.f32 %v45, %v148
  %v150 = vpop.f32.mrb[0].mxu0
  %151 = vmatprep.mubr.f32.mxu0 0.0
  %152 = vmatmul.mubr.f32.gmra.mrb[0].mxu0 %v22
  %v153 = vpop.f32.mrb[0].mxu0
  %v154 = vadd.f32 %v45, %v153
  %v155 = vpop.f32.mrb[0].mxu0
  %156 = vmatprep.mubr.f32.mxu0 0.0
  %157 = vmatmul.mubr.f32.gmra.mrb[0].mxu0 %v23
  %v158 = vpop.f32.mrb[0].mxu0
  %v159 = vadd.f32 %v45, %v158
  %v160 = vpop.f32.mrb[0].mxu0
  %161 = vdwg.mxu0
  %162 = vst [vmem:[%s3] sm:$0xff] %v114
  %163 = vst [vmem:[%s3 + $0x8] sm:$0xff] %v119
  %164 = vst [vmem:[%s3 + $0x10] sm:$0xff] %v124
  %165 = vst [vmem:[%s3 + $0x18] sm:$0xff] %v129
  %166 = vst [vmem:[%s3 + $0x20] sm:$0xff] %v134
  %167 = vst [vmem:[%s3 + $0x28] sm:$0xff] %v139
  %168 = vst [vmem:[%s3 + $0x30] sm:$0xff] %v144
  %169 = vst [vmem:[%s3 + $0x38] sm:$0xff] %v149
  %170 = vst [vmem:[%s3 + $0x40] sm:$0xff] %v154
  %171 = vst [vmem:[%s3 + $0x48] sm:$0xff] %v159
  // Predicated region
  $region14: #{decoder_forward.5} parent=0 // pred_check
    _
  $region15: #{decoder_forward.5} parent=0 // pred_check_branch
    %173 = sbr.rel (0) target = $region17
  $region16: #{decoder_forward.5} parent=0 // pred_region
    _
  $region17: #{decoder_forward.5} parent=0 // pred_fallthru
    _
  // Predicated region
  $region18: #{decoder_forward.5} parent=0 // pred_check
    _
  $region19: #{decoder_forward.5} parent=0 // pred_check_branch
    %175 = sbr.rel (0) target = $region21
  $region20: #{decoder_forward.5} parent=0 // pred_region
    _
  $region21: #{decoder_forward.5} parent=0 // pred_fallthru
    _

// kernel: decoder_forward.3
$region0: #{decoder_forward.3}
  #allocation0 [shape = 'u32[]', space=smem, size = 0x4, offset = 0x4, fixed_abs, tag = 'smem constant byte address 0x4 - core index']
  #allocation1 [shape = 'u32[144,128]{1,0:T(1,128)}', space=vmem, size = 0x12000, scoped, tag = 'internal scratch']
  %s0 = inlined_call_operand.vmem [shape: f32[80,128], index: 0, kind: input, shape index: {}]
  %s1 = inlined_call_operand.vmem [shape: f32[128,512], index: 1, kind: input, shape index: {}]
  %s2 = inlined_call_operand.vmem [shape: f32[1,512], index: 2, kind: input, shape index: {}]
  %s3 = inlined_call_operand.vmem [shape: f32[80,512], index: 3, kind: output, shape index: {}]
  %s4 = sld [smem:[#allocation0]]
  $region22: #{decoder_forward.3} parent=0
    _
  %s6 = ssub.s32 1, %s4
  %s7 = scalar_select 0, %s6, %s4
  // Predicated region
  $region2: #{decoder_forward.3} parent=0 // pred_check
    _
  $region3: #{decoder_forward.3} parent=0 // pred_check_branch
    %9 = sbr.rel (0) target = $region5
  $region4: #{decoder_forward.3} parent=0 // pred_region
    _
  $region5: #{decoder_forward.3} parent=0 // pred_fallthru
    _
  // Predicated region
  $region6: #{decoder_forward.3} parent=0 // pred_check
    _
  $region7: #{decoder_forward.3} parent=0 // pred_check_branch
    %11 = sbr.rel (0) target = $region9
  $region8: #{decoder_forward.3} parent=0 // pred_region
    _
  $region9: #{decoder_forward.3} parent=0 // pred_fallthru
    _
  // Predicated region
  $region10: #{decoder_forward.3} parent=0 // pred_check
    _
  $region11: #{decoder_forward.3} parent=0 // pred_check_branch
    %13 = sbr.rel (0) target = $region13
  $region12: #{decoder_forward.3} parent=0 // pred_region
    _
  $region13: #{decoder_forward.3} parent=0 // pred_fallthru
    _
  %v14 = vld [vmem:[%s0] sm:$0xff]
  %v15 = vld [vmem:[%s0 + $0x8] sm:$0xff]
  %v16 = vld [vmem:[%s0 + $0x10] sm:$0xff]
  %v17 = vld [vmem:[%s0 + $0x18] sm:$0xff]
  %v18 = vld [vmem:[%s0 + $0x20] sm:$0xff]
  %v19 = vld [vmem:[%s0 + $0x28] sm:$0xff]
  %v20 = vld [vmem:[%s0 + $0x30] sm:$0xff]
  %v21 = vld [vmem:[%s0 + $0x38] sm:$0xff]
  %v22 = vld [vmem:[%s0 + $0x40] sm:$0xff]
  %v23 = vld [vmem:[%s0 + $0x48] sm:$0xff]
  %v24 = vld [vmem:[%s1] sm:$0xff]
  %v25 = vld [vmem:[%s1 + $0x8] sm:$0xff]
  %v26 = vld [vmem:[%s1 + $0x10] sm:$0xff]
  %v27 = vld [vmem:[%s1 + $0x18] sm:$0xff]
  %v28 = vld [vmem:[%s1 + $0x20] sm:$0xff]
  %v29 = vld [vmem:[%s1 + $0x28] sm:$0xff]
  %v30 = vld [vmem:[%s1 + $0x30] sm:$0xff]
  %v31 = vld [vmem:[%s1 + $0x38] sm:$0xff]
  %v32 = vld [vmem:[%s1 + $0x40] sm:$0xff]
  %v33 = vld [vmem:[%s1 + $0x48] sm:$0xff]
  %v34 = vld [vmem:[%s1 + $0x50] sm:$0xff]
  %v35 = vld [vmem:[%s1 + $0x58] sm:$0xff]
  %v36 = vld [vmem:[%s1 + $0x60] sm:$0xff]
  %v37 = vld [vmem:[%s1 + $0x68] sm:$0xff]
  %v38 = vld [vmem:[%s1 + $0x70] sm:$0xff]
  %v39 = vld [vmem:[%s1 + $0x78] sm:$0xff]
  %v40 = vld [vmem:[%s1 + $0x80] sm:$0xff]
  %v41 = vld [vmem:[%s1 + $0x88] sm:$0xff]
  %v42 = vld [vmem:[%s1 + $0x90] sm:$0xff]
  %v43 = vld [vmem:[%s1 + $0x98] sm:$0xff]
  %v44 = vld [vmem:[%s1 + $0xa0] sm:$0xff]
  %v45 = vld [vmem:[%s1 + $0xa8] sm:$0xff]
  %v46 = vld [vmem:[%s1 + $0xb0] sm:$0xff]
  %v47 = vld [vmem:[%s1 + $0xb8] sm:$0xff]
  %v48 = vld [vmem:[%s1 + $0xc0] sm:$0xff]
  %v49 = vld [vmem:[%s1 + $0xc8] sm:$0xff]
  %v50 = vld [vmem:[%s1 + $0xd0] sm:$0xff]
  %v51 = vld [vmem:[%s1 + $0xd8] sm:$0xff]
  %v52 = vld [vmem:[%s1 + $0xe0] sm:$0xff]
  %v53 = vld [vmem:[%s1 + $0xe8] sm:$0xff]
  %v54 = vld [vmem:[%s1 + $0xf0] sm:$0xff]
  %v55 = vld [vmem:[%s1 + $0xf8] sm:$0xff]
  %v56 = vld [vmem:[%s1 + $0x100] sm:$0xff]
  %v57 = vld [vmem:[%s1 + $0x108] sm:$0xff]
  %v58 = vld [vmem:[%s1 + $0x110] sm:$0xff]
  %v59 = vld [vmem:[%s1 + $0x118] sm:$0xff]
  %v60 = vld [vmem:[%s1 + $0x120] sm:$0xff]
  %v61 = vld [vmem:[%s1 + $0x128] sm:$0xff]
  %v62 = vld [vmem:[%s1 + $0x130] sm:$0xff]
  %v63 = vld [vmem:[%s1 + $0x138] sm:$0xff]
  %v64 = vld [vmem:[%s1 + $0x140] sm:$0xff]
  %v65 = vld [vmem:[%s1 + $0x148] sm:$0xff]
  %v66 = vld [vmem:[%s1 + $0x150] sm:$0xff]
  %v67 = vld [vmem:[%s1 + $0x158] sm:$0xff]
  %v68 = vld [vmem:[%s1 + $0x160] sm:$0xff]
  %v69 = vld [vmem:[%s1 + $0x168] sm:$0xff]
  %v70 = vld [vmem:[%s1 + $0x170] sm:$0xff]
  %v71 = vld [vmem:[%s1 + $0x178] sm:$0xff]
  %v72 = vld [vmem:[%s1 + $0x180] sm:$0xff]
  %v73 = vld [vmem:[%s1 + $0x188] sm:$0xff]
  %v74 = vld [vmem:[%s1 + $0x190] sm:$0xff]
  %v75 = vld [vmem:[%s1 + $0x198] sm:$0xff]
  %v76 = vld [vmem:[%s1 + $0x1a0] sm:$0xff]
  %v77 = vld [vmem:[%s1 + $0x1a8] sm:$0xff]
  %v78 = vld [vmem:[%s1 + $0x1b0] sm:$0xff]
  %v79 = vld [vmem:[%s1 + $0x1b8] sm:$0xff]
  %v80 = vld [vmem:[%s1 + $0x1c0] sm:$0xff]
  %v81 = vld [vmem:[%s1 + $0x1c8] sm:$0xff]
  %v82 = vld [vmem:[%s1 + $0x1d0] sm:$0xff]
  %v83 = vld [vmem:[%s1 + $0x1d8] sm:$0xff]
  %v84 = vld [vmem:[%s1 + $0x1e0] sm:$0xff]
  %v85 = vld [vmem:[%s1 + $0x1e8] sm:$0xff]
  %v86 = vld [vmem:[%s1 + $0x1f0] sm:$0xff]
  %v87 = vld [vmem:[%s1 + $0x1f8] sm:$0xff]
  %v88 = vld [vmem:[%s2] sm:$0xf]
  %v90 = vlaneseq
  %v91 = vshrl.u32 %v90, 7
  %v92 = vsub.s32 0, %v91
  %v93 = vrot.slane %v88, %v92
  %v94 = vlaneseq
  %v95 = vshrl.u32 %v94, 7
  %v96 = vsub.s32 1, %v95
  %v97 = vrot.slane %v88, %v96
  %v98 = vlaneseq
  %v99 = vshrl.u32 %v98, 7
  %v100 = vsub.s32 2, %v99
  %v101 = vrot.slane %v88, %v100
  %v102 = vlaneseq
  %v103 = vshrl.u32 %v102, 7
  %v104 = vsub.s32 3, %v103
  %v105 = vrot.slane %v88, %v104
  %110 = vmatprep.subr.mxu0 %v25
  %111 = vmatpush1.msra.mxu0 %v24
  %112 = vmatprep.subr.mxu0 %v29
  %113 = vmatpush1.msra.mxu0 %v28
  %114 = vmatprep.subr.mxu0 %v33
  %115 = vmatpush1.msra.mxu0 %v32
  %116 = vmatprep.subr.mxu0 %v37
  %117 = vmatpush1.msra.mxu0 %v36
  %118 = vmatprep.subr.mxu0 %v41
  %119 = vmatpush1.msra.mxu0 %v40
  %120 = vmatprep.subr.mxu0 %v45
  %121 = vmatpush1.msra.mxu0 %v44
  %122 = vmatprep.subr.mxu0 %v49
  %123 = vmatpush1.msra.mxu0 %v48
  %124 = vmatprep.subr.mxu0 %v53
  %125 = vmatpush1.msra.mxu0 %v52
  %126 = vmatprep.subr.mxu0 %v57
  %127 = vmatpush1.msra.mxu0 %v56
  %128 = vmatprep.subr.mxu0 %v61
  %129 = vmatpush1.msra.mxu0 %v60
  %130 = vmatprep.subr.mxu0 %v65
  %131 = vmatpush1.msra.mxu0 %v64
  %132 = vmatprep.subr.mxu0 %v69
  %133 = vmatpush1.msra.mxu0 %v68
  %134 = vmatprep.subr.mxu0 %v73
  %135 = vmatpush1.msra.mxu0 %v72
  %136 = vmatprep.subr.mxu0 %v77
  %137 = vmatpush1.msra.mxu0 %v76
  %138 = vmatprep.subr.mxu0 %v81
  %139 = vmatpush1.msra.mxu0 %v80
  %140 = vmatprep.subr.mxu0 %v85
  %141 = vmatpush1.msra.mxu0 %v84
  %142 = vmatprep.subr.mxu0 0.0
  %143 = vmatpush1.msra.mxu0 0.0
  %144 = vmatprep.subr.mxu0 0.0
  %145 = vmatpush1.msra.mxu0 0.0
  %146 = vmatprep.subr.mxu0 0.0
  %147 = vmatpush1.msra.mxu0 0.0
  %148 = vmatprep.subr.mxu0 0.0
  %149 = vmatpush1.msra.mxu0 0.0
  %150 = vmatprep.subr.mxu0 0.0
  %151 = vmatpush1.msra.mxu0 0.0
  %152 = vmatprep.subr.mxu0 0.0
  %153 = vmatpush1.msra.mxu0 0.0
  %154 = vmatprep.subr.mxu0 0.0
  %155 = vmatpush1.msra.mxu0 0.0
  %156 = vmatprep.subr.mxu0 0.0
  %157 = vmatpush1.msra.mxu0 0.0
  %158 = vmatprep.subr.mxu0 0.0
  %159 = vmatpush1.msra.mxu0 0.0
  %160 = vmatprep.subr.mxu0 0.0
  %161 = vmatpush1.msra.mxu0 0.0
  %162 = vmatprep.subr.mxu0 0.0
  %163 = vmatpush1.msra.mxu0 0.0
  %164 = vmatprep.subr.mxu0 0.0
  %165 = vmatpush1.msra.mxu0 0.0
  %166 = vmatprep.subr.mxu0 0.0
  %167 = vmatpush1.msra.mxu0 0.0
  %168 = vmatprep.subr.mxu0 0.0
  %169 = vmatpush1.msra.mxu0 0.0
  %170 = vmatprep.subr.mxu0 0.0
  %171 = vmatpush1.msra.mxu0 0.0
  %172 = vmatprep.subr.mxu0 0.0
  %173 = vmatpush1.msra.mxu0 0.0
  %174 = vmatprep.mubr.f32.mxu0 0.0
  %175 = vmatmul.mubr.f32.gmra.mrb[0].mxu0 %v14
  %v176 = vpop.f32.mrb[0].mxu0
  %v177 = vadd.f32 %v93, %v176
  %v178 = vpop.f32.mrb[0].mxu0
  %v179 = vadd.f32 %v97, %v178
  %180 = vmatprep.mubr.f32.mxu0 0.0
  %181 = vmatmul.mubr.f32.gmra.mrb[0].mxu0 %v15
  %v182 = vpop.f32.mrb[0].mxu0
  %v183 = vadd.f32 %v93, %v182
  %v184 = vpop.f32.mrb[0].mxu0
  %v185 = vadd.f32 %v97, %v184
  %186 = vmatprep.mubr.f32.mxu0 0.0
  %187 = vmatmul.mubr.f32.gmra.mrb[0].mxu0 %v16
  %v188 = vpop.f32.mrb[0].mxu0
  %v189 = vadd.f32 %v93, %v188
  %v190 = vpop.f32.mrb[0].mxu0
  %v191 = vadd.f32 %v97, %v190
  %192 = vmatprep.mubr.f32.mxu0 0.0
  %193 = vmatmul.mubr.f32.gmra.mrb[0].mxu0 %v17
  %v194 = vpop.f32.mrb[0].mxu0
  %v195 = vadd.f32 %v93, %v194
  %v196 = vpop.f32.mrb[0].mxu0
  %v197 = vadd.f32 %v97, %v196
  %198 = vmatprep.mubr.f32.mxu0 0.0
  %199 = vmatmul.mubr.f32.gmra.mrb[0].mxu0 %v18
  %v200 = vpop.f32.mrb[0].mxu0
  %v201 = vadd.f32 %v93, %v200
  %v202 = vpop.f32.mrb[0].mxu0
  %v203 = vadd.f32 %v97, %v202
  %204 = vmatprep.mubr.f32.mxu0 0.0
  %205 = vmatmul.mubr.f32.gmra.mrb[0].mxu0 %v19
  %v206 = vpop.f32.mrb[0].mxu0
  %v207 = vadd.f32 %v93, %v206
  %v208 = vpop.f32.mrb[0].mxu0
  %v209 = vadd.f32 %v97, %v208
  %210 = vmatprep.mubr.f32.mxu0 0.0
  %211 = vmatmul.mubr.f32.gmra.mrb[0].mxu0 %v20
  %v212 = vpop.f32.mrb[0].mxu0
  %v213 = vadd.f32 %v93, %v212
  %v214 = vpop.f32.mrb[0].mxu0
  %v215 = vadd.f32 %v97, %v214
  %216 = vmatprep.mubr.f32.mxu0 0.0
  %217 = vmatmul.mubr.f32.gmra.mrb[0].mxu0 %v21
  %v218 = vpop.f32.mrb[0].mxu0
  %v219 = vadd.f32 %v93, %v218
  %v220 = vpop.f32.mrb[0].mxu0
  %v221 = vadd.f32 %v97, %v220
  %222 = vmatprep.mubr.f32.mxu0 0.0
  %223 = vmatmul.mubr.f32.gmra.mrb[0].mxu0 %v22
  %v224 = vpop.f32.mrb[0].mxu0
  %v225 = vadd.f32 %v93, %v224
  %v226 = vpop.f32.mrb[0].mxu0
  %v227 = vadd.f32 %v97, %v226
  %228 = vmatprep.mubr.f32.mxu0 0.0
  %229 = vmatmul.mubr.f32.gmra.mrb[0].mxu0 %v23
  %v230 = vpop.f32.mrb[0].mxu0
  %v231 = vadd.f32 %v93, %v230
  %v232 = vpop.f32.mrb[0].mxu0
  %v233 = vadd.f32 %v97, %v232
  %234 = vdwg.mxu0
  %235 = vmatprep.subr.mxu0 %v27
  %236 = vmatpush1.msra.mxu0 %v26
  %237 = vmatprep.subr.mxu0 %v31
  %238 = vmatpush1.msra.mxu0 %v30
  %239 = vmatprep.subr.mxu0 %v35
  %240 = vmatpush1.msra.mxu0 %v34
  %241 = vmatprep.subr.mxu0 %v39
  %242 = vmatpush1.msra.mxu0 %v38
  %243 = vmatprep.subr.mxu0 %v43
  %244 = vmatpush1.msra.mxu0 %v42
  %245 = vmatprep.subr.mxu0 %v47
  %246 = vmatpush1.msra.mxu0 %v46
  %247 = vmatprep.subr.mxu0 %v51
  %248 = vmatpush1.msra.mxu0 %v50
  %249 = vmatprep.subr.mxu0 %v55
  %250 = vmatpush1.msra.mxu0 %v54
  %251 = vmatprep.subr.mxu0 %v59
  %252 = vmatpush1.msra.mxu0 %v58
  %253 = vmatprep.subr.mxu0 %v63
  %254 = vmatpush1.msra.mxu0 %v62
  %255 = vmatprep.subr.mxu0 %v67
  %256 = vmatpush1.msra.mxu0 %v66
  %257 = vmatprep.subr.mxu0 %v71
  %258 = vmatpush1.msra.mxu0 %v70
  %259 = vmatprep.subr.mxu0 %v75
  %260 = vmatpush1.msra.mxu0 %v74
  %261 = vmatprep.subr.mxu0 %v79
  %262 = vmatpush1.msra.mxu0 %v78
  %263 = vmatprep.subr.mxu0 %v83
  %264 = vmatpush1.msra.mxu0 %v82
  %265 = vmatprep.subr.mxu0 %v87
  %266 = vmatpush1.msra.mxu0 %v86
  %267 = vmatprep.subr.mxu0 0.0
  %268 = vmatpush1.msra.mxu0 0.0
  %269 = vmatprep.subr.mxu0 0.0
  %270 = vmatpush1.msra.mxu0 0.0
  %271 = vmatprep.subr.mxu0 0.0
  %272 = vmatpush1.msra.mxu0 0.0
  %273 = vmatprep.subr.mxu0 0.0
  %274 = vmatpush1.msra.mxu0 0.0
  %275 = vmatprep.subr.mxu0 0.0
  %276 = vmatpush1.msra.mxu0 0.0
  %277 = vmatprep.subr.mxu0 0.0
  %278 = vmatpush1.msra.mxu0 0.0
  %279 = vmatprep.subr.mxu0 0.0
  %280 = vmatpush1.msra.mxu0 0.0
  %281 = vmatprep.subr.mxu0 0.0
  %282 = vmatpush1.msra.mxu0 0.0
  %283 = vmatprep.subr.mxu0 0.0
  %284 = vmatpush1.msra.mxu0 0.0
  %285 = vmatprep.subr.mxu0 0.0
  %286 = vmatpush1.msra.mxu0 0.0
  %287 = vmatprep.subr.mxu0 0.0
  %288 = vmatpush1.msra.mxu0 0.0
  %289 = vmatprep.subr.mxu0 0.0
  %290 = vmatpush1.msra.mxu0 0.0
  %291 = vmatprep.subr.mxu0 0.0
  %292 = vmatpush1.msra.mxu0 0.0
  %293 = vmatprep.subr.mxu0 0.0
  %294 = vmatpush1.msra.mxu0 0.0
  %295 = vmatprep.subr.mxu0 0.0
  %296 = vmatpush1.msra.mxu0 0.0
  %297 = vmatprep.subr.mxu0 0.0
  %298 = vmatpush1.msra.mxu0 0.0
  %299 = vmatprep.mubr.f32.mxu0 0.0
  %300 = vmatmul.mubr.f32.gmra.mrb[0].mxu0 %v14
  %v301 = vpop.f32.mrb[0].mxu0
  %v302 = vadd.f32 %v101, %v301
  %v303 = vpop.f32.mrb[0].mxu0
  %v304 = vadd.f32 %v105, %v303
  %305 = vmatprep.mubr.f32.mxu0 0.0
  %306 = vmatmul.mubr.f32.gmra.mrb[0].mxu0 %v15
  %v307 = vpop.f32.mrb[0].mxu0
  %v308 = vadd.f32 %v101, %v307
  %v309 = vpop.f32.mrb[0].mxu0
  %v310 = vadd.f32 %v105, %v309
  %311 = vmatprep.mubr.f32.mxu0 0.0
  %312 = vmatmul.mubr.f32.gmra.mrb[0].mxu0 %v16
  %v313 = vpop.f32.mrb[0].mxu0
  %v314 = vadd.f32 %v101, %v313
  %v315 = vpop.f32.mrb[0].mxu0
  %v316 = vadd.f32 %v105, %v315
  %317 = vmatprep.mubr.f32.mxu0 0.0
  %318 = vmatmul.mubr.f32.gmra.mrb[0].mxu0 %v17
  %v319 = vpop.f32.mrb[0].mxu0
  %v320 = vadd.f32 %v101, %v319
  %v321 = vpop.f32.mrb[0].mxu0
  %v322 = vadd.f32 %v105, %v321
  %323 = vmatprep.mubr.f32.mxu0 0.0
  %324 = vmatmul.mubr.f32.gmra.mrb[0].mxu0 %v18
  %v325 = vpop.f32.mrb[0].mxu0
  %v326 = vadd.f32 %v101, %v325
  %v327 = vpop.f32.mrb[0].mxu0
  %v328 = vadd.f32 %v105, %v327
  %329 = vmatprep.mubr.f32.mxu0 0.0
  %330 = vmatmul.mubr.f32.gmra.mrb[0].mxu0 %v19
  %v331 = vpop.f32.mrb[0].mxu0
  %v332 = vadd.f32 %v101, %v331
  %v333 = vpop.f32.mrb[0].mxu0
  %v334 = vadd.f32 %v105, %v333
  %335 = vmatprep.mubr.f32.mxu0 0.0
  %336 = vmatmul.mubr.f32.gmra.mrb[0].mxu0 %v20
  %v337 = vpop.f32.mrb[0].mxu0
  %v338 = vadd.f32 %v101, %v337
  %v339 = vpop.f32.mrb[0].mxu0
  %v340 = vadd.f32 %v105, %v339
  %341 = vmatprep.mubr.f32.mxu0 0.0
  %342 = vmatmul.mubr.f32.gmra.mrb[0].mxu0 %v21
  %v343 = vpop.f32.mrb[0].mxu0
  %v344 = vadd.f32 %v101, %v343
  %v345 = vpop.f32.mrb[0].mxu0
  %v346 = vadd.f32 %v105, %v345
  %347 = vmatprep.mubr.f32.mxu0 0.0
  %348 = vmatmul.mubr.f32.gmra.mrb[0].mxu0 %v22
  %v349 = vpop.f32.mrb[0].mxu0
  %v350 = vadd.f32 %v101, %v349
  %v351 = vpop.f32.mrb[0].mxu0
  %v352 = vadd.f32 %v105, %v351
  %353 = vmatprep.mubr.f32.mxu0 0.0
  %354 = vmatmul.mubr.f32.gmra.mrb[0].mxu0 %v23
  %v355 = vpop.f32.mrb[0].mxu0
  %v356 = vadd.f32 %v101, %v355
  %v357 = vpop.f32.mrb[0].mxu0
  %v358 = vadd.f32 %v105, %v357
  %359 = vdwg.mxu0
  %360 = vst [vmem:[%s3] sm:$0xff] %v177
  %361 = vst [vmem:[%s3 + $0x8] sm:$0xff] %v179
  %362 = vst [vmem:[%s3 + $0x10] sm:$0xff] %v302
  %363 = vst [vmem:[%s3 + $0x18] sm:$0xff] %v304
  %364 = vst [vmem:[%s3 + $0x20] sm:$0xff] %v183
  %365 = vst [vmem:[%s3 + $0x28] sm:$0xff] %v185
  %366 = vst [vmem:[%s3 + $0x30] sm:$0xff] %v308
  %367 = vst [vmem:[%s3 + $0x38] sm:$0xff] %v310
  %368 = vst [vmem:[%s3 + $0x40] sm:$0xff] %v189
  %369 = vst [vmem:[%s3 + $0x48] sm:$0xff] %v191
  %370 = vst [vmem:[%s3 + $0x50] sm:$0xff] %v314
  %371 = vst [vmem:[%s3 + $0x58] sm:$0xff] %v316
  %372 = vst [vmem:[%s3 + $0x60] sm:$0xff] %v195
  %373 = vst [vmem:[%s3 + $0x68] sm:$0xff] %v197
  %374 = vst [vmem:[%s3 + $0x70] sm:$0xff] %v320
  %375 = vst [vmem:[%s3 + $0x78] sm:$0xff] %v322
  %376 = vst [vmem:[%s3 + $0x80] sm:$0xff] %v201
  %377 = vst [vmem:[%s3 + $0x88] sm:$0xff] %v203
  %378 = vst [vmem:[%s3 + $0x90] sm:$0xff] %v326
  %379 = vst [vmem:[%s3 + $0x98] sm:$0xff] %v328
  %380 = vst [vmem:[%s3 + $0xa0] sm:$0xff] %v207
  %381 = vst [vmem:[%s3 + $0xa8] sm:$0xff] %v209
  %382 = vst [vmem:[%s3 + $0xb0] sm:$0xff] %v332
  %383 = vst [vmem:[%s3 + $0xb8] sm:$0xff] %v334
  %384 = vst [vmem:[%s3 + $0xc0] sm:$0xff] %v213
  %385 = vst [vmem:[%s3 + $0xc8] sm:$0xff] %v215
  %386 = vst [vmem:[%s3 + $0xd0] sm:$0xff] %v338
  %387 = vst [vmem:[%s3 + $0xd8] sm:$0xff] %v340
  %388 = vst [vmem:[%s3 + $0xe0] sm:$0xff] %v219
  %389 = vst [vmem:[%s3 + $0xe8] sm:$0xff] %v221
  %390 = vst [vmem:[%s3 + $0xf0] sm:$0xff] %v344
  %391 = vst [vmem:[%s3 + $0xf8] sm:$0xff] %v346
  %392 = vst [vmem:[%s3 + $0x100] sm:$0xff] %v225
  %393 = vst [vmem:[%s3 + $0x108] sm:$0xff] %v227
  %394 = vst [vmem:[%s3 + $0x110] sm:$0xff] %v350
  %395 = vst [vmem:[%s3 + $0x118] sm:$0xff] %v352
  %396 = vst [vmem:[%s3 + $0x120] sm:$0xff] %v231
  %397 = vst [vmem:[%s3 + $0x128] sm:$0xff] %v233
  %398 = vst [vmem:[%s3 + $0x130] sm:$0xff] %v356
  %399 = vst [vmem:[%s3 + $0x138] sm:$0xff] %v358
  // Predicated region
  $region14: #{decoder_forward.3} parent=0 // pred_check
    _
  $region15: #{decoder_forward.3} parent=0 // pred_check_branch
    %401 = sbr.rel (0) target = $region17
  $region16: #{decoder_forward.3} parent=0 // pred_region
    _
  $region17: #{decoder_forward.3} parent=0 // pred_fallthru
    _
  // Predicated region
  $region18: #{decoder_forward.3} parent=0 // pred_check
    _
  $region19: #{decoder_forward.3} parent=0 // pred_check_branch
    %403 = sbr.rel (0) target = $region21
  $region20: #{decoder_forward.3} parent=0 // pred_region
    _
  $region21: #{decoder_forward.3} parent=0 // pred_fallthru
    _

// kernel: decoder_forward.4
$region0: #{decoder_forward.4}
  #allocation0 [shape = 'u32[]', space=smem, size = 0x4, offset = 0x4, fixed_abs, tag = 'smem constant byte address 0x4 - core index']
  #allocation1 [shape = 'u32[144,128]{1,0:T(1,128)}', space=vmem, size = 0x12000, scoped, tag = 'internal scratch']
  %s0 = inlined_call_operand.vmem [shape: f32[10,8,512], index: 0, kind: input, shape index: {}]
  %s1 = inlined_call_operand.vmem [shape: f32[128,512], index: 1, kind: input, shape index: {}]
  %s2 = inlined_call_operand.vmem [shape: f32[10,8,128], index: 2, kind: output, shape index: {}]
  %s3 = sld [smem:[#allocation0]]
  $region18: #{decoder_forward.4} parent=0
    _
  %s5 = ssub.s32 1, %s3
  %s6 = scalar_select 0, %s5, %s3
  // Predicated region
  $region2: #{decoder_forward.4} parent=0 // pred_check
    _
  $region3: #{decoder_forward.4} parent=0 // pred_check_branch
    %8 = sbr.rel (0) target = $region5
  $region4: #{decoder_forward.4} parent=0 // pred_region
    _
  $region5: #{decoder_forward.4} parent=0 // pred_fallthru
    _
  // Predicated region
  $region6: #{decoder_forward.4} parent=0 // pred_check
    _
  $region7: #{decoder_forward.4} parent=0 // pred_check_branch
    %10 = sbr.rel (0) target = $region9
  $region8: #{decoder_forward.4} parent=0 // pred_region
    _
  $region9: #{decoder_forward.4} parent=0 // pred_fallthru
    _
  %v11 = vld [vmem:[%s0] sm:$0xff]
  %v12 = vld [vmem:[%s0 + $0x8] sm:$0xff]
  %v13 = vld [vmem:[%s0 + $0x10] sm:$0xff]
  %v14 = vld [vmem:[%s0 + $0x18] sm:$0xff]
  %v15 = vld [vmem:[%s1] sm:$0xff]
  %v16 = vld [vmem:[%s1 + $0x8] sm:$0xff]
  %v17 = vld [vmem:[%s1 + $0x10] sm:$0xff]
  %v18 = vld [vmem:[%s1 + $0x18] sm:$0xff]
  %v19 = vld [vmem:[%s1 + $0x20] sm:$0xff]
  %v20 = vld [vmem:[%s1 + $0x28] sm:$0xff]
  %v21 = vld [vmem:[%s1 + $0x30] sm:$0xff]
  %v22 = vld [vmem:[%s1 + $0x38] sm:$0xff]
  %v23 = vld [vmem:[%s1 + $0x40] sm:$0xff]
  %v24 = vld [vmem:[%s1 + $0x48] sm:$0xff]
  %v25 = vld [vmem:[%s1 + $0x50] sm:$0xff]
  %v26 = vld [vmem:[%s1 + $0x58] sm:$0xff]
  %v27 = vld [vmem:[%s1 + $0x60] sm:$0xff]
  %v28 = vld [vmem:[%s1 + $0x68] sm:$0xff]
  %v29 = vld [vmem:[%s1 + $0x70] sm:$0xff]
  %v30 = vld [vmem:[%s1 + $0x78] sm:$0xff]
  %v31 = vld [vmem:[%s1 + $0x80] sm:$0xff]
  %v32 = vld [vmem:[%s1 + $0x88] sm:$0xff]
  %v33 = vld [vmem:[%s1 + $0x90] sm:$0xff]
  %v34 = vld [vmem:[%s1 + $0x98] sm:$0xff]
  %v35 = vld [vmem:[%s1 + $0xa0] sm:$0xff]
  %v36 = vld [vmem:[%s1 + $0xa8] sm:$0xff]
  %v37 = vld [vmem:[%s1 + $0xb0] sm:$0xff]
  %v38 = vld [vmem:[%s1 + $0xb8] sm:$0xff]
  %v39 = vld [vmem:[%s1 + $0xc0] sm:$0xff]
  %v40 = vld [vmem:[%s1 + $0xc8] sm:$0xff]
  %v41 = vld [vmem:[%s1 + $0xd0] sm:$0xff]
  %v42 = vld [vmem:[%s1 + $0xd8] sm:$0xff]
  %v43 = vld [vmem:[%s1 + $0xe0] sm:$0xff]
  %v44 = vld [vmem:[%s1 + $0xe8] sm:$0xff]
  %v45 = vld [vmem:[%s1 + $0xf0] sm:$0xff]
  %v46 = vld [vmem:[%s1 + $0xf8] sm:$0xff]
  %v47 = vld [vmem:[%s1 + $0x100] sm:$0xff]
  %v48 = vld [vmem:[%s1 + $0x108] sm:$0xff]
  %v49 = vld [vmem:[%s1 + $0x110] sm:$0xff]
  %v50 = vld [vmem:[%s1 + $0x118] sm:$0xff]
  %v51 = vld [vmem:[%s1 + $0x120] sm:$0xff]
  %v52 = vld [vmem:[%s1 + $0x128] sm:$0xff]
  %v53 = vld [vmem:[%s1 + $0x130] sm:$0xff]
  %v54 = vld [vmem:[%s1 + $0x138] sm:$0xff]
  %v55 = vld [vmem:[%s1 + $0x140] sm:$0xff]
  %v56 = vld [vmem:[%s1 + $0x148] sm:$0xff]
  %v57 = vld [vmem:[%s1 + $0x150] sm:$0xff]
  %v58 = vld [vmem:[%s1 + $0x158] sm:$0xff]
  %v59 = vld [vmem:[%s1 + $0x160] sm:$0xff]
  %v60 = vld [vmem:[%s1 + $0x168] sm:$0xff]
  %v61 = vld [vmem:[%s1 + $0x170] sm:$0xff]
  %v62 = vld [vmem:[%s1 + $0x178] sm:$0xff]
  %v63 = vld [vmem:[%s1 + $0x180] sm:$0xff]
  %v64 = vld [vmem:[%s1 + $0x188] sm:$0xff]
  %v65 = vld [vmem:[%s1 + $0x190] sm:$0xff]
  %v66 = vld [vmem:[%s1 + $0x198] sm:$0xff]
  %v67 = vld [vmem:[%s1 + $0x1a0] sm:$0xff]
  %v68 = vld [vmem:[%s1 + $0x1a8] sm:$0xff]
  %v69 = vld [vmem:[%s1 + $0x1b0] sm:$0xff]
  %v70 = vld [vmem:[%s1 + $0x1b8] sm:$0xff]
  %v71 = vld [vmem:[%s1 + $0x1c0] sm:$0xff]
  %v72 = vld [vmem:[%s1 + $0x1c8] sm:$0xff]
  %v73 = vld [vmem:[%s1 + $0x1d0] sm:$0xff]
  %v74 = vld [vmem:[%s1 + $0x1d8] sm:$0xff]
  %v75 = vld [vmem:[%s1 + $0x1e0] sm:$0xff]
  %v76 = vld [vmem:[%s1 + $0x1e8] sm:$0xff]
  %v77 = vld [vmem:[%s1 + $0x1f0] sm:$0xff]
  %v78 = vld [vmem:[%s1 + $0x1f8] sm:$0xff]
  %79 = vmatprep.subr.mxu0 %v16
  %80 = vmatpush1.msra.mxu0 %v15
  %81 = vmatprep.subr.mxu0 %v20
  %82 = vmatpush1.msra.mxu0 %v19
  %83 = vmatprep.subr.mxu0 %v24
  %84 = vmatpush1.msra.mxu0 %v23
  %85 = vmatprep.subr.mxu0 %v28
  %86 = vmatpush1.msra.mxu0 %v27
  %87 = vmatprep.subr.mxu0 %v32
  %88 = vmatpush1.msra.mxu0 %v31
  %89 = vmatprep.subr.mxu0 %v36
  %90 = vmatpush1.msra.mxu0 %v35
  %91 = vmatprep.subr.mxu0 %v40
  %92 = vmatpush1.msra.mxu0 %v39
  %93 = vmatprep.subr.mxu0 %v44
  %94 = vmatpush1.msra.mxu0 %v43
  %95 = vmatprep.subr.mxu0 %v48
  %96 = vmatpush1.msra.mxu0 %v47
  %97 = vmatprep.subr.mxu0 %v52
  %98 = vmatpush1.msra.mxu0 %v51
  %99 = vmatprep.subr.mxu0 %v56
  %100 = vmatpush1.msra.mxu0 %v55
  %101 = vmatprep.subr.mxu0 %v60
  %102 = vmatpush1.msra.mxu0 %v59
  %103 = vmatprep.subr.mxu0 %v64
  %104 = vmatpush1.msra.mxu0 %v63
  %105 = vmatprep.subr.mxu0 %v68
  %106 = vmatpush1.msra.mxu0 %v67
  %107 = vmatprep.subr.mxu0 %v72
  %108 = vmatpush1.msra.mxu0 %v71
  %109 = vmatprep.subr.mxu0 %v76
  %110 = vmatpush1.msra.mxu0 %v75
  %111 = vmatprep.subr.mxu0 0.0
  %112 = vmatpush1.msra.mxu0 0.0
  %113 = vmatprep.subr.mxu0 0.0
  %114 = vmatpush1.msra.mxu0 0.0
  %115 = vmatprep.subr.mxu0 0.0
  %116 = vmatpush1.msra.mxu0 0.0
  %117 = vmatprep.subr.mxu0 0.0
  %118 = vmatpush1.msra.mxu0 0.0
  %119 = vmatprep.subr.mxu0 0.0
  %120 = vmatpush1.msra.mxu0 0.0
  %121 = vmatprep.subr.mxu0 0.0
  %122 = vmatpush1.msra.mxu0 0.0
  %123 = vmatprep.subr.mxu0 0.0
  %124 = vmatpush1.msra.mxu0 0.0
  %125 = vmatprep.subr.mxu0 0.0
  %126 = vmatpush1.msra.mxu0 0.0
  %127 = vmatprep.subr.mxu0 0.0
  %128 = vmatpush1.msra.mxu0 0.0
  %129 = vmatprep.subr.mxu0 0.0
  %130 = vmatpush1.msra.mxu0 0.0
  %131 = vmatprep.subr.mxu0 0.0
  %132 = vmatpush1.msra.mxu0 0.0
  %133 = vmatprep.subr.mxu0 0.0
  %134 = vmatpush1.msra.mxu0 0.0
  %135 = vmatprep.subr.mxu0 0.0
  %136 = vmatpush1.msra.mxu0 0.0
  %137 = vmatprep.subr.mxu0 0.0
  %138 = vmatpush1.msra.mxu0 0.0
  %139 = vmatprep.subr.mxu0 0.0
  %140 = vmatpush1.msra.mxu0 0.0
  %141 = vmatprep.subr.mxu0 0.0
  %142 = vmatpush1.msra.mxu0 0.0
  %143 = vmatprep.mubr.f32.mxu0 0.0
  %144 = vmatmul.mubr.f32.gmra.mrb[0].mxu0 0.0
  %v145 = vpop.f32.mrb[0].mxu0
  %v146 = vadd.f32 0.0, %v145
  %v147 = vpop.f32.mrb[0].mxu0
  %v148 = vadd.f32 0.0, %v147
  %149 = vdwg.mxu0
  %150 = vmatprep.subr.mxu0 %v18
  %151 = vmatpush1.msra.mxu0 %v17
  %152 = vmatprep.subr.mxu0 %v22
  %153 = vmatpush1.msra.mxu0 %v21
  %154 = vmatprep.subr.mxu0 %v26
  %155 = vmatpush1.msra.mxu0 %v25
  %156 = vmatprep.subr.mxu0 %v30
  %157 = vmatpush1.msra.mxu0 %v29
  %158 = vmatprep.subr.mxu0 %v34
  %159 = vmatpush1.msra.mxu0 %v33
  %160 = vmatprep.subr.mxu0 %v38
  %161 = vmatpush1.msra.mxu0 %v37
  %162 = vmatprep.subr.mxu0 %v42
  %163 = vmatpush1.msra.mxu0 %v41
  %164 = vmatprep.subr.mxu0 %v46
  %165 = vmatpush1.msra.mxu0 %v45
  %166 = vmatprep.subr.mxu0 %v50
  %167 = vmatpush1.msra.mxu0 %v49
  %168 = vmatprep.subr.mxu0 %v54
  %169 = vmatpush1.msra.mxu0 %v53
  %170 = vmatprep.subr.mxu0 %v58
  %171 = vmatpush1.msra.mxu0 %v57
  %172 = vmatprep.subr.mxu0 %v62
  %173 = vmatpush1.msra.mxu0 %v61
  %174 = vmatprep.subr.mxu0 %v66
  %175 = vmatpush1.msra.mxu0 %v65
  %176 = vmatprep.subr.mxu0 %v70
  %177 = vmatpush1.msra.mxu0 %v69
  %178 = vmatprep.subr.mxu0 %v74
  %179 = vmatpush1.msra.mxu0 %v73
  %180 = vmatprep.subr.mxu0 %v78
  %181 = vmatpush1.msra.mxu0 %v77
  %182 = vmatprep.subr.mxu0 0.0
  %183 = vmatpush1.msra.mxu0 0.0
  %184 = vmatprep.subr.mxu0 0.0
  %185 = vmatpush1.msra.mxu0 0.0
  %186 = vmatprep.subr.mxu0 0.0
  %187 = vmatpush1.msra.mxu0 0.0
  %188 = vmatprep.subr.mxu0 0.0
  %189 = vmatpush1.msra.mxu0 0.0
  %190 = vmatprep.subr.mxu0 0.0
  %191 = vmatpush1.msra.mxu0 0.0
  %192 = vmatprep.subr.mxu0 0.0
  %193 = vmatpush1.msra.mxu0 0.0
  %194 = vmatprep.subr.mxu0 0.0
  %195 = vmatpush1.msra.mxu0 0.0
  %196 = vmatprep.subr.mxu0 0.0
  %197 = vmatpush1.msra.mxu0 0.0
  %198 = vmatprep.subr.mxu0 0.0
  %199 = vmatpush1.msra.mxu0 0.0
  %200 = vmatprep.subr.mxu0 0.0
  %201 = vmatpush1.msra.mxu0 0.0
  %202 = vmatprep.subr.mxu0 0.0
  %203 = vmatpush1.msra.mxu0 0.0
  %204 = vmatprep.subr.mxu0 0.0
  %205 = vmatpush1.msra.mxu0 0.0
  %206 = vmatprep.subr.mxu0 0.0
  %207 = vmatpush1.msra.mxu0 0.0
  %208 = vmatprep.subr.mxu0 0.0
  %209 = vmatpush1.msra.mxu0 0.0
  %210 = vmatprep.subr.mxu0 0.0
  %211 = vmatpush1.msra.mxu0 0.0
  %212 = vmatprep.subr.mxu0 0.0
  %213 = vmatpush1.msra.mxu0 0.0
  %214 = vmatprep.mubr.f32.mxu0 0.0
  %215 = vmatmul.mubr.f32.gmra.mrb[0].mxu0 0.0
  %v216 = vpop.f32.mrb[0].mxu0
  %v217 = vadd.f32 0.0, %v216
  %v218 = vpop.f32.mrb[0].mxu0
  %v219 = vadd.f32 0.0, %v218
  %220 = vdwg.mxu0
  %v221 = vadd.f32 %v11, %v146
  %v222 = vadd.f32 %v12, %v148
  %v223 = vadd.f32 %v13, %v217
  %v224 = vadd.f32 %v14, %v219
  %v225 = vxor.u32 %v221, 2147483648
  %v226 = vmul.f32 %v225, 1.442695
  %v227 = vpow.pop %v226
  %v228 = vadd.f32 %v227, 1.0
  %v229 = vrcp.pop %v228
  %v230 = vmul.f32 1.0, %v229
  %v231 = vxor.u32 %v222, 2147483648
  %v232 = vmul.f32 %v231, 1.442695
  %v233 = vpow.pop %v232
  %v234 = vadd.f32 %v233, 1.0
  %v235 = vrcp.pop %v234
  %v236 = vmul.f32 1.0, %v235
  %v237 = vtanh.pop %v223
  %v238 = vxor.u32 %v224, 2147483648
  %v239 = vmul.f32 %v238, 1.442695
  %v240 = vpow.pop %v239
  %v241 = vadd.f32 %v240, 1.0
  %v242 = vrcp.pop %v241
  %v243 = vmul.f32 1.0, %v242
  %v244 = vmul.f32 %v236, 0.0
  %v245 = vmul.f32 %v230, %v237
  %v246 = vadd.f32 %v244, %v245
  %v247 = vtanh.pop %v246
  %v248 = vmul.f32 %v243, %v247
  %249 = vst [vmem:[%s2] sm:$0xff] %v248
  %s250 = scalar_lea.vmem %s0, 32
  %v251 = vld [vmem:[%s250] sm:$0xff]
  %v252 = vld [vmem:[%s250 + $0x8] sm:$0xff]
  %v253 = vld [vmem:[%s250 + $0x10] sm:$0xff]
  %v254 = vld [vmem:[%s250 + $0x18] sm:$0xff]
  %v255 = vld [vmem:[%s1] sm:$0xff]
  %v256 = vld [vmem:[%s1 + $0x8] sm:$0xff]
  %v257 = vld [vmem:[%s1 + $0x10] sm:$0xff]
  %v258 = vld [vmem:[%s1 + $0x18] sm:$0xff]
  %v259 = vld [vmem:[%s1 + $0x20] sm:$0xff]
  %v260 = vld [vmem:[%s1 + $0x28] sm:$0xff]
  %v261 = vld [vmem:[%s1 + $0x30] sm:$0xff]
  %v262 = vld [vmem:[%s1 + $0x38] sm:$0xff]
  %v263 = vld [vmem:[%s1 + $0x40] sm:$0xff]
  %v264 = vld [vmem:[%s1 + $0x48] sm:$0xff]
  %v265 = vld [vmem:[%s1 + $0x50] sm:$0xff]
  %v266 = vld [vmem:[%s1 + $0x58] sm:$0xff]
  %v267 = vld [vmem:[%s1 + $0x60] sm:$0xff]
  %v268 = vld [vmem:[%s1 + $0x68] sm:$0xff]
  %v269 = vld [vmem:[%s1 + $0x70] sm:$0xff]
  %v270 = vld [vmem:[%s1 + $0x78] sm:$0xff]
  %v271 = vld [vmem:[%s1 + $0x80] sm:$0xff]
  %v272 = vld [vmem:[%s1 + $0x88] sm:$0xff]
  %v273 = vld [vmem:[%s1 + $0x90] sm:$0xff]
  %v274 = vld [vmem:[%s1 + $0x98] sm:$0xff]
  %v275 = vld [vmem:[%s1 + $0xa0] sm:$0xff]
  %v276 = vld [vmem:[%s1 + $0xa8] sm:$0xff]
  %v277 = vld [vmem:[%s1 + $0xb0] sm:$0xff]
  %v278 = vld [vmem:[%s1 + $0xb8] sm:$0xff]
  %v279 = vld [vmem:[%s1 + $0xc0] sm:$0xff]
  %v280 = vld [vmem:[%s1 + $0xc8] sm:$0xff]
  %v281 = vld [vmem:[%s1 + $0xd0] sm:$0xff]
  %v282 = vld [vmem:[%s1 + $0xd8] sm:$0xff]
  %v283 = vld [vmem:[%s1 + $0xe0] sm:$0xff]
  %v284 = vld [vmem:[%s1 + $0xe8] sm:$0xff]
  %v285 = vld [vmem:[%s1 + $0xf0] sm:$0xff]
  %v286 = vld [vmem:[%s1 + $0xf8] sm:$0xff]
  %v287 = vld [vmem:[%s1 + $0x100] sm:$0xff]
  %v288 = vld [vmem:[%s1 + $0x108] sm:$0xff]
  %v289 = vld [vmem:[%s1 + $0x110] sm:$0xff]
  %v290 = vld [vmem:[%s1 + $0x118] sm:$0xff]
  %v291 = vld [vmem:[%s1 + $0x120] sm:$0xff]
  %v292 = vld [vmem:[%s1 + $0x128] sm:$0xff]
  %v293 = vld [vmem:[%s1 + $0x130] sm:$0xff]
  %v294 = vld [vmem:[%s1 + $0x138] sm:$0xff]
  %v295 = vld [vmem:[%s1 + $0x140] sm:$0xff]
  %v296 = vld [vmem:[%s1 + $0x148] sm:$0xff]
  %v297 = vld [vmem:[%s1 + $0x150] sm:$0xff]
  %v298 = vld [vmem:[%s1 + $0x158] sm:$0xff]
  %v299 = vld [vmem:[%s1 + $0x160] sm:$0xff]
  %v300 = vld [vmem:[%s1 + $0x168] sm:$0xff]
  %v301 = vld [vmem:[%s1 + $0x170] sm:$0xff]
  %v302 = vld [vmem:[%s1 + $0x178] sm:$0xff]
  %v303 = vld [vmem:[%s1 + $0x180] sm:$0xff]
  %v304 = vld [vmem:[%s1 + $0x188] sm:$0xff]
  %v305 = vld [vmem:[%s1 + $0x190] sm:$0xff]
  %v306 = vld [vmem:[%s1 + $0x198] sm:$0xff]
  %v307 = vld [vmem:[%s1 + $0x1a0] sm:$0xff]
  %v308 = vld [vmem:[%s1 + $0x1a8] sm:$0xff]
  %v309 = vld [vmem:[%s1 + $0x1b0] sm:$0xff]
  %v310 = vld [vmem:[%s1 + $0x1b8] sm:$0xff]
  %v311 = vld [vmem:[%s1 + $0x1c0] sm:$0xff]
  %v312 = vld [vmem:[%s1 + $0x1c8] sm:$0xff]
  %v313 = vld [vmem:[%s1 + $0x1d0] sm:$0xff]
  %v314 = vld [vmem:[%s1 + $0x1d8] sm:$0xff]
  %v315 = vld [vmem:[%s1 + $0x1e0] sm:$0xff]
  %v316 = vld [vmem:[%s1 + $0x1e8] sm:$0xff]
  %v317 = vld [vmem:[%s1 + $0x1f0] sm:$0xff]
  %v318 = vld [vmem:[%s1 + $0x1f8] sm:$0xff]
  %319 = vmatprep.subr.mxu0 %v256
  %320 = vmatpush1.msra.mxu0 %v255
  %321 = vmatprep.subr.mxu0 %v260
  %322 = vmatpush1.msra.mxu0 %v259
  %323 = vmatprep.subr.mxu0 %v264
  %324 = vmatpush1.msra.mxu0 %v263
  %325 = vmatprep.subr.mxu0 %v268
  %326 = vmatpush1.msra.mxu0 %v267
  %327 = vmatprep.subr.mxu0 %v272
  %328 = vmatpush1.msra.mxu0 %v271
  %329 = vmatprep.subr.mxu0 %v276
  %330 = vmatpush1.msra.mxu0 %v275
  %331 = vmatprep.subr.mxu0 %v280
  %332 = vmatpush1.msra.mxu0 %v279
  %333 = vmatprep.subr.mxu0 %v284
  %334 = vmatpush1.msra.mxu0 %v283
  %335 = vmatprep.subr.mxu0 %v288
  %336 = vmatpush1.msra.mxu0 %v287
  %337 = vmatprep.subr.mxu0 %v292
  %338 = vmatpush1.msra.mxu0 %v291
  %339 = vmatprep.subr.mxu0 %v296
  %340 = vmatpush1.msra.mxu0 %v295
  %341 = vmatprep.subr.mxu0 %v300
  %342 = vmatpush1.msra.mxu0 %v299
  %343 = vmatprep.subr.mxu0 %v304
  %344 = vmatpush1.msra.mxu0 %v303
  %345 = vmatprep.subr.mxu0 %v308
  %346 = vmatpush1.msra.mxu0 %v307
  %347 = vmatprep.subr.mxu0 %v312
  %348 = vmatpush1.msra.mxu0 %v311
  %349 = vmatprep.subr.mxu0 %v316
  %350 = vmatpush1.msra.mxu0 %v315
  %351 = vmatprep.subr.mxu0 0.0
  %352 = vmatpush1.msra.mxu0 0.0
  %353 = vmatprep.subr.mxu0 0.0
  %354 = vmatpush1.msra.mxu0 0.0
  %355 = vmatprep.subr.mxu0 0.0
  %356 = vmatpush1.msra.mxu0 0.0
  %357 = vmatprep.subr.mxu0 0.0
  %358 = vmatpush1.msra.mxu0 0.0
  %359 = vmatprep.subr.mxu0 0.0
  %360 = vmatpush1.msra.mxu0 0.0
  %361 = vmatprep.subr.mxu0 0.0
  %362 = vmatpush1.msra.mxu0 0.0
  %363 = vmatprep.subr.mxu0 0.0
  %364 = vmatpush1.msra.mxu0 0.0
  %365 = vmatprep.subr.mxu0 0.0
  %366 = vmatpush1.msra.mxu0 0.0
  %367 = vmatprep.subr.mxu0 0.0
  %368 = vmatpush1.msra.mxu0 0.0
  %369 = vmatprep.subr.mxu0 0.0
  %370 = vmatpush1.msra.mxu0 0.0
  %371 = vmatprep.subr.mxu0 0.0
  %372 = vmatpush1.msra.mxu0 0.0
  %373 = vmatprep.subr.mxu0 0.0
  %374 = vmatpush1.msra.mxu0 0.0
  %375 = vmatprep.subr.mxu0 0.0
  %376 = vmatpush1.msra.mxu0 0.0
  %377 = vmatprep.subr.mxu0 0.0
  %378 = vmatpush1.msra.mxu0 0.0
  %379 = vmatprep.subr.mxu0 0.0
  %380 = vmatpush1.msra.mxu0 0.0
  %381 = vmatprep.subr.mxu0 0.0
  %382 = vmatpush1.msra.mxu0 0.0
  %383 = vmatprep.mubr.f32.mxu0 0.0
  %384 = vmatmul.mubr.f32.gmra.mrb[0].mxu0 %v248
  %v385 = vpop.f32.mrb[0].mxu0
  %v386 = vadd.f32 0.0, %v385
  %v387 = vpop.f32.mrb[0].mxu0
  %v388 = vadd.f32 0.0, %v387
  %389 = vdwg.mxu0
  %390 = vmatprep.subr.mxu0 %v258
  %391 = vmatpush1.msra.mxu0 %v257
  %392 = vmatprep.subr.mxu0 %v262
  %393 = vmatpush1.msra.mxu0 %v261
  %394 = vmatprep.subr.mxu0 %v266
  %395 = vmatpush1.msra.mxu0 %v265
  %396 = vmatprep.subr.mxu0 %v270
  %397 = vmatpush1.msra.mxu0 %v269
  %398 = vmatprep.subr.mxu0 %v274
  %399 = vmatpush1.msra.mxu0 %v273
  %400 = vmatprep.subr.mxu0 %v278
  %401 = vmatpush1.msra.mxu0 %v277
  %402 = vmatprep.subr.mxu0 %v282
  %403 = vmatpush1.msra.mxu0 %v281
  %404 = vmatprep.subr.mxu0 %v286
  %405 = vmatpush1.msra.mxu0 %v285
  %406 = vmatprep.subr.mxu0 %v290
  %407 = vmatpush1.msra.mxu0 %v289
  %408 = vmatprep.subr.mxu0 %v294
  %409 = vmatpush1.msra.mxu0 %v293
  %410 = vmatprep.subr.mxu0 %v298
  %411 = vmatpush1.msra.mxu0 %v297
  %412 = vmatprep.subr.mxu0 %v302
  %413 = vmatpush1.msra.mxu0 %v301
  %414 = vmatprep.subr.mxu0 %v306
  %415 = vmatpush1.msra.mxu0 %v305
  %416 = vmatprep.subr.mxu0 %v310
  %417 = vmatpush1.msra.mxu0 %v309
  %418 = vmatprep.subr.mxu0 %v314
  %419 = vmatpush1.msra.mxu0 %v313
  %420 = vmatprep.subr.mxu0 %v318
  %421 = vmatpush1.msra.mxu0 %v317
  %422 = vmatprep.subr.mxu0 0.0
  %423 = vmatpush1.msra.mxu0 0.0
  %424 = vmatprep.subr.mxu0 0.0
  %425 = vmatpush1.msra.mxu0 0.0
  %426 = vmatprep.subr.mxu0 0.0
  %427 = vmatpush1.msra.mxu0 0.0
  %428 = vmatprep.subr.mxu0 0.0
  %429 = vmatpush1.msra.mxu0 0.0
  %430 = vmatprep.subr.mxu0 0.0
  %431 = vmatpush1.msra.mxu0 0.0
  %432 = vmatprep.subr.mxu0 0.0
  %433 = vmatpush1.msra.mxu0 0.0
  %434 = vmatprep.subr.mxu0 0.0
  %435 = vmatpush1.msra.mxu0 0.0
  %436 = vmatprep.subr.mxu0 0.0
  %437 = vmatpush1.msra.mxu0 0.0
  %438 = vmatprep.subr.mxu0 0.0
  %439 = vmatpush1.msra.mxu0 0.0
  %440 = vmatprep.subr.mxu0 0.0
  %441 = vmatpush1.msra.mxu0 0.0
  %442 = vmatprep.subr.mxu0 0.0
  %443 = vmatpush1.msra.mxu0 0.0
  %444 = vmatprep.subr.mxu0 0.0
  %445 = vmatpush1.msra.mxu0 0.0
  %446 = vmatprep.subr.mxu0 0.0
  %447 = vmatpush1.msra.mxu0 0.0
  %448 = vmatprep.subr.mxu0 0.0
  %449 = vmatpush1.msra.mxu0 0.0
  %450 = vmatprep.subr.mxu0 0.0
  %451 = vmatpush1.msra.mxu0 0.0
  %452 = vmatprep.subr.mxu0 0.0
  %453 = vmatpush1.msra.mxu0 0.0
  %454 = vmatprep.mubr.f32.mxu0 0.0
  %455 = vmatmul.mubr.f32.gmra.mrb[0].mxu0 %v248
  %v456 = vpop.f32.mrb[0].mxu0
  %v457 = vadd.f32 0.0, %v456
  %v458 = vpop.f32.mrb[0].mxu0
  %v459 = vadd.f32 0.0, %v458
  %460 = vdwg.mxu0
  %v461 = vadd.f32 %v251, %v386
  %v462 = vadd.f32 %v252, %v388
  %v463 = vadd.f32 %v253, %v457
  %v464 = vadd.f32 %v254, %v459
  %v465 = vxor.u32 %v461, 2147483648
  %v466 = vmul.f32 %v465, 1.442695
  %v467 = vpow.pop %v466
  %v468 = vadd.f32 %v467, 1.0
  %v469 = vrcp.pop %v468
  %v470 = vmul.f32 1.0, %v469
  %v471 = vxor.u32 %v462, 2147483648
  %v472 = vmul.f32 %v471, 1.442695
  %v473 = vpow.pop %v472
  %v474 = vadd.f32 %v473, 1.0
  %v475 = vrcp.pop %v474
  %v476 = vmul.f32 1.0, %v475
  %v477 = vtanh.pop %v463
  %v478 = vxor.u32 %v464, 2147483648
  %v479 = vmul.f32 %v478, 1.442695
  %v480 = vpow.pop %v479
  %v481 = vadd.f32 %v480, 1.0
  %v482 = vrcp.pop %v481
  %v483 = vmul.f32 1.0, %v482
  %v484 = vmul.f32 %v476, %v246
  %v485 = vmul.f32 %v470, %v477
  %v486 = vadd.f32 %v484, %v485
  %v487 = vtanh.pop %v486
  %v488 = vmul.f32 %v483, %v487
  %s489 = scalar_lea.vmem %s2, 8
  %490 = vst [vmem:[%s489] sm:$0xff] %v488
  %s491 = scalar_lea.vmem %s0, 64
  %v492 = vld [vmem:[%s491] sm:$0xff]
  %v493 = vld [vmem:[%s491 + $0x8] sm:$0xff]
  %v494 = vld [vmem:[%s491 + $0x10] sm:$0xff]
  %v495 = vld [vmem:[%s491 + $0x18] sm:$0xff]
  %v496 = vld [vmem:[%s1] sm:$0xff]
  %v497 = vld [vmem:[%s1 + $0x8] sm:$0xff]
  %v498 = vld [vmem:[%s1 + $0x10] sm:$0xff]
  %v499 = vld [vmem:[%s1 + $0x18] sm:$0xff]
  %v500 = vld [vmem:[%s1 + $0x20] sm:$0xff]
  %v501 = vld [vmem:[%s1 + $0x28] sm:$0xff]
  %v502 = vld [vmem:[%s1 + $0x30] sm:$0xff]
  %v503 = vld [vmem:[%s1 + $0x38] sm:$0xff]
  %v504 = vld [vmem:[%s1 + $0x40] sm:$0xff]
  %v505 = vld [vmem:[%s1 + $0x48] sm:$0xff]
  %v506 = vld [vmem:[%s1 + $0x50] sm:$0xff]
  %v507 = vld [vmem:[%s1 + $0x58] sm:$0xff]
  %v508 = vld [vmem:[%s1 + $0x60] sm:$0xff]
  %v509 = vld [vmem:[%s1 + $0x68] sm:$0xff]
  %v510 = vld [vmem:[%s1 + $0x70] sm:$0xff]
  %v511 = vld [vmem:[%s1 + $0x78] sm:$0xff]
  %v512 = vld [vmem:[%s1 + $0x80] sm:$0xff]
  %v513 = vld [vmem:[%s1 + $0x88] sm:$0xff]
  %v514 = vld [vmem:[%s1 + $0x90] sm:$0xff]
  %v515 = vld [vmem:[%s1 + $0x98] sm:$0xff]
  %v516 = vld [vmem:[%s1 + $0xa0] sm:$0xff]
  %v517 = vld [vmem:[%s1 + $0xa8] sm:$0xff]
  %v518 = vld [vmem:[%s1 + $0xb0] sm:$0xff]
  %v519 = vld [vmem:[%s1 + $0xb8] sm:$0xff]
  %v520 = vld [vmem:[%s1 + $0xc0] sm:$0xff]
  %v521 = vld [vmem:[%s1 + $0xc8] sm:$0xff]
  %v522 = vld [vmem:[%s1 + $0xd0] sm:$0xff]
  %v523 = vld [vmem:[%s1 + $0xd8] sm:$0xff]
  %v524 = vld [vmem:[%s1 + $0xe0] sm:$0xff]
  %v525 = vld [vmem:[%s1 + $0xe8] sm:$0xff]
  %v526 = vld [vmem:[%s1 + $0xf0] sm:$0xff]
  %v527 = vld [vmem:[%s1 + $0xf8] sm:$0xff]
  %v528 = vld [vmem:[%s1 + $0x100] sm:$0xff]
  %v529 = vld [vmem:[%s1 + $0x108] sm:$0xff]
  %v530 = vld [vmem:[%s1 + $0x110] sm:$0xff]
  %v531 = vld [vmem:[%s1 + $0x118] sm:$0xff]
  %v532 = vld [vmem:[%s1 + $0x120] sm:$0xff]
  %v533 = vld [vmem:[%s1 + $0x128] sm:$0xff]
  %v534 = vld [vmem:[%s1 + $0x130] sm:$0xff]
  %v535 = vld [vmem:[%s1 + $0x138] sm:$0xff]
  %v536 = vld [vmem:[%s1 + $0x140] sm:$0xff]
  %v537 = vld [vmem:[%s1 + $0x148] sm:$0xff]
  %v538 = vld [vmem:[%s1 + $0x150] sm:$0xff]
  %v539 = vld [vmem:[%s1 + $0x158] sm:$0xff]
  %v540 = vld [vmem:[%s1 + $0x160] sm:$0xff]
  %v541 = vld [vmem:[%s1 + $0x168] sm:$0xff]
  %v542 = vld [vmem:[%s1 + $0x170] sm:$0xff]
  %v543 = vld [vmem:[%s1 + $0x178] sm:$0xff]
  %v544 = vld [vmem:[%s1 + $0x180] sm:$0xff]
  %v545 = vld [vmem:[%s1 + $0x188] sm:$0xff]
  %v546 = vld [vmem:[%s1 + $0x190] sm:$0xff]
  %v547 = vld [vmem:[%s1 + $0x198] sm:$0xff]
  %v548 = vld [vmem:[%s1 + $0x1a0] sm:$0xff]
  %v549 = vld [vmem:[%s1 + $0x1a8] sm:$0xff]
  %v550 = vld [vmem:[%s1 + $0x1b0] sm:$0xff]
  %v551 = vld [vmem:[%s1 + $0x1b8] sm:$0xff]
  %v552 = vld [vmem:[%s1 + $0x1c0] sm:$0xff]
  %v553 = vld [vmem:[%s1 + $0x1c8] sm:$0xff]
  %v554 = vld [vmem:[%s1 + $0x1d0] sm:$0xff]
  %v555 = vld [vmem:[%s1 + $0x1d8] sm:$0xff]
  %v556 = vld [vmem:[%s1 + $0x1e0] sm:$0xff]
  %v557 = vld [vmem:[%s1 + $0x1e8] sm:$0xff]
  %v558 = vld [vmem:[%s1 + $0x1f0] sm:$0xff]
  %v559 = vld [vmem:[%s1 + $0x1f8] sm:$0xff]
  %560 = vmatprep.subr.mxu0 %v497
  %561 = vmatpush1.msra.mxu0 %v496
  %562 = vmatprep.subr.mxu0 %v501
  %563 = vmatpush1.msra.mxu0 %v500
  %564 = vmatprep.subr.mxu0 %v505
  %565 = vmatpush1.msra.mxu0 %v504
  %566 = vmatprep.subr.mxu0 %v509
  %567 = vmatpush1.msra.mxu0 %v508
  %568 = vmatprep.subr.mxu0 %v513
  %569 = vmatpush1.msra.mxu0 %v512
  %570 = vmatprep.subr.mxu0 %v517
  %571 = vmatpush1.msra.mxu0 %v516
  %572 = vmatprep.subr.mxu0 %v521
  %573 = vmatpush1.msra.mxu0 %v520
  %574 = vmatprep.subr.mxu0 %v525
  %575 = vmatpush1.msra.mxu0 %v524
  %576 = vmatprep.subr.mxu0 %v529
  %577 = vmatpush1.msra.mxu0 %v528
  %578 = vmatprep.subr.mxu0 %v533
  %579 = vmatpush1.msra.mxu0 %v532
  %580 = vmatprep.subr.mxu0 %v537
  %581 = vmatpush1.msra.mxu0 %v536
  %582 = vmatprep.subr.mxu0 %v541
  %583 = vmatpush1.msra.mxu0 %v540
  %584 = vmatprep.subr.mxu0 %v545
  %585 = vmatpush1.msra.mxu0 %v544
  %586 = vmatprep.subr.mxu0 %v549
  %587 = vmatpush1.msra.mxu0 %v548
  %588 = vmatprep.subr.mxu0 %v553
  %589 = vmatpush1.msra.mxu0 %v552
  %590 = vmatprep.subr.mxu0 %v557
  %591 = vmatpush1.msra.mxu0 %v556
  %592 = vmatprep.subr.mxu0 0.0
  %593 = vmatpush1.msra.mxu0 0.0
  %594 = vmatprep.subr.mxu0 0.0
  %595 = vmatpush1.msra.mxu0 0.0
  %596 = vmatprep.subr.mxu0 0.0
  %597 = vmatpush1.msra.mxu0 0.0
  %598 = vmatprep.subr.mxu0 0.0
  %599 = vmatpush1.msra.mxu0 0.0
  %600 = vmatprep.subr.mxu0 0.0
  %601 = vmatpush1.msra.mxu0 0.0
  %602 = vmatprep.subr.mxu0 0.0
  %603 = vmatpush1.msra.mxu0 0.0
  %604 = vmatprep.subr.mxu0 0.0
  %605 = vmatpush1.msra.mxu0 0.0
  %606 = vmatprep.subr.mxu0 0.0
  %607 = vmatpush1.msra.mxu0 0.0
  %608 = vmatprep.subr.mxu0 0.0
  %609 = vmatpush1.msra.mxu0 0.0
  %610 = vmatprep.subr.mxu0 0.0
  %611 = vmatpush1.msra.mxu0 0.0
  %612 = vmatprep.subr.mxu0 0.0
  %613 = vmatpush1.msra.mxu0 0.0
  %614 = vmatprep.subr.mxu0 0.0
  %615 = vmatpush1.msra.mxu0 0.0
  %616 = vmatprep.subr.mxu0 0.0
  %617 = vmatpush1.msra.mxu0 0.0
  %618 = vmatprep.subr.mxu0 0.0
  %619 = vmatpush1.msra.mxu0 0.0
  %620 = vmatprep.subr.mxu0 0.0
  %621 = vmatpush1.msra.mxu0 0.0
  %622 = vmatprep.subr.mxu0 0.0
  %623 = vmatpush1.msra.mxu0 0.0
  %624 = vmatprep.mubr.f32.mxu0 0.0
  %625 = vmatmul.mubr.f32.gmra.mrb[0].mxu0 %v488
  %v626 = vpop.f32.mrb[0].mxu0
  %v627 = vadd.f32 0.0, %v626
  %v628 = vpop.f32.mrb[0].mxu0
  %v629 = vadd.f32 0.0, %v628
  %630 = vdwg.mxu0
  %631 = vmatprep.subr.mxu0 %v499
  %632 = vmatpush1.msra.mxu0 %v498
  %633 = vmatprep.subr.mxu0 %v503
  %634 = vmatpush1.msra.mxu0 %v502
  %635 = vmatprep.subr.mxu0 %v507
  %636 = vmatpush1.msra.mxu0 %v506
  %637 = vmatprep.subr.mxu0 %v511
  %638 = vmatpush1.msra.mxu0 %v510
  %639 = vmatprep.subr.mxu0 %v515
  %640 = vmatpush1.msra.mxu0 %v514
  %641 = vmatprep.subr.mxu0 %v519
  %642 = vmatpush1.msra.mxu0 %v518
  %643 = vmatprep.subr.mxu0 %v523
  %644 = vmatpush1.msra.mxu0 %v522
  %645 = vmatprep.subr.mxu0 %v527
  %646 = vmatpush1.msra.mxu0 %v526
  %647 = vmatprep.subr.mxu0 %v531
  %648 = vmatpush1.msra.mxu0 %v530
  %649 = vmatprep.subr.mxu0 %v535
  %650 = vmatpush1.msra.mxu0 %v534
  %651 = vmatprep.subr.mxu0 %v539
  %652 = vmatpush1.msra.mxu0 %v538
  %653 = vmatprep.subr.mxu0 %v543
  %654 = vmatpush1.msra.mxu0 %v542
  %655 = vmatprep.subr.mxu0 %v547
  %656 = vmatpush1.msra.mxu0 %v546
  %657 = vmatprep.subr.mxu0 %v551
  %658 = vmatpush1.msra.mxu0 %v550
  %659 = vmatprep.subr.mxu0 %v555
  %660 = vmatpush1.msra.mxu0 %v554
  %661 = vmatprep.subr.mxu0 %v559
  %662 = vmatpush1.msra.mxu0 %v558
  %663 = vmatprep.subr.mxu0 0.0
  %664 = vmatpush1.msra.mxu0 0.0
  %665 = vmatprep.subr.mxu0 0.0
  %666 = vmatpush1.msra.mxu0 0.0
  %667 = vmatprep.subr.mxu0 0.0
  %668 = vmatpush1.msra.mxu0 0.0
  %669 = vmatprep.subr.mxu0 0.0
  %670 = vmatpush1.msra.mxu0 0.0
  %671 = vmatprep.subr.mxu0 0.0
  %672 = vmatpush1.msra.mxu0 0.0
  %673 = vmatprep.subr.mxu0 0.0
  %674 = vmatpush1.msra.mxu0 0.0
  %675 = vmatprep.subr.mxu0 0.0
  %676 = vmatpush1.msra.mxu0 0.0
  %677 = vmatprep.subr.mxu0 0.0
  %678 = vmatpush1.msra.mxu0 0.0
  %679 = vmatprep.subr.mxu0 0.0
  %680 = vmatpush1.msra.mxu0 0.0
  %681 = vmatprep.subr.mxu0 0.0
  %682 = vmatpush1.msra.mxu0 0.0
  %683 = vmatprep.subr.mxu0 0.0
  %684 = vmatpush1.msra.mxu0 0.0
  %685 = vmatprep.subr.mxu0 0.0
  %686 = vmatpush1.msra.mxu0 0.0
  %687 = vmatprep.subr.mxu0 0.0
  %688 = vmatpush1.msra.mxu0 0.0
  %689 = vmatprep.subr.mxu0 0.0
  %690 = vmatpush1.msra.mxu0 0.0
  %691 = vmatprep.subr.mxu0 0.0
  %692 = vmatpush1.msra.mxu0 0.0
  %693 = vmatprep.subr.mxu0 0.0
  %694 = vmatpush1.msra.mxu0 0.0
  %695 = vmatprep.mubr.f32.mxu0 0.0
  %696 = vmatmul.mubr.f32.gmra.mrb[0].mxu0 %v488
  %v697 = vpop.f32.mrb[0].mxu0
  %v698 = vadd.f32 0.0, %v697
  %v699 = vpop.f32.mrb[0].mxu0
  %v700 = vadd.f32 0.0, %v699
  %701 = vdwg.mxu0
  %v702 = vadd.f32 %v492, %v627
  %v703 = vadd.f32 %v493, %v629
  %v704 = vadd.f32 %v494, %v698
  %v705 = vadd.f32 %v495, %v700
  %v706 = vxor.u32 %v702, 2147483648
  %v707 = vmul.f32 %v706, 1.442695
  %v708 = vpow.pop %v707
  %v709 = vadd.f32 %v708, 1.0
  %v710 = vrcp.pop %v709
  %v711 = vmul.f32 1.0, %v710
  %v712 = vxor.u32 %v703, 2147483648
  %v713 = vmul.f32 %v712, 1.442695
  %v714 = vpow.pop %v713
  %v715 = vadd.f32 %v714, 1.0
  %v716 = vrcp.pop %v715
  %v717 = vmul.f32 1.0, %v716
  %v718 = vtanh.pop %v704
  %v719 = vxor.u32 %v705, 2147483648
  %v720 = vmul.f32 %v719, 1.442695
  %v721 = vpow.pop %v720
  %v722 = vadd.f32 %v721, 1.0
  %v723 = vrcp.pop %v722
  %v724 = vmul.f32 1.0, %v723
  %v725 = vmul.f32 %v717, %v486
  %v726 = vmul.f32 %v711, %v718
  %v727 = vadd.f32 %v725, %v726
  %v728 = vtanh.pop %v727
  %v729 = vmul.f32 %v724, %v728
  %s730 = scalar_lea.vmem %s2, 16
  %731 = vst [vmem:[%s730] sm:$0xff] %v729
  %s732 = scalar_lea.vmem %s0, 96
  %v733 = vld [vmem:[%s732] sm:$0xff]
  %v734 = vld [vmem:[%s732 + $0x8] sm:$0xff]
  %v735 = vld [vmem:[%s732 + $0x10] sm:$0xff]
  %v736 = vld [vmem:[%s732 + $0x18] sm:$0xff]
  %v737 = vld [vmem:[%s1] sm:$0xff]
  %v738 = vld [vmem:[%s1 + $0x8] sm:$0xff]
  %v739 = vld [vmem:[%s1 + $0x10] sm:$0xff]
  %v740 = vld [vmem:[%s1 + $0x18] sm:$0xff]
  %v741 = vld [vmem:[%s1 + $0x20] sm:$0xff]
  %v742 = vld [vmem:[%s1 + $0x28] sm:$0xff]
  %v743 = vld [vmem:[%s1 + $0x30] sm:$0xff]
  %v744 = vld [vmem:[%s1 + $0x38] sm:$0xff]
  %v745 = vld [vmem:[%s1 + $0x40] sm:$0xff]
  %v746 = vld [vmem:[%s1 + $0x48] sm:$0xff]
  %v747 = vld [vmem:[%s1 + $0x50] sm:$0xff]
  %v748 = vld [vmem:[%s1 + $0x58] sm:$0xff]
  %v749 = vld [vmem:[%s1 + $0x60] sm:$0xff]
  %v750 = vld [vmem:[%s1 + $0x68] sm:$0xff]
  %v751 = vld [vmem:[%s1 + $0x70] sm:$0xff]
  %v752 = vld [vmem:[%s1 + $0x78] sm:$0xff]
  %v753 = vld [vmem:[%s1 + $0x80] sm:$0xff]
  %v754 = vld [vmem:[%s1 + $0x88] sm:$0xff]
  %v755 = vld [vmem:[%s1 + $0x90] sm:$0xff]
  %v756 = vld [vmem:[%s1 + $0x98] sm:$0xff]
  %v757 = vld [vmem:[%s1 + $0xa0] sm:$0xff]
  %v758 = vld [vmem:[%s1 + $0xa8] sm:$0xff]
  %v759 = vld [vmem:[%s1 + $0xb0] sm:$0xff]
  %v760 = vld [vmem:[%s1 + $0xb8] sm:$0xff]
  %v761 = vld [vmem:[%s1 + $0xc0] sm:$0xff]
  %v762 = vld [vmem:[%s1 + $0xc8] sm:$0xff]
  %v763 = vld [vmem:[%s1 + $0xd0] sm:$0xff]
  %v764 = vld [vmem:[%s1 + $0xd8] sm:$0xff]
  %v765 = vld [vmem:[%s1 + $0xe0] sm:$0xff]
  %v766 = vld [vmem:[%s1 + $0xe8] sm:$0xff]
  %v767 = vld [vmem:[%s1 + $0xf0] sm:$0xff]
  %v768 = vld [vmem:[%s1 + $0xf8] sm:$0xff]
  %v769 = vld [vmem:[%s1 + $0x100] sm:$0xff]
  %v770 = vld [vmem:[%s1 + $0x108] sm:$0xff]
  %v771 = vld [vmem:[%s1 + $0x110] sm:$0xff]
  %v772 = vld [vmem:[%s1 + $0x118] sm:$0xff]
  %v773 = vld [vmem:[%s1 + $0x120] sm:$0xff]
  %v774 = vld [vmem:[%s1 + $0x128] sm:$0xff]
  %v775 = vld [vmem:[%s1 + $0x130] sm:$0xff]
  %v776 = vld [vmem:[%s1 + $0x138] sm:$0xff]
  %v777 = vld [vmem:[%s1 + $0x140] sm:$0xff]
  %v778 = vld [vmem:[%s1 + $0x148] sm:$0xff]
  %v779 = vld [vmem:[%s1 + $0x150] sm:$0xff]
  %v780 = vld [vmem:[%s1 + $0x158] sm:$0xff]
  %v781 = vld [vmem:[%s1 + $0x160] sm:$0xff]
  %v782 = vld [vmem:[%s1 + $0x168] sm:$0xff]
  %v783 = vld [vmem:[%s1 + $0x170] sm:$0xff]
  %v784 = vld [vmem:[%s1 + $0x178] sm:$0xff]
  %v785 = vld [vmem:[%s1 + $0x180] sm:$0xff]
  %v786 = vld [vmem:[%s1 + $0x188] sm:$0xff]
  %v787 = vld [vmem:[%s1 + $0x190] sm:$0xff]
  %v788 = vld [vmem:[%s1 + $0x198] sm:$0xff]
  %v789 = vld [vmem:[%s1 + $0x1a0] sm:$0xff]
  %v790 = vld [vmem:[%s1 + $0x1a8] sm:$0xff]
  %v791 = vld [vmem:[%s1 + $0x1b0] sm:$0xff]
  %v792 = vld [vmem:[%s1 + $0x1b8] sm:$0xff]
  %v793 = vld [vmem:[%s1 + $0x1c0] sm:$0xff]
  %v794 = vld [vmem:[%s1 + $0x1c8] sm:$0xff]
  %v795 = vld [vmem:[%s1 + $0x1d0] sm:$0xff]
  %v796 = vld [vmem:[%s1 + $0x1d8] sm:$0xff]
  %v797 = vld [vmem:[%s1 + $0x1e0] sm:$0xff]
  %v798 = vld [vmem:[%s1 + $0x1e8] sm:$0xff]
  %v799 = vld [vmem:[%s1 + $0x1f0] sm:$0xff]
  %v800 = vld [vmem:[%s1 + $0x1f8] sm:$0xff]
  %801 = vmatprep.subr.mxu0 %v738
  %802 = vmatpush1.msra.mxu0 %v737
  %803 = vmatprep.subr.mxu0 %v742
  %804 = vmatpush1.msra.mxu0 %v741
  %805 = vmatprep.subr.mxu0 %v746
  %806 = vmatpush1.msra.mxu0 %v745
  %807 = vmatprep.subr.mxu0 %v750
  %808 = vmatpush1.msra.mxu0 %v749
  %809 = vmatprep.subr.mxu0 %v754
  %810 = vmatpush1.msra.mxu0 %v753
  %811 = vmatprep.subr.mxu0 %v758
  %812 = vmatpush1.msra.mxu0 %v757
  %813 = vmatprep.subr.mxu0 %v762
  %814 = vmatpush1.msra.mxu0 %v761
  %815 = vmatprep.subr.mxu0 %v766
  %816 = vmatpush1.msra.mxu0 %v765
  %817 = vmatprep.subr.mxu0 %v770
  %818 = vmatpush1.msra.mxu0 %v769
  %819 = vmatprep.subr.mxu0 %v774
  %820 = vmatpush1.msra.mxu0 %v773
  %821 = vmatprep.subr.mxu0 %v778
  %822 = vmatpush1.msra.mxu0 %v777
  %823 = vmatprep.subr.mxu0 %v782
  %824 = vmatpush1.msra.mxu0 %v781
  %825 = vmatprep.subr.mxu0 %v786
  %826 = vmatpush1.msra.mxu0 %v785
  %827 = vmatprep.subr.mxu0 %v790
  %828 = vmatpush1.msra.mxu0 %v789
  %829 = vmatprep.subr.mxu0 %v794
  %830 = vmatpush1.msra.mxu0 %v793
  %831 = vmatprep.subr.mxu0 %v798
  %832 = vmatpush1.msra.mxu0 %v797
  %833 = vmatprep.subr.mxu0 0.0
  %834 = vmatpush1.msra.mxu0 0.0
  %835 = vmatprep.subr.mxu0 0.0
  %836 = vmatpush1.msra.mxu0 0.0
  %837 = vmatprep.subr.mxu0 0.0
  %838 = vmatpush1.msra.mxu0 0.0
  %839 = vmatprep.subr.mxu0 0.0
  %840 = vmatpush1.msra.mxu0 0.0
  %841 = vmatprep.subr.mxu0 0.0
  %842 = vmatpush1.msra.mxu0 0.0
  %843 = vmatprep.subr.mxu0 0.0
  %844 = vmatpush1.msra.mxu0 0.0
  %845 = vmatprep.subr.mxu0 0.0
  %846 = vmatpush1.msra.mxu0 0.0
  %847 = vmatprep.subr.mxu0 0.0
  %848 = vmatpush1.msra.mxu0 0.0
  %849 = vmatprep.subr.mxu0 0.0
  %850 = vmatpush1.msra.mxu0 0.0
  %851 = vmatprep.subr.mxu0 0.0
  %852 = vmatpush1.msra.mxu0 0.0
  %853 = vmatprep.subr.mxu0 0.0
  %854 = vmatpush1.msra.mxu0 0.0
  %855 = vmatprep.subr.mxu0 0.0
  %856 = vmatpush1.msra.mxu0 0.0
  %857 = vmatprep.subr.mxu0 0.0
  %858 = vmatpush1.msra.mxu0 0.0
  %859 = vmatprep.subr.mxu0 0.0
  %860 = vmatpush1.msra.mxu0 0.0
  %861 = vmatprep.subr.mxu0 0.0
  %862 = vmatpush1.msra.mxu0 0.0
  %863 = vmatprep.subr.mxu0 0.0
  %864 = vmatpush1.msra.mxu0 0.0
  %865 = vmatprep.mubr.f32.mxu0 0.0
  %866 = vmatmul.mubr.f32.gmra.mrb[0].mxu0 %v729
  %v867 = vpop.f32.mrb[0].mxu0
  %v868 = vadd.f32 0.0, %v867
  %v869 = vpop.f32.mrb[0].mxu0
  %v870 = vadd.f32 0.0, %v869
  %871 = vdwg.mxu0
  %872 = vmatprep.subr.mxu0 %v740
  %873 = vmatpush1.msra.mxu0 %v739
  %874 = vmatprep.subr.mxu0 %v744
  %875 = vmatpush1.msra.mxu0 %v743
  %876 = vmatprep.subr.mxu0 %v748
  %877 = vmatpush1.msra.mxu0 %v747
  %878 = vmatprep.subr.mxu0 %v752
  %879 = vmatpush1.msra.mxu0 %v751
  %880 = vmatprep.subr.mxu0 %v756
  %881 = vmatpush1.msra.mxu0 %v755
  %882 = vmatprep.subr.mxu0 %v760
  %883 = vmatpush1.msra.mxu0 %v759
  %884 = vmatprep.subr.mxu0 %v764
  %885 = vmatpush1.msra.mxu0 %v763
  %886 = vmatprep.subr.mxu0 %v768
  %887 = vmatpush1.msra.mxu0 %v767
  %888 = vmatprep.subr.mxu0 %v772
  %889 = vmatpush1.msra.mxu0 %v771
  %890 = vmatprep.subr.mxu0 %v776
  %891 = vmatpush1.msra.mxu0 %v775
  %892 = vmatprep.subr.mxu0 %v780
  %893 = vmatpush1.msra.mxu0 %v779
  %894 = vmatprep.subr.mxu0 %v784
  %895 = vmatpush1.msra.mxu0 %v783
  %896 = vmatprep.subr.mxu0 %v788
  %897 = vmatpush1.msra.mxu0 %v787
  %898 = vmatprep.subr.mxu0 %v792
  %899 = vmatpush1.msra.mxu0 %v791
  %900 = vmatprep.subr.mxu0 %v796
  %901 = vmatpush1.msra.mxu0 %v795
  %902 = vmatprep.subr.mxu0 %v800
  %903 = vmatpush1.msra.mxu0 %v799
  %904 = vmatprep.subr.mxu0 0.0
  %905 = vmatpush1.msra.mxu0 0.0
  %906 = vmatprep.subr.mxu0 0.0
  %907 = vmatpush1.msra.mxu0 0.0
  %908 = vmatprep.subr.mxu0 0.0
  %909 = vmatpush1.msra.mxu0 0.0
  %910 = vmatprep.subr.mxu0 0.0
  %911 = vmatpush1.msra.mxu0 0.0
  %912 = vmatprep.subr.mxu0 0.0
  %913 = vmatpush1.msra.mxu0 0.0
  %914 = vmatprep.subr.mxu0 0.0
  %915 = vmatpush1.msra.mxu0 0.0
  %916 = vmatprep.subr.mxu0 0.0
  %917 = vmatpush1.msra.mxu0 0.0
  %918 = vmatprep.subr.mxu0 0.0
  %919 = vmatpush1.msra.mxu0 0.0
  %920 = vmatprep.subr.mxu0 0.0
  %921 = vmatpush1.msra.mxu0 0.0
  %922 = vmatprep.subr.mxu0 0.0
  %923 = vmatpush1.msra.mxu0 0.0
  %924 = vmatprep.subr.mxu0 0.0
  %925 = vmatpush1.msra.mxu0 0.0
  %926 = vmatprep.subr.mxu0 0.0
  %927 = vmatpush1.msra.mxu0 0.0
  %928 = vmatprep.subr.mxu0 0.0
  %929 = vmatpush1.msra.mxu0 0.0
  %930 = vmatprep.subr.mxu0 0.0
  %931 = vmatpush1.msra.mxu0 0.0
  %932 = vmatprep.subr.mxu0 0.0
  %933 = vmatpush1.msra.mxu0 0.0
  %934 = vmatprep.subr.mxu0 0.0
  %935 = vmatpush1.msra.mxu0 0.0
  %936 = vmatprep.mubr.f32.mxu0 0.0
  %937 = vmatmul.mubr.f32.gmra.mrb[0].mxu0 %v729
  %v938 = vpop.f32.mrb[0].mxu0
  %v939 = vadd.f32 0.0, %v938
  %v940 = vpop.f32.mrb[0].mxu0
  %v941 = vadd.f32 0.0, %v940
  %942 = vdwg.mxu0
  %v943 = vadd.f32 %v733, %v868
  %v944 = vadd.f32 %v734, %v870
  %v945 = vadd.f32 %v735, %v939
  %v946 = vadd.f32 %v736, %v941
  %v947 = vxor.u32 %v943, 2147483648
  %v948 = vmul.f32 %v947, 1.442695
  %v949 = vpow.pop %v948
  %v950 = vadd.f32 %v949, 1.0
  %v951 = vrcp.pop %v950
  %v952 = vmul.f32 1.0, %v951
  %v953 = vxor.u32 %v944, 2147483648
  %v954 = vmul.f32 %v953, 1.442695
  %v955 = vpow.pop %v954
  %v956 = vadd.f32 %v955, 1.0
  %v957 = vrcp.pop %v956
  %v958 = vmul.f32 1.0, %v957
  %v959 = vtanh.pop %v945
  %v960 = vxor.u32 %v946, 2147483648
  %v961 = vmul.f32 %v960, 1.442695
  %v962 = vpow.pop %v961
  %v963 = vadd.f32 %v962, 1.0
  %v964 = vrcp.pop %v963
  %v965 = vmul.f32 1.0, %v964
  %v966 = vmul.f32 %v958, %v727
  %v967 = vmul.f32 %v952, %v959
  %v968 = vadd.f32 %v966, %v967
  %v969 = vtanh.pop %v968
  %v970 = vmul.f32 %v965, %v969
  %s971 = scalar_lea.vmem %s2, 24
  %972 = vst [vmem:[%s971] sm:$0xff] %v970
  %s973 = scalar_lea.vmem %s0, 128
  %v974 = vld [vmem:[%s973] sm:$0xff]
  %v975 = vld [vmem:[%s973 + $0x8] sm:$0xff]
  %v976 = vld [vmem:[%s973 + $0x10] sm:$0xff]
  %v977 = vld [vmem:[%s973 + $0x18] sm:$0xff]
  %v978 = vld [vmem:[%s1] sm:$0xff]
  %v979 = vld [vmem:[%s1 + $0x8] sm:$0xff]
  %v980 = vld [vmem:[%s1 + $0x10] sm:$0xff]
  %v981 = vld [vmem:[%s1 + $0x18] sm:$0xff]
  %v982 = vld [vmem:[%s1 + $0x20] sm:$0xff]
  %v983 = vld [vmem:[%s1 + $0x28] sm:$0xff]
  %v984 = vld [vmem:[%s1 + $0x30] sm:$0xff]
  %v985 = vld [vmem:[%s1 + $0x38] sm:$0xff]
  %v986 = vld [vmem:[%s1 + $0x40] sm:$0xff]
  %v987 = vld [vmem:[%s1 + $0x48] sm:$0xff]
  %v988 = vld [vmem:[%s1 + $0x50] sm:$0xff]
  %v989 = vld [vmem:[%s1 + $0x58] sm:$0xff]
  %v990 = vld [vmem:[%s1 + $0x60] sm:$0xff]
  %v991 = vld [vmem:[%s1 + $0x68] sm:$0xff]
  %v992 = vld [vmem:[%s1 + $0x70] sm:$0xff]
  %v993 = vld [vmem:[%s1 + $0x78] sm:$0xff]
  %v994 = vld [vmem:[%s1 + $0x80] sm:$0xff]
  %v995 = vld [vmem:[%s1 + $0x88] sm:$0xff]
  %v996 = vld [vmem:[%s1 + $0x90] sm:$0xff]
  %v997 = vld [vmem:[%s1 + $0x98] sm:$0xff]
  %v998 = vld [vmem:[%s1 + $0xa0] sm:$0xff]
  %v999 = vld [vmem:[%s1 + $0xa8] sm:$0xff]
  %v1000 = vld [vmem:[%s1 + $0xb0] sm:$0xff]
  %v1001 = vld [vmem:[%s1 + $0xb8] sm:$0xff]
  %v1002 = vld [vmem:[%s1 + $0xc0] sm:$0xff]
  %v1003 = vld [vmem:[%s1 + $0xc8] sm:$0xff]
  %v1004 = vld [vmem:[%s1 + $0xd0] sm:$0xff]
  %v1005 = vld [vmem:[%s1 + $0xd8] sm:$0xff]
  %v1006 = vld [vmem:[%s1 + $0xe0] sm:$0xff]
  %v1007 = vld [vmem:[%s1 + $0xe8] sm:$0xff]
  %v1008 = vld [vmem:[%s1 + $0xf0] sm:$0xff]
  %v1009 = vld [vmem:[%s1 + $0xf8] sm:$0xff]
  %v1010 = vld [vmem:[%s1 + $0x100] sm:$0xff]
  %v1011 = vld [vmem:[%s1 + $0x108] sm:$0xff]
  %v1012 = vld [vmem:[%s1 + $0x110] sm:$0xff]
  %v1013 = vld [vmem:[%s1 + $0x118] sm:$0xff]
  %v1014 = vld [vmem:[%s1 + $0x120] sm:$0xff]
  %v1015 = vld [vmem:[%s1 + $0x128] sm:$0xff]
  %v1016 = vld [vmem:[%s1 + $0x130] sm:$0xff]
  %v1017 = vld [vmem:[%s1 + $0x138] sm:$0xff]
  %v1018 = vld [vmem:[%s1 + $0x140] sm:$0xff]
  %v1019 = vld [vmem:[%s1 + $0x148] sm:$0xff]
  %v1020 = vld [vmem:[%s1 + $0x150] sm:$0xff]
  %v1021 = vld [vmem:[%s1 + $0x158] sm:$0xff]
  %v1022 = vld [vmem:[%s1 + $0x160] sm:$0xff]
  %v1023 = vld [vmem:[%s1 + $0x168] sm:$0xff]
  %v1024 = vld [vmem:[%s1 + $0x170] sm:$0xff]
  %v1025 = vld [vmem:[%s1 + $0x178] sm:$0xff]
  %v1026 = vld [vmem:[%s1 + $0x180] sm:$0xff]
  %v1027 = vld [vmem:[%s1 + $0x188] sm:$0xff]
  %v1028 = vld [vmem:[%s1 + $0x190] sm:$0xff]
  %v1029 = vld [vmem:[%s1 + $0x198] sm:$0xff]
  %v1030 = vld [vmem:[%s1 + $0x1a0] sm:$0xff]
  %v1031 = vld [vmem:[%s1 + $0x1a8] sm:$0xff]
  %v1032 = vld [vmem:[%s1 + $0x1b0] sm:$0xff]
  %v1033 = vld [vmem:[%s1 + $0x1b8] sm:$0xff]
  %v1034 = vld [vmem:[%s1 + $0x1c0] sm:$0xff]
  %v1035 = vld [vmem:[%s1 + $0x1c8] sm:$0xff]
  %v1036 = vld [vmem:[%s1 + $0x1d0] sm:$0xff]
  %v1037 = vld [vmem:[%s1 + $0x1d8] sm:$0xff]
  %v1038 = vld [vmem:[%s1 + $0x1e0] sm:$0xff]
  %v1039 = vld [vmem:[%s1 + $0x1e8] sm:$0xff]
  %v1040 = vld [vmem:[%s1 + $0x1f0] sm:$0xff]
  %v1041 = vld [vmem:[%s1 + $0x1f8] sm:$0xff]
  %1042 = vmatprep.subr.mxu0 %v979
  %1043 = vmatpush1.msra.mxu0 %v978
  %1044 = vmatprep.subr.mxu0 %v983
  %1045 = vmatpush1.msra.mxu0 %v982
  %1046 = vmatprep.subr.mxu0 %v987
  %1047 = vmatpush1.msra.mxu0 %v986
  %1048 = vmatprep.subr.mxu0 %v991
  %1049 = vmatpush1.msra.mxu0 %v990
  %1050 = vmatprep.subr.mxu0 %v995
  %1051 = vmatpush1.msra.mxu0 %v994
  %1052 = vmatprep.subr.mxu0 %v999
  %1053 = vmatpush1.msra.mxu0 %v998
  %1054 = vmatprep.subr.mxu0 %v1003
  %1055 = vmatpush1.msra.mxu0 %v1002
  %1056 = vmatprep.subr.mxu0 %v1007
  %1057 = vmatpush1.msra.mxu0 %v1006
  %1058 = vmatprep.subr.mxu0 %v1011
  %1059 = vmatpush1.msra.mxu0 %v1010
  %1060 = vmatprep.subr.mxu0 %v1015
  %1061 = vmatpush1.msra.mxu0 %v1014
  %1062 = vmatprep.subr.mxu0 %v1019
  %1063 = vmatpush1.msra.mxu0 %v1018
  %1064 = vmatprep.subr.mxu0 %v1023
  %1065 = vmatpush1.msra.mxu0 %v1022
  %1066 = vmatprep.subr.mxu0 %v1027
  %1067 = vmatpush1.msra.mxu0 %v1026
  %1068 = vmatprep.subr.mxu0 %v1031
  %1069 = vmatpush1.msra.mxu0 %v1030
  %1070 = vmatprep.subr.mxu0 %v1035
  %1071 = vmatpush1.msra.mxu0 %v1034
  %1072 = vmatprep.subr.mxu0 %v1039
  %1073 = vmatpush1.msra.mxu0 %v1038
  %1074 = vmatprep.subr.mxu0 0.0
  %1075 = vmatpush1.msra.mxu0 0.0
  %1076 = vmatprep.subr.mxu0 0.0
  %1077 = vmatpush1.msra.mxu0 0.0
  %1078 = vmatprep.subr.mxu0 0.0
  %1079 = vmatpush1.msra.mxu0 0.0
  %1080 = vmatprep.subr.mxu0 0.0
  %1081 = vmatpush1.msra.mxu0 0.0
  %1082 = vmatprep.subr.mxu0 0.0
  %1083 = vmatpush1.msra.mxu0 0.0
  %1084 = vmatprep.subr.mxu0 0.0
  %1085 = vmatpush1.msra.mxu0 0.0
  %1086 = vmatprep.subr.mxu0 0.0
  %1087 = vmatpush1.msra.mxu0 0.0
  %1088 = vmatprep.subr.mxu0 0.0
  %1089 = vmatpush1.msra.mxu0 0.0
  %1090 = vmatprep.subr.mxu0 0.0
  %1091 = vmatpush1.msra.mxu0 0.0
  %1092 = vmatprep.subr.mxu0 0.0
  %1093 = vmatpush1.msra.mxu0 0.0
  %1094 = vmatprep.subr.mxu0 0.0
  %1095 = vmatpush1.msra.mxu0 0.0
  %1096 = vmatprep.subr.mxu0 0.0
  %1097 = vmatpush1.msra.mxu0 0.0
  %1098 = vmatprep.subr.mxu0 0.0
  %1099 = vmatpush1.msra.mxu0 0.0
  %1100 = vmatprep.subr.mxu0 0.0
  %1101 = vmatpush1.msra.mxu0 0.0
  %1102 = vmatprep.subr.mxu0 0.0
  %1103 = vmatpush1.msra.mxu0 0.0
  %1104 = vmatprep.subr.mxu0 0.0
  %1105 = vmatpush1.msra.mxu0 0.0
  %1106 = vmatprep.mubr.f32.mxu0 0.0
  %1107 = vmatmul.mubr.f32.gmra.mrb[0].mxu0 %v970
  %v1108 = vpop.f32.mrb[0].mxu0
  %v1109 = vadd.f32 0.0, %v1108
  %v1110 = vpop.f32.mrb[0].mxu0
  %v1111 = vadd.f32 0.0, %v1110
  %1112 = vdwg.mxu0
  %1113 = vmatprep.subr.mxu0 %v981
  %1114 = vmatpush1.msra.mxu0 %v980
  %1115 = vmatprep.subr.mxu0 %v985
  %1116 = vmatpush1.msra.mxu0 %v984
  %1117 = vmatprep.subr.mxu0 %v989
  %1118 = vmatpush1.msra.mxu0 %v988
  %1119 = vmatprep.subr.mxu0 %v993
  %1120 = vmatpush1.msra.mxu0 %v992
  %1121 = vmatprep.subr.mxu0 %v997
  %1122 = vmatpush1.msra.mxu0 %v996
  %1123 = vmatprep.subr.mxu0 %v1001
  %1124 = vmatpush1.msra.mxu0 %v1000
  %1125 = vmatprep.subr.mxu0 %v1005
  %1126 = vmatpush1.msra.mxu0 %v1004
  %1127 = vmatprep.subr.mxu0 %v1009
  %1128 = vmatpush1.msra.mxu0 %v1008
  %1129 = vmatprep.subr.mxu0 %v1013
  %1130 = vmatpush1.msra.mxu0 %v1012
  %1131 = vmatprep.subr.mxu0 %v1017
  %1132 = vmatpush1.msra.mxu0 %v1016
  %1133 = vmatprep.subr.mxu0 %v1021
  %1134 = vmatpush1.msra.mxu0 %v1020
  %1135 = vmatprep.subr.mxu0 %v1025
  %1136 = vmatpush1.msra.mxu0 %v1024
  %1137 = vmatprep.subr.mxu0 %v1029
  %1138 = vmatpush1.msra.mxu0 %v1028
  %1139 = vmatprep.subr.mxu0 %v1033
  %1140 = vmatpush1.msra.mxu0 %v1032
  %1141 = vmatprep.subr.mxu0 %v1037
  %1142 = vmatpush1.msra.mxu0 %v1036
  %1143 = vmatprep.subr.mxu0 %v1041
  %1144 = vmatpush1.msra.mxu0 %v1040
  %1145 = vmatprep.subr.mxu0 0.0
  %1146 = vmatpush1.msra.mxu0 0.0
  %1147 = vmatprep.subr.mxu0 0.0
  %1148 = vmatpush1.msra.mxu0 0.0
  %1149 = vmatprep.subr.mxu0 0.0
  %1150 = vmatpush1.msra.mxu0 0.0
  %1151 = vmatprep.subr.mxu0 0.0
  %1152 = vmatpush1.msra.mxu0 0.0
  %1153 = vmatprep.subr.mxu0 0.0
  %1154 = vmatpush1.msra.mxu0 0.0
  %1155 = vmatprep.subr.mxu0 0.0
  %1156 = vmatpush1.msra.mxu0 0.0
  %1157 = vmatprep.subr.mxu0 0.0
  %1158 = vmatpush1.msra.mxu0 0.0
  %1159 = vmatprep.subr.mxu0 0.0
  %1160 = vmatpush1.msra.mxu0 0.0
  %1161 = vmatprep.subr.mxu0 0.0
  %1162 = vmatpush1.msra.mxu0 0.0
  %1163 = vmatprep.subr.mxu0 0.0
  %1164 = vmatpush1.msra.mxu0 0.0
  %1165 = vmatprep.subr.mxu0 0.0
  %1166 = vmatpush1.msra.mxu0 0.0
  %1167 = vmatprep.subr.mxu0 0.0
  %1168 = vmatpush1.msra.mxu0 0.0
  %1169 = vmatprep.subr.mxu0 0.0
  %1170 = vmatpush1.msra.mxu0 0.0
  %1171 = vmatprep.subr.mxu0 0.0
  %1172 = vmatpush1.msra.mxu0 0.0
  %1173 = vmatprep.subr.mxu0 0.0
  %1174 = vmatpush1.msra.mxu0 0.0
  %1175 = vmatprep.subr.mxu0 0.0
  %1176 = vmatpush1.msra.mxu0 0.0
  %1177 = vmatprep.mubr.f32.mxu0 0.0
  %1178 = vmatmul.mubr.f32.gmra.mrb[0].mxu0 %v970
  %v1179 = vpop.f32.mrb[0].mxu0
  %v1180 = vadd.f32 0.0, %v1179
  %v1181 = vpop.f32.mrb[0].mxu0
  %v1182 = vadd.f32 0.0, %v1181
  %1183 = vdwg.mxu0
  %v1184 = vadd.f32 %v974, %v1109
  %v1185 = vadd.f32 %v975, %v1111
  %v1186 = vadd.f32 %v976, %v1180
  %v1187 = vadd.f32 %v977, %v1182
  %v1188 = vxor.u32 %v1184, 2147483648
  %v1189 = vmul.f32 %v1188, 1.442695
  %v1190 = vpow.pop %v1189
  %v1191 = vadd.f32 %v1190, 1.0
  %v1192 = vrcp.pop %v1191
  %v1193 = vmul.f32 1.0, %v1192
  %v1194 = vxor.u32 %v1185, 2147483648
  %v1195 = vmul.f32 %v1194, 1.442695
  %v1196 = vpow.pop %v1195
  %v1197 = vadd.f32 %v1196, 1.0
  %v1198 = vrcp.pop %v1197
  %v1199 = vmul.f32 1.0, %v1198
  %v1200 = vtanh.pop %v1186
  %v1201 = vxor.u32 %v1187, 2147483648
  %v1202 = vmul.f32 %v1201, 1.442695
  %v1203 = vpow.pop %v1202
  %v1204 = vadd.f32 %v1203, 1.0
  %v1205 = vrcp.pop %v1204
  %v1206 = vmul.f32 1.0, %v1205
  %v1207 = vmul.f32 %v1199, %v968
  %v1208 = vmul.f32 %v1193, %v1200
  %v1209 = vadd.f32 %v1207, %v1208
  %v1210 = vtanh.pop %v1209
  %v1211 = vmul.f32 %v1206, %v1210
  %s1212 = scalar_lea.vmem %s2, 32
  %1213 = vst [vmem:[%s1212] sm:$0xff] %v1211
  %s1214 = scalar_lea.vmem %s0, 160
  %v1215 = vld [vmem:[%s1214] sm:$0xff]
  %v1216 = vld [vmem:[%s1214 + $0x8] sm:$0xff]
  %v1217 = vld [vmem:[%s1214 + $0x10] sm:$0xff]
  %v1218 = vld [vmem:[%s1214 + $0x18] sm:$0xff]
  %v1219 = vld [vmem:[%s1] sm:$0xff]
  %v1220 = vld [vmem:[%s1 + $0x8] sm:$0xff]
  %v1221 = vld [vmem:[%s1 + $0x10] sm:$0xff]
  %v1222 = vld [vmem:[%s1 + $0x18] sm:$0xff]
  %v1223 = vld [vmem:[%s1 + $0x20] sm:$0xff]
  %v1224 = vld [vmem:[%s1 + $0x28] sm:$0xff]
  %v1225 = vld [vmem:[%s1 + $0x30] sm:$0xff]
  %v1226 = vld [vmem:[%s1 + $0x38] sm:$0xff]
  %v1227 = vld [vmem:[%s1 + $0x40] sm:$0xff]
  %v1228 = vld [vmem:[%s1 + $0x48] sm:$0xff]
  %v1229 = vld [vmem:[%s1 + $0x50] sm:$0xff]
  %v1230 = vld [vmem:[%s1 + $0x58] sm:$0xff]
  %v1231 = vld [vmem:[%s1 + $0x60] sm:$0xff]
  %v1232 = vld [vmem:[%s1 + $0x68] sm:$0xff]
  %v1233 = vld [vmem:[%s1 + $0x70] sm:$0xff]
  %v1234 = vld [vmem:[%s1 + $0x78] sm:$0xff]
  %v1235 = vld [vmem:[%s1 + $0x80] sm:$0xff]
  %v1236 = vld [vmem:[%s1 + $0x88] sm:$0xff]
  %v1237 = vld [vmem:[%s1 + $0x90] sm:$0xff]
  %v1238 = vld [vmem:[%s1 + $0x98] sm:$0xff]
  %v1239 = vld [vmem:[%s1 + $0xa0] sm:$0xff]
  %v1240 = vld [vmem:[%s1 + $0xa8] sm:$0xff]
  %v1241 = vld [vmem:[%s1 + $0xb0] sm:$0xff]
  %v1242 = vld [vmem:[%s1 + $0xb8] sm:$0xff]
  %v1243 = vld [vmem:[%s1 + $0xc0] sm:$0xff]
  %v1244 = vld [vmem:[%s1 + $0xc8] sm:$0xff]
  %v1245 = vld [vmem:[%s1 + $0xd0] sm:$0xff]
  %v1246 = vld [vmem:[%s1 + $0xd8] sm:$0xff]
  %v1247 = vld [vmem:[%s1 + $0xe0] sm:$0xff]
  %v1248 = vld [vmem:[%s1 + $0xe8] sm:$0xff]
  %v1249 = vld [vmem:[%s1 + $0xf0] sm:$0xff]
  %v1250 = vld [vmem:[%s1 + $0xf8] sm:$0xff]
  %v1251 = vld [vmem:[%s1 + $0x100] sm:$0xff]
  %v1252 = vld [vmem:[%s1 + $0x108] sm:$0xff]
  %v1253 = vld [vmem:[%s1 + $0x110] sm:$0xff]
  %v1254 = vld [vmem:[%s1 + $0x118] sm:$0xff]
  %v1255 = vld [vmem:[%s1 + $0x120] sm:$0xff]
  %v1256 = vld [vmem:[%s1 + $0x128] sm:$0xff]
  %v1257 = vld [vmem:[%s1 + $0x130] sm:$0xff]
  %v1258 = vld [vmem:[%s1 + $0x138] sm:$0xff]
  %v1259 = vld [vmem:[%s1 + $0x140] sm:$0xff]
  %v1260 = vld [vmem:[%s1 + $0x148] sm:$0xff]
  %v1261 = vld [vmem:[%s1 + $0x150] sm:$0xff]
  %v1262 = vld [vmem:[%s1 + $0x158] sm:$0xff]
  %v1263 = vld [vmem:[%s1 + $0x160] sm:$0xff]
  %v1264 = vld [vmem:[%s1 + $0x168] sm:$0xff]
  %v1265 = vld [vmem:[%s1 + $0x170] sm:$0xff]
  %v1266 = vld [vmem:[%s1 + $0x178] sm:$0xff]
  %v1267 = vld [vmem:[%s1 + $0x180] sm:$0xff]
  %v1268 = vld [vmem:[%s1 + $0x188] sm:$0xff]
  %v1269 = vld [vmem:[%s1 + $0x190] sm:$0xff]
  %v1270 = vld [vmem:[%s1 + $0x198] sm:$0xff]
  %v1271 = vld [vmem:[%s1 + $0x1a0] sm:$0xff]
  %v1272 = vld [vmem:[%s1 + $0x1a8] sm:$0xff]
  %v1273 = vld [vmem:[%s1 + $0x1b0] sm:$0xff]
  %v1274 = vld [vmem:[%s1 + $0x1b8] sm:$0xff]
  %v1275 = vld [vmem:[%s1 + $0x1c0] sm:$0xff]
  %v1276 = vld [vmem:[%s1 + $0x1c8] sm:$0xff]
  %v1277 = vld [vmem:[%s1 + $0x1d0] sm:$0xff]
  %v1278 = vld [vmem:[%s1 + $0x1d8] sm:$0xff]
  %v1279 = vld [vmem:[%s1 + $0x1e0] sm:$0xff]
  %v1280 = vld [vmem:[%s1 + $0x1e8] sm:$0xff]
  %v1281 = vld [vmem:[%s1 + $0x1f0] sm:$0xff]
  %v1282 = vld [vmem:[%s1 + $0x1f8] sm:$0xff]
  %1283 = vmatprep.subr.mxu0 %v1220
  %1284 = vmatpush1.msra.mxu0 %v1219
  %1285 = vmatprep.subr.mxu0 %v1224
  %1286 = vmatpush1.msra.mxu0 %v1223
  %1287 = vmatprep.subr.mxu0 %v1228
  %1288 = vmatpush1.msra.mxu0 %v1227
  %1289 = vmatprep.subr.mxu0 %v1232
  %1290 = vmatpush1.msra.mxu0 %v1231
  %1291 = vmatprep.subr.mxu0 %v1236
  %1292 = vmatpush1.msra.mxu0 %v1235
  %1293 = vmatprep.subr.mxu0 %v1240
  %1294 = vmatpush1.msra.mxu0 %v1239
  %1295 = vmatprep.subr.mxu0 %v1244
  %1296 = vmatpush1.msra.mxu0 %v1243
  %1297 = vmatprep.subr.mxu0 %v1248
  %1298 = vmatpush1.msra.mxu0 %v1247
  %1299 = vmatprep.subr.mxu0 %v1252
  %1300 = vmatpush1.msra.mxu0 %v1251
  %1301 = vmatprep.subr.mxu0 %v1256
  %1302 = vmatpush1.msra.mxu0 %v1255
  %1303 = vmatprep.subr.mxu0 %v1260
  %1304 = vmatpush1.msra.mxu0 %v1259
  %1305 = vmatprep.subr.mxu0 %v1264
  %1306 = vmatpush1.msra.mxu0 %v1263
  %1307 = vmatprep.subr.mxu0 %v1268
  %1308 = vmatpush1.msra.mxu0 %v1267
  %1309 = vmatprep.subr.mxu0 %v1272
  %1310 = vmatpush1.msra.mxu0 %v1271
  %1311 = vmatprep.subr.mxu0 %v1276
  %1312 = vmatpush1.msra.mxu0 %v1275
  %1313 = vmatprep.subr.mxu0 %v1280
  %1314 = vmatpush1.msra.mxu0 %v1279
  %1315 = vmatprep.subr.mxu0 0.0
  %1316 = vmatpush1.msra.mxu0 0.0
  %1317 = vmatprep.subr.mxu0 0.0
  %1318 = vmatpush1.msra.mxu0 0.0
  %1319 = vmatprep.subr.mxu0 0.0
  %1320 = vmatpush1.msra.mxu0 0.0
  %1321 = vmatprep.subr.mxu0 0.0
  %1322 = vmatpush1.msra.mxu0 0.0
  %1323 = vmatprep.subr.mxu0 0.0
  %1324 = vmatpush1.msra.mxu0 0.0
  %1325 = vmatprep.subr.mxu0 0.0
  %1326 = vmatpush1.msra.mxu0 0.0
  %1327 = vmatprep.subr.mxu0 0.0
  %1328 = vmatpush1.msra.mxu0 0.0
  %1329 = vmatprep.subr.mxu0 0.0
  %1330 = vmatpush1.msra.mxu0 0.0
  %1331 = vmatprep.subr.mxu0 0.0
  %1332 = vmatpush1.msra.mxu0 0.0
  %1333 = vmatprep.subr.mxu0 0.0
  %1334 = vmatpush1.msra.mxu0 0.0
  %1335 = vmatprep.subr.mxu0 0.0
  %1336 = vmatpush1.msra.mxu0 0.0
  %1337 = vmatprep.subr.mxu0 0.0
  %1338 = vmatpush1.msra.mxu0 0.0
  %1339 = vmatprep.subr.mxu0 0.0
  %1340 = vmatpush1.msra.mxu0 0.0
  %1341 = vmatprep.subr.mxu0 0.0
  %1342 = vmatpush1.msra.mxu0 0.0
  %1343 = vmatprep.subr.mxu0 0.0
  %1344 = vmatpush1.msra.mxu0 0.0
  %1345 = vmatprep.subr.mxu0 0.0
  %1346 = vmatpush1.msra.mxu0 0.0
  %1347 = vmatprep.mubr.f32.mxu0 0.0
  %1348 = vmatmul.mubr.f32.gmra.mrb[0].mxu0 %v1211
  %v1349 = vpop.f32.mrb[0].mxu0
  %v1350 = vadd.f32 0.0, %v1349
  %v1351 = vpop.f32.mrb[0].mxu0
  %v1352 = vadd.f32 0.0, %v1351
  %1353 = vdwg.mxu0
  %1354 = vmatprep.subr.mxu0 %v1222
  %1355 = vmatpush1.msra.mxu0 %v1221
  %1356 = vmatprep.subr.mxu0 %v1226
  %1357 = vmatpush1.msra.mxu0 %v1225
  %1358 = vmatprep.subr.mxu0 %v1230
  %1359 = vmatpush1.msra.mxu0 %v1229
  %1360 = vmatprep.subr.mxu0 %v1234
  %1361 = vmatpush1.msra.mxu0 %v1233
  %1362 = vmatprep.subr.mxu0 %v1238
  %1363 = vmatpush1.msra.mxu0 %v1237
  %1364 = vmatprep.subr.mxu0 %v1242
  %1365 = vmatpush1.msra.mxu0 %v1241
  %1366 = vmatprep.subr.mxu0 %v1246
  %1367 = vmatpush1.msra.mxu0 %v1245
  %1368 = vmatprep.subr.mxu0 %v1250
  %1369 = vmatpush1.msra.mxu0 %v1249
  %1370 = vmatprep.subr.mxu0 %v1254
  %1371 = vmatpush1.msra.mxu0 %v1253
  %1372 = vmatprep.subr.mxu0 %v1258
  %1373 = vmatpush1.msra.mxu0 %v1257
  %1374 = vmatprep.subr.mxu0 %v1262
  %1375 = vmatpush1.msra.mxu0 %v1261
  %1376 = vmatprep.subr.mxu0 %v1266
  %1377 = vmatpush1.msra.mxu0 %v1265
  %1378 = vmatprep.subr.mxu0 %v1270
  %1379 = vmatpush1.msra.mxu0 %v1269
  %1380 = vmatprep.subr.mxu0 %v1274
  %1381 = vmatpush1.msra.mxu0 %v1273
  %1382 = vmatprep.subr.mxu0 %v1278
  %1383 = vmatpush1.msra.mxu0 %v1277
  %1384 = vmatprep.subr.mxu0 %v1282
  %1385 = vmatpush1.msra.mxu0 %v1281
  %1386 = vmatprep.subr.mxu0 0.0
  %1387 = vmatpush1.msra.mxu0 0.0
  %1388 = vmatprep.subr.mxu0 0.0
  %1389 = vmatpush1.msra.mxu0 0.0
  %1390 = vmatprep.subr.mxu0 0.0
  %1391 = vmatpush1.msra.mxu0 0.0
  %1392 = vmatprep.subr.mxu0 0.0
  %1393 = vmatpush1.msra.mxu0 0.0
  %1394 = vmatprep.subr.mxu0 0.0
  %1395 = vmatpush1.msra.mxu0 0.0
  %1396 = vmatprep.subr.mxu0 0.0
  %1397 = vmatpush1.msra.mxu0 0.0
  %1398 = vmatprep.subr.mxu0 0.0
  %1399 = vmatpush1.msra.mxu0 0.0
  %1400 = vmatprep.subr.mxu0 0.0
  %1401 = vmatpush1.msra.mxu0 0.0
  %1402 = vmatprep.subr.mxu0 0.0
  %1403 = vmatpush1.msra.mxu0 0.0
  %1404 = vmatprep.subr.mxu0 0.0
  %1405 = vmatpush1.msra.mxu0 0.0
  %1406 = vmatprep.subr.mxu0 0.0
  %1407 = vmatpush1.msra.mxu0 0.0
  %1408 = vmatprep.subr.mxu0 0.0
  %1409 = vmatpush1.msra.mxu0 0.0
  %1410 = vmatprep.subr.mxu0 0.0
  %1411 = vmatpush1.msra.mxu0 0.0
  %1412 = vmatprep.subr.mxu0 0.0
  %1413 = vmatpush1.msra.mxu0 0.0
  %1414 = vmatprep.subr.mxu0 0.0
  %1415 = vmatpush1.msra.mxu0 0.0
  %1416 = vmatprep.subr.mxu0 0.0
  %1417 = vmatpush1.msra.mxu0 0.0
  %1418 = vmatprep.mubr.f32.mxu0 0.0
  %1419 = vmatmul.mubr.f32.gmra.mrb[0].mxu0 %v1211
  %v1420 = vpop.f32.mrb[0].mxu0
  %v1421 = vadd.f32 0.0, %v1420
  %v1422 = vpop.f32.mrb[0].mxu0
  %v1423 = vadd.f32 0.0, %v1422
  %1424 = vdwg.mxu0
  %v1425 = vadd.f32 %v1215, %v1350
  %v1426 = vadd.f32 %v1216, %v1352
  %v1427 = vadd.f32 %v1217, %v1421
  %v1428 = vadd.f32 %v1218, %v1423
  %v1429 = vxor.u32 %v1425, 2147483648
  %v1430 = vmul.f32 %v1429, 1.442695
  %v1431 = vpow.pop %v1430
  %v1432 = vadd.f32 %v1431, 1.0
  %v1433 = vrcp.pop %v1432
  %v1434 = vmul.f32 1.0, %v1433
  %v1435 = vxor.u32 %v1426, 2147483648
  %v1436 = vmul.f32 %v1435, 1.442695
  %v1437 = vpow.pop %v1436
  %v1438 = vadd.f32 %v1437, 1.0
  %v1439 = vrcp.pop %v1438
  %v1440 = vmul.f32 1.0, %v1439
  %v1441 = vtanh.pop %v1427
  %v1442 = vxor.u32 %v1428, 2147483648
  %v1443 = vmul.f32 %v1442, 1.442695
  %v1444 = vpow.pop %v1443
  %v1445 = vadd.f32 %v1444, 1.0
  %v1446 = vrcp.pop %v1445
  %v1447 = vmul.f32 1.0, %v1446
  %v1448 = vmul.f32 %v1440, %v1209
  %v1449 = vmul.f32 %v1434, %v1441
  %v1450 = vadd.f32 %v1448, %v1449
  %v1451 = vtanh.pop %v1450
  %v1452 = vmul.f32 %v1447, %v1451
  %s1453 = scalar_lea.vmem %s2, 40
  %1454 = vst [vmem:[%s1453] sm:$0xff] %v1452
  %s1455 = scalar_lea.vmem %s0, 192
  %v1456 = vld [vmem:[%s1455] sm:$0xff]
  %v1457 = vld [vmem:[%s1455 + $0x8] sm:$0xff]
  %v1458 = vld [vmem:[%s1455 + $0x10] sm:$0xff]
  %v1459 = vld [vmem:[%s1455 + $0x18] sm:$0xff]
  %v1460 = vld [vmem:[%s1] sm:$0xff]
  %v1461 = vld [vmem:[%s1 + $0x8] sm:$0xff]
  %v1462 = vld [vmem:[%s1 + $0x10] sm:$0xff]
  %v1463 = vld [vmem:[%s1 + $0x18] sm:$0xff]
  %v1464 = vld [vmem:[%s1 + $0x20] sm:$0xff]
  %v1465 = vld [vmem:[%s1 + $0x28] sm:$0xff]
  %v1466 = vld [vmem:[%s1 + $0x30] sm:$0xff]
  %v1467 = vld [vmem:[%s1 + $0x38] sm:$0xff]
  %v1468 = vld [vmem:[%s1 + $0x40] sm:$0xff]
  %v1469 = vld [vmem:[%s1 + $0x48] sm:$0xff]
  %v1470 = vld [vmem:[%s1 + $0x50] sm:$0xff]
  %v1471 = vld [vmem:[%s1 + $0x58] sm:$0xff]
  %v1472 = vld [vmem:[%s1 + $0x60] sm:$0xff]
  %v1473 = vld [vmem:[%s1 + $0x68] sm:$0xff]
  %v1474 = vld [vmem:[%s1 + $0x70] sm:$0xff]
  %v1475 = vld [vmem:[%s1 + $0x78] sm:$0xff]
  %v1476 = vld [vmem:[%s1 + $0x80] sm:$0xff]
  %v1477 = vld [vmem:[%s1 + $0x88] sm:$0xff]
  %v1478 = vld [vmem:[%s1 + $0x90] sm:$0xff]
  %v1479 = vld [vmem:[%s1 + $0x98] sm:$0xff]
  %v1480 = vld [vmem:[%s1 + $0xa0] sm:$0xff]
  %v1481 = vld [vmem:[%s1 + $0xa8] sm:$0xff]
  %v1482 = vld [vmem:[%s1 + $0xb0] sm:$0xff]
  %v1483 = vld [vmem:[%s1 + $0xb8] sm:$0xff]
  %v1484 = vld [vmem:[%s1 + $0xc0] sm:$0xff]
  %v1485 = vld [vmem:[%s1 + $0xc8] sm:$0xff]
  %v1486 = vld [vmem:[%s1 + $0xd0] sm:$0xff]
  %v1487 = vld [vmem:[%s1 + $0xd8] sm:$0xff]
  %v1488 = vld [vmem:[%s1 + $0xe0] sm:$0xff]
  %v1489 = vld [vmem:[%s1 + $0xe8] sm:$0xff]
  %v1490 = vld [vmem:[%s1 + $0xf0] sm:$0xff]
  %v1491 = vld [vmem:[%s1 + $0xf8] sm:$0xff]
  %v1492 = vld [vmem:[%s1 + $0x100] sm:$0xff]
  %v1493 = vld [vmem:[%s1 + $0x108] sm:$0xff]
  %v1494 = vld [vmem:[%s1 + $0x110] sm:$0xff]
  %v1495 = vld [vmem:[%s1 + $0x118] sm:$0xff]
  %v1496 = vld [vmem:[%s1 + $0x120] sm:$0xff]
  %v1497 = vld [vmem:[%s1 + $0x128] sm:$0xff]
  %v1498 = vld [vmem:[%s1 + $0x130] sm:$0xff]
  %v1499 = vld [vmem:[%s1 + $0x138] sm:$0xff]
  %v1500 = vld [vmem:[%s1 + $0x140] sm:$0xff]
  %v1501 = vld [vmem:[%s1 + $0x148] sm:$0xff]
  %v1502 = vld [vmem:[%s1 + $0x150] sm:$0xff]
  %v1503 = vld [vmem:[%s1 + $0x158] sm:$0xff]
  %v1504 = vld [vmem:[%s1 + $0x160] sm:$0xff]
  %v1505 = vld [vmem:[%s1 + $0x168] sm:$0xff]
  %v1506 = vld [vmem:[%s1 + $0x170] sm:$0xff]
  %v1507 = vld [vmem:[%s1 + $0x178] sm:$0xff]
  %v1508 = vld [vmem:[%s1 + $0x180] sm:$0xff]
  %v1509 = vld [vmem:[%s1 + $0x188] sm:$0xff]
  %v1510 = vld [vmem:[%s1 + $0x190] sm:$0xff]
  %v1511 = vld [vmem:[%s1 + $0x198] sm:$0xff]
  %v1512 = vld [vmem:[%s1 + $0x1a0] sm:$0xff]
  %v1513 = vld [vmem:[%s1 + $0x1a8] sm:$0xff]
  %v1514 = vld [vmem:[%s1 + $0x1b0] sm:$0xff]
  %v1515 = vld [vmem:[%s1 + $0x1b8] sm:$0xff]
  %v1516 = vld [vmem:[%s1 + $0x1c0] sm:$0xff]
  %v1517 = vld [vmem:[%s1 + $0x1c8] sm:$0xff]
  %v1518 = vld [vmem:[%s1 + $0x1d0] sm:$0xff]
  %v1519 = vld [vmem:[%s1 + $0x1d8] sm:$0xff]
  %v1520 = vld [vmem:[%s1 + $0x1e0] sm:$0xff]
  %v1521 = vld [vmem:[%s1 + $0x1e8] sm:$0xff]
  %v1522 = vld [vmem:[%s1 + $0x1f0] sm:$0xff]
  %v1523 = vld [vmem:[%s1 + $0x1f8] sm:$0xff]
  %1524 = vmatprep.subr.mxu0 %v1461
  %1525 = vmatpush1.msra.mxu0 %v1460
  %1526 = vmatprep.subr.mxu0 %v1465
  %1527 = vmatpush1.msra.mxu0 %v1464
  %1528 = vmatprep.subr.mxu0 %v1469
  %1529 = vmatpush1.msra.mxu0 %v1468
  %1530 = vmatprep.subr.mxu0 %v1473
  %1531 = vmatpush1.msra.mxu0 %v1472
  %1532 = vmatprep.subr.mxu0 %v1477
  %1533 = vmatpush1.msra.mxu0 %v1476
  %1534 = vmatprep.subr.mxu0 %v1481
  %1535 = vmatpush1.msra.mxu0 %v1480
  %1536 = vmatprep.subr.mxu0 %v1485
  %1537 = vmatpush1.msra.mxu0 %v1484
  %1538 = vmatprep.subr.mxu0 %v1489
  %1539 = vmatpush1.msra.mxu0 %v1488
  %1540 = vmatprep.subr.mxu0 %v1493
  %1541 = vmatpush1.msra.mxu0 %v1492
  %1542 = vmatprep.subr.mxu0 %v1497
  %1543 = vmatpush1.msra.mxu0 %v1496
  %1544 = vmatprep.subr.mxu0 %v1501
  %1545 = vmatpush1.msra.mxu0 %v1500
  %1546 = vmatprep.subr.mxu0 %v1505
  %1547 = vmatpush1.msra.mxu0 %v1504
  %1548 = vmatprep.subr.mxu0 %v1509
  %1549 = vmatpush1.msra.mxu0 %v1508
  %1550 = vmatprep.subr.mxu0 %v1513
  %1551 = vmatpush1.msra.mxu0 %v1512
  %1552 = vmatprep.subr.mxu0 %v1517
  %1553 = vmatpush1.msra.mxu0 %v1516
  %1554 = vmatprep.subr.mxu0 %v1521
  %1555 = vmatpush1.msra.mxu0 %v1520
  %1556 = vmatprep.subr.mxu0 0.0
  %1557 = vmatpush1.msra.mxu0 0.0
  %1558 = vmatprep.subr.mxu0 0.0
  %1559 = vmatpush1.msra.mxu0 0.0
  %1560 = vmatprep.subr.mxu0 0.0
  %1561 = vmatpush1.msra.mxu0 0.0
  %1562 = vmatprep.subr.mxu0 0.0
  %1563 = vmatpush1.msra.mxu0 0.0
  %1564 = vmatprep.subr.mxu0 0.0
  %1565 = vmatpush1.msra.mxu0 0.0
  %1566 = vmatprep.subr.mxu0 0.0
  %1567 = vmatpush1.msra.mxu0 0.0
  %1568 = vmatprep.subr.mxu0 0.0
  %1569 = vmatpush1.msra.mxu0 0.0
  %1570 = vmatprep.subr.mxu0 0.0
  %1571 = vmatpush1.msra.mxu0 0.0
  %1572 = vmatprep.subr.mxu0 0.0
  %1573 = vmatpush1.msra.mxu0 0.0
  %1574 = vmatprep.subr.mxu0 0.0
  %1575 = vmatpush1.msra.mxu0 0.0
  %1576 = vmatprep.subr.mxu0 0.0
  %1577 = vmatpush1.msra.mxu0 0.0
  %1578 = vmatprep.subr.mxu0 0.0
  %1579 = vmatpush1.msra.mxu0 0.0
  %1580 = vmatprep.subr.mxu0 0.0
  %1581 = vmatpush1.msra.mxu0 0.0
  %1582 = vmatprep.subr.mxu0 0.0
  %1583 = vmatpush1.msra.mxu0 0.0
  %1584 = vmatprep.subr.mxu0 0.0
  %1585 = vmatpush1.msra.mxu0 0.0
  %1586 = vmatprep.subr.mxu0 0.0
  %1587 = vmatpush1.msra.mxu0 0.0
  %1588 = vmatprep.mubr.f32.mxu0 0.0
  %1589 = vmatmul.mubr.f32.gmra.mrb[0].mxu0 %v1452
  %v1590 = vpop.f32.mrb[0].mxu0
  %v1591 = vadd.f32 0.0, %v1590
  %v1592 = vpop.f32.mrb[0].mxu0
  %v1593 = vadd.f32 0.0, %v1592
  %1594 = vdwg.mxu0
  %1595 = vmatprep.subr.mxu0 %v1463
  %1596 = vmatpush1.msra.mxu0 %v1462
  %1597 = vmatprep.subr.mxu0 %v1467
  %1598 = vmatpush1.msra.mxu0 %v1466
  %1599 = vmatprep.subr.mxu0 %v1471
  %1600 = vmatpush1.msra.mxu0 %v1470
  %1601 = vmatprep.subr.mxu0 %v1475
  %1602 = vmatpush1.msra.mxu0 %v1474
  %1603 = vmatprep.subr.mxu0 %v1479
  %1604 = vmatpush1.msra.mxu0 %v1478
  %1605 = vmatprep.subr.mxu0 %v1483
  %1606 = vmatpush1.msra.mxu0 %v1482
  %1607 = vmatprep.subr.mxu0 %v1487
  %1608 = vmatpush1.msra.mxu0 %v1486
  %1609 = vmatprep.subr.mxu0 %v1491
  %1610 = vmatpush1.msra.mxu0 %v1490
  %1611 = vmatprep.subr.mxu0 %v1495
  %1612 = vmatpush1.msra.mxu0 %v1494
  %1613 = vmatprep.subr.mxu0 %v1499
  %1614 = vmatpush1.msra.mxu0 %v1498
  %1615 = vmatprep.subr.mxu0 %v1503
  %1616 = vmatpush1.msra.mxu0 %v1502
  %1617 = vmatprep.subr.mxu0 %v1507
  %1618 = vmatpush1.msra.mxu0 %v1506
  %1619 = vmatprep.subr.mxu0 %v1511
  %1620 = vmatpush1.msra.mxu0 %v1510
  %1621 = vmatprep.subr.mxu0 %v1515
  %1622 = vmatpush1.msra.mxu0 %v1514
  %1623 = vmatprep.subr.mxu0 %v1519
  %1624 = vmatpush1.msra.mxu0 %v1518
  %1625 = vmatprep.subr.mxu0 %v1523
  %1626 = vmatpush1.msra.mxu0 %v1522
  %1627 = vmatprep.subr.mxu0 0.0
  %1628 = vmatpush1.msra.mxu0 0.0
  %1629 = vmatprep.subr.mxu0 0.0
  %1630 = vmatpush1.msra.mxu0 0.0
  %1631 = vmatprep.subr.mxu0 0.0
  %1632 = vmatpush1.msra.mxu0 0.0
  %1633 = vmatprep.subr.mxu0 0.0
  %1634 = vmatpush1.msra.mxu0 0.0
  %1635 = vmatprep.subr.mxu0 0.0
  %1636 = vmatpush1.msra.mxu0 0.0
  %1637 = vmatprep.subr.mxu0 0.0
  %1638 = vmatpush1.msra.mxu0 0.0
  %1639 = vmatprep.subr.mxu0 0.0
  %1640 = vmatpush1.msra.mxu0 0.0
  %1641 = vmatprep.subr.mxu0 0.0
  %1642 = vmatpush1.msra.mxu0 0.0
  %1643 = vmatprep.subr.mxu0 0.0
  %1644 = vmatpush1.msra.mxu0 0.0
  %1645 = vmatprep.subr.mxu0 0.0
  %1646 = vmatpush1.msra.mxu0 0.0
  %1647 = vmatprep.subr.mxu0 0.0
  %1648 = vmatpush1.msra.mxu0 0.0
  %1649 = vmatprep.subr.mxu0 0.0
  %1650 = vmatpush1.msra.mxu0 0.0
  %1651 = vmatprep.subr.mxu0 0.0
  %1652 = vmatpush1.msra.mxu0 0.0
  %1653 = vmatprep.subr.mxu0 0.0
  %1654 = vmatpush1.msra.mxu0 0.0
  %1655 = vmatprep.subr.mxu0 0.0
  %1656 = vmatpush1.msra.mxu0 0.0
  %1657 = vmatprep.subr.mxu0 0.0
  %1658 = vmatpush1.msra.mxu0 0.0
  %1659 = vmatprep.mubr.f32.mxu0 0.0
  %1660 = vmatmul.mubr.f32.gmra.mrb[0].mxu0 %v1452
  %v1661 = vpop.f32.mrb[0].mxu0
  %v1662 = vadd.f32 0.0, %v1661
  %v1663 = vpop.f32.mrb[0].mxu0
  %v1664 = vadd.f32 0.0, %v1663
  %1665 = vdwg.mxu0
  %v1666 = vadd.f32 %v1456, %v1591
  %v1667 = vadd.f32 %v1457, %v1593
  %v1668 = vadd.f32 %v1458, %v1662
  %v1669 = vadd.f32 %v1459, %v1664
  %v1670 = vxor.u32 %v1666, 2147483648
  %v1671 = vmul.f32 %v1670, 1.442695
  %v1672 = vpow.pop %v1671
  %v1673 = vadd.f32 %v1672, 1.0
  %v1674 = vrcp.pop %v1673
  %v1675 = vmul.f32 1.0, %v1674
  %v1676 = vxor.u32 %v1667, 2147483648
  %v1677 = vmul.f32 %v1676, 1.442695
  %v1678 = vpow.pop %v1677
  %v1679 = vadd.f32 %v1678, 1.0
  %v1680 = vrcp.pop %v1679
  %v1681 = vmul.f32 1.0, %v1680
  %v1682 = vtanh.pop %v1668
  %v1683 = vxor.u32 %v1669, 2147483648
  %v1684 = vmul.f32 %v1683, 1.442695
  %v1685 = vpow.pop %v1684
  %v1686 = vadd.f32 %v1685, 1.0
  %v1687 = vrcp.pop %v1686
  %v1688 = vmul.f32 1.0, %v1687
  %v1689 = vmul.f32 %v1681, %v1450
  %v1690 = vmul.f32 %v1675, %v1682
  %v1691 = vadd.f32 %v1689, %v1690
  %v1692 = vtanh.pop %v1691
  %v1693 = vmul.f32 %v1688, %v1692
  %s1694 = scalar_lea.vmem %s2, 48
  %1695 = vst [vmem:[%s1694] sm:$0xff] %v1693
  %s1696 = scalar_lea.vmem %s0, 224
  %v1697 = vld [vmem:[%s1696] sm:$0xff]
  %v1698 = vld [vmem:[%s1696 + $0x8] sm:$0xff]
  %v1699 = vld [vmem:[%s1696 + $0x10] sm:$0xff]
  %v1700 = vld [vmem:[%s1696 + $0x18] sm:$0xff]
  %v1701 = vld [vmem:[%s1] sm:$0xff]
  %v1702 = vld [vmem:[%s1 + $0x8] sm:$0xff]
  %v1703 = vld [vmem:[%s1 + $0x10] sm:$0xff]
  %v1704 = vld [vmem:[%s1 + $0x18] sm:$0xff]
  %v1705 = vld [vmem:[%s1 + $0x20] sm:$0xff]
  %v1706 = vld [vmem:[%s1 + $0x28] sm:$0xff]
  %v1707 = vld [vmem:[%s1 + $0x30] sm:$0xff]
  %v1708 = vld [vmem:[%s1 + $0x38] sm:$0xff]
  %v1709 = vld [vmem:[%s1 + $0x40] sm:$0xff]
  %v1710 = vld [vmem:[%s1 + $0x48] sm:$0xff]
  %v1711 = vld [vmem:[%s1 + $0x50] sm:$0xff]
  %v1712 = vld [vmem:[%s1 + $0x58] sm:$0xff]
  %v1713 = vld [vmem:[%s1 + $0x60] sm:$0xff]
  %v1714 = vld [vmem:[%s1 + $0x68] sm:$0xff]
  %v1715 = vld [vmem:[%s1 + $0x70] sm:$0xff]
  %v1716 = vld [vmem:[%s1 + $0x78] sm:$0xff]
  %v1717 = vld [vmem:[%s1 + $0x80] sm:$0xff]
  %v1718 = vld [vmem:[%s1 + $0x88] sm:$0xff]
  %v1719 = vld [vmem:[%s1 + $0x90] sm:$0xff]
  %v1720 = vld [vmem:[%s1 + $0x98] sm:$0xff]
  %v1721 = vld [vmem:[%s1 + $0xa0] sm:$0xff]
  %v1722 = vld [vmem:[%s1 + $0xa8] sm:$0xff]
  %v1723 = vld [vmem:[%s1 + $0xb0] sm:$0xff]
  %v1724 = vld [vmem:[%s1 + $0xb8] sm:$0xff]
  %v1725 = vld [vmem:[%s1 + $0xc0] sm:$0xff]
  %v1726 = vld [vmem:[%s1 + $0xc8] sm:$0xff]
  %v1727 = vld [vmem:[%s1 + $0xd0] sm:$0xff]
  %v1728 = vld [vmem:[%s1 + $0xd8] sm:$0xff]
  %v1729 = vld [vmem:[%s1 + $0xe0] sm:$0xff]
  %v1730 = vld [vmem:[%s1 + $0xe8] sm:$0xff]
  %v1731 = vld [vmem:[%s1 + $0xf0] sm:$0xff]
  %v1732 = vld [vmem:[%s1 + $0xf8] sm:$0xff]
  %v1733 = vld [vmem:[%s1 + $0x100] sm:$0xff]
  %v1734 = vld [vmem:[%s1 + $0x108] sm:$0xff]
  %v1735 = vld [vmem:[%s1 + $0x110] sm:$0xff]
  %v1736 = vld [vmem:[%s1 + $0x118] sm:$0xff]
  %v1737 = vld [vmem:[%s1 + $0x120] sm:$0xff]
  %v1738 = vld [vmem:[%s1 + $0x128] sm:$0xff]
  %v1739 = vld [vmem:[%s1 + $0x130] sm:$0xff]
  %v1740 = vld [vmem:[%s1 + $0x138] sm:$0xff]
  %v1741 = vld [vmem:[%s1 + $0x140] sm:$0xff]
  %v1742 = vld [vmem:[%s1 + $0x148] sm:$0xff]
  %v1743 = vld [vmem:[%s1 + $0x150] sm:$0xff]
  %v1744 = vld [vmem:[%s1 + $0x158] sm:$0xff]
  %v1745 = vld [vmem:[%s1 + $0x160] sm:$0xff]
  %v1746 = vld [vmem:[%s1 + $0x168] sm:$0xff]
  %v1747 = vld [vmem:[%s1 + $0x170] sm:$0xff]
  %v1748 = vld [vmem:[%s1 + $0x178] sm:$0xff]
  %v1749 = vld [vmem:[%s1 + $0x180] sm:$0xff]
  %v1750 = vld [vmem:[%s1 + $0x188] sm:$0xff]
  %v1751 = vld [vmem:[%s1 + $0x190] sm:$0xff]
  %v1752 = vld [vmem:[%s1 + $0x198] sm:$0xff]
  %v1753 = vld [vmem:[%s1 + $0x1a0] sm:$0xff]
  %v1754 = vld [vmem:[%s1 + $0x1a8] sm:$0xff]
  %v1755 = vld [vmem:[%s1 + $0x1b0] sm:$0xff]
  %v1756 = vld [vmem:[%s1 + $0x1b8] sm:$0xff]
  %v1757 = vld [vmem:[%s1 + $0x1c0] sm:$0xff]
  %v1758 = vld [vmem:[%s1 + $0x1c8] sm:$0xff]
  %v1759 = vld [vmem:[%s1 + $0x1d0] sm:$0xff]
  %v1760 = vld [vmem:[%s1 + $0x1d8] sm:$0xff]
  %v1761 = vld [vmem:[%s1 + $0x1e0] sm:$0xff]
  %v1762 = vld [vmem:[%s1 + $0x1e8] sm:$0xff]
  %v1763 = vld [vmem:[%s1 + $0x1f0] sm:$0xff]
  %v1764 = vld [vmem:[%s1 + $0x1f8] sm:$0xff]
  %1765 = vmatprep.subr.mxu0 %v1702
  %1766 = vmatpush1.msra.mxu0 %v1701
  %1767 = vmatprep.subr.mxu0 %v1706
  %1768 = vmatpush1.msra.mxu0 %v1705
  %1769 = vmatprep.subr.mxu0 %v1710
  %1770 = vmatpush1.msra.mxu0 %v1709
  %1771 = vmatprep.subr.mxu0 %v1714
  %1772 = vmatpush1.msra.mxu0 %v1713
  %1773 = vmatprep.subr.mxu0 %v1718
  %1774 = vmatpush1.msra.mxu0 %v1717
  %1775 = vmatprep.subr.mxu0 %v1722
  %1776 = vmatpush1.msra.mxu0 %v1721
  %1777 = vmatprep.subr.mxu0 %v1726
  %1778 = vmatpush1.msra.mxu0 %v1725
  %1779 = vmatprep.subr.mxu0 %v1730
  %1780 = vmatpush1.msra.mxu0 %v1729
  %1781 = vmatprep.subr.mxu0 %v1734
  %1782 = vmatpush1.msra.mxu0 %v1733
  %1783 = vmatprep.subr.mxu0 %v1738
  %1784 = vmatpush1.msra.mxu0 %v1737
  %1785 = vmatprep.subr.mxu0 %v1742
  %1786 = vmatpush1.msra.mxu0 %v1741
  %1787 = vmatprep.subr.mxu0 %v1746
  %1788 = vmatpush1.msra.mxu0 %v1745
  %1789 = vmatprep.subr.mxu0 %v1750
  %1790 = vmatpush1.msra.mxu0 %v1749
  %1791 = vmatprep.subr.mxu0 %v1754
  %1792 = vmatpush1.msra.mxu0 %v1753
  %1793 = vmatprep.subr.mxu0 %v1758
  %1794 = vmatpush1.msra.mxu0 %v1757
  %1795 = vmatprep.subr.mxu0 %v1762
  %1796 = vmatpush1.msra.mxu0 %v1761
  %1797 = vmatprep.subr.mxu0 0.0
  %1798 = vmatpush1.msra.mxu0 0.0
  %1799 = vmatprep.subr.mxu0 0.0
  %1800 = vmatpush1.msra.mxu0 0.0
  %1801 = vmatprep.subr.mxu0 0.0
  %1802 = vmatpush1.msra.mxu0 0.0
  %1803 = vmatprep.subr.mxu0 0.0
  %1804 = vmatpush1.msra.mxu0 0.0
  %1805 = vmatprep.subr.mxu0 0.0
  %1806 = vmatpush1.msra.mxu0 0.0
  %1807 = vmatprep.subr.mxu0 0.0
  %1808 = vmatpush1.msra.mxu0 0.0
  %1809 = vmatprep.subr.mxu0 0.0
  %1810 = vmatpush1.msra.mxu0 0.0
  %1811 = vmatprep.subr.mxu0 0.0
  %1812 = vmatpush1.msra.mxu0 0.0
  %1813 = vmatprep.subr.mxu0 0.0
  %1814 = vmatpush1.msra.mxu0 0.0
  %1815 = vmatprep.subr.mxu0 0.0
  %1816 = vmatpush1.msra.mxu0 0.0
  %1817 = vmatprep.subr.mxu0 0.0
  %1818 = vmatpush1.msra.mxu0 0.0
  %1819 = vmatprep.subr.mxu0 0.0
  %1820 = vmatpush1.msra.mxu0 0.0
  %1821 = vmatprep.subr.mxu0 0.0
  %1822 = vmatpush1.msra.mxu0 0.0
  %1823 = vmatprep.subr.mxu0 0.0
  %1824 = vmatpush1.msra.mxu0 0.0
  %1825 = vmatprep.subr.mxu0 0.0
  %1826 = vmatpush1.msra.mxu0 0.0
  %1827 = vmatprep.subr.mxu0 0.0
  %1828 = vmatpush1.msra.mxu0 0.0
  %1829 = vmatprep.mubr.f32.mxu0 0.0
  %1830 = vmatmul.mubr.f32.gmra.mrb[0].mxu0 %v1693
  %v1831 = vpop.f32.mrb[0].mxu0
  %v1832 = vadd.f32 0.0, %v1831
  %v1833 = vpop.f32.mrb[0].mxu0
  %v1834 = vadd.f32 0.0, %v1833
  %1835 = vdwg.mxu0
  %1836 = vmatprep.subr.mxu0 %v1704
  %1837 = vmatpush1.msra.mxu0 %v1703
  %1838 = vmatprep.subr.mxu0 %v1708
  %1839 = vmatpush1.msra.mxu0 %v1707
  %1840 = vmatprep.subr.mxu0 %v1712
  %1841 = vmatpush1.msra.mxu0 %v1711
  %1842 = vmatprep.subr.mxu0 %v1716
  %1843 = vmatpush1.msra.mxu0 %v1715
  %1844 = vmatprep.subr.mxu0 %v1720
  %1845 = vmatpush1.msra.mxu0 %v1719
  %1846 = vmatprep.subr.mxu0 %v1724
  %1847 = vmatpush1.msra.mxu0 %v1723
  %1848 = vmatprep.subr.mxu0 %v1728
  %1849 = vmatpush1.msra.mxu0 %v1727
  %1850 = vmatprep.subr.mxu0 %v1732
  %1851 = vmatpush1.msra.mxu0 %v1731
  %1852 = vmatprep.subr.mxu0 %v1736
  %1853 = vmatpush1.msra.mxu0 %v1735
  %1854 = vmatprep.subr.mxu0 %v1740
  %1855 = vmatpush1.msra.mxu0 %v1739
  %1856 = vmatprep.subr.mxu0 %v1744
  %1857 = vmatpush1.msra.mxu0 %v1743
  %1858 = vmatprep.subr.mxu0 %v1748
  %1859 = vmatpush1.msra.mxu0 %v1747
  %1860 = vmatprep.subr.mxu0 %v1752
  %1861 = vmatpush1.msra.mxu0 %v1751
  %1862 = vmatprep.subr.mxu0 %v1756
  %1863 = vmatpush1.msra.mxu0 %v1755
  %1864 = vmatprep.subr.mxu0 %v1760
  %1865 = vmatpush1.msra.mxu0 %v1759
  %1866 = vmatprep.subr.mxu0 %v1764
  %1867 = vmatpush1.msra.mxu0 %v1763
  %1868 = vmatprep.subr.mxu0 0.0
  %1869 = vmatpush1.msra.mxu0 0.0
  %1870 = vmatprep.subr.mxu0 0.0
  %1871 = vmatpush1.msra.mxu0 0.0
  %1872 = vmatprep.subr.mxu0 0.0
  %1873 = vmatpush1.msra.mxu0 0.0
  %1874 = vmatprep.subr.mxu0 0.0
  %1875 = vmatpush1.msra.mxu0 0.0
  %1876 = vmatprep.subr.mxu0 0.0
  %1877 = vmatpush1.msra.mxu0 0.0
  %1878 = vmatprep.subr.mxu0 0.0
  %1879 = vmatpush1.msra.mxu0 0.0
  %1880 = vmatprep.subr.mxu0 0.0
  %1881 = vmatpush1.msra.mxu0 0.0
  %1882 = vmatprep.subr.mxu0 0.0
  %1883 = vmatpush1.msra.mxu0 0.0
  %1884 = vmatprep.subr.mxu0 0.0
  %1885 = vmatpush1.msra.mxu0 0.0
  %1886 = vmatprep.subr.mxu0 0.0
  %1887 = vmatpush1.msra.mxu0 0.0
  %1888 = vmatprep.subr.mxu0 0.0
  %1889 = vmatpush1.msra.mxu0 0.0
  %1890 = vmatprep.subr.mxu0 0.0
  %1891 = vmatpush1.msra.mxu0 0.0
  %1892 = vmatprep.subr.mxu0 0.0
  %1893 = vmatpush1.msra.mxu0 0.0
  %1894 = vmatprep.subr.mxu0 0.0
  %1895 = vmatpush1.msra.mxu0 0.0
  %1896 = vmatprep.subr.mxu0 0.0
  %1897 = vmatpush1.msra.mxu0 0.0
  %1898 = vmatprep.subr.mxu0 0.0
  %1899 = vmatpush1.msra.mxu0 0.0
  %1900 = vmatprep.mubr.f32.mxu0 0.0
  %1901 = vmatmul.mubr.f32.gmra.mrb[0].mxu0 %v1693
  %v1902 = vpop.f32.mrb[0].mxu0
  %v1903 = vadd.f32 0.0, %v1902
  %v1904 = vpop.f32.mrb[0].mxu0
  %v1905 = vadd.f32 0.0, %v1904
  %1906 = vdwg.mxu0
  %v1907 = vadd.f32 %v1697, %v1832
  %v1908 = vadd.f32 %v1698, %v1834
  %v1909 = vadd.f32 %v1699, %v1903
  %v1910 = vadd.f32 %v1700, %v1905
  %v1911 = vxor.u32 %v1907, 2147483648
  %v1912 = vmul.f32 %v1911, 1.442695
  %v1913 = vpow.pop %v1912
  %v1914 = vadd.f32 %v1913, 1.0
  %v1915 = vrcp.pop %v1914
  %v1916 = vmul.f32 1.0, %v1915
  %v1917 = vxor.u32 %v1908, 2147483648
  %v1918 = vmul.f32 %v1917, 1.442695
  %v1919 = vpow.pop %v1918
  %v1920 = vadd.f32 %v1919, 1.0
  %v1921 = vrcp.pop %v1920
  %v1922 = vmul.f32 1.0, %v1921
  %v1923 = vtanh.pop %v1909
  %v1924 = vxor.u32 %v1910, 2147483648
  %v1925 = vmul.f32 %v1924, 1.442695
  %v1926 = vpow.pop %v1925
  %v1927 = vadd.f32 %v1926, 1.0
  %v1928 = vrcp.pop %v1927
  %v1929 = vmul.f32 1.0, %v1928
  %v1930 = vmul.f32 %v1922, %v1691
  %v1931 = vmul.f32 %v1916, %v1923
  %v1932 = vadd.f32 %v1930, %v1931
  %v1933 = vtanh.pop %v1932
  %v1934 = vmul.f32 %v1929, %v1933
  %s1935 = scalar_lea.vmem %s2, 56
  %1936 = vst [vmem:[%s1935] sm:$0xff] %v1934
  %s1937 = scalar_lea.vmem %s0, 256
  %v1938 = vld [vmem:[%s1937] sm:$0xff]
  %v1939 = vld [vmem:[%s1937 + $0x8] sm:$0xff]
  %v1940 = vld [vmem:[%s1937 + $0x10] sm:$0xff]
  %v1941 = vld [vmem:[%s1937 + $0x18] sm:$0xff]
  %v1942 = vld [vmem:[%s1] sm:$0xff]
  %v1943 = vld [vmem:[%s1 + $0x8] sm:$0xff]
  %v1944 = vld [vmem:[%s1 + $0x10] sm:$0xff]
  %v1945 = vld [vmem:[%s1 + $0x18] sm:$0xff]
  %v1946 = vld [vmem:[%s1 + $0x20] sm:$0xff]
  %v1947 = vld [vmem:[%s1 + $0x28] sm:$0xff]
  %v1948 = vld [vmem:[%s1 + $0x30] sm:$0xff]
  %v1949 = vld [vmem:[%s1 + $0x38] sm:$0xff]
  %v1950 = vld [vmem:[%s1 + $0x40] sm:$0xff]
  %v1951 = vld [vmem:[%s1 + $0x48] sm:$0xff]
  %v1952 = vld [vmem:[%s1 + $0x50] sm:$0xff]
  %v1953 = vld [vmem:[%s1 + $0x58] sm:$0xff]
  %v1954 = vld [vmem:[%s1 + $0x60] sm:$0xff]
  %v1955 = vld [vmem:[%s1 + $0x68] sm:$0xff]
  %v1956 = vld [vmem:[%s1 + $0x70] sm:$0xff]
  %v1957 = vld [vmem:[%s1 + $0x78] sm:$0xff]
  %v1958 = vld [vmem:[%s1 + $0x80] sm:$0xff]
  %v1959 = vld [vmem:[%s1 + $0x88] sm:$0xff]
  %v1960 = vld [vmem:[%s1 + $0x90] sm:$0xff]
  %v1961 = vld [vmem:[%s1 + $0x98] sm:$0xff]
  %v1962 = vld [vmem:[%s1 + $0xa0] sm:$0xff]
  %v1963 = vld [vmem:[%s1 + $0xa8] sm:$0xff]
  %v1964 = vld [vmem:[%s1 + $0xb0] sm:$0xff]
  %v1965 = vld [vmem:[%s1 + $0xb8] sm:$0xff]
  %v1966 = vld [vmem:[%s1 + $0xc0] sm:$0xff]
  %v1967 = vld [vmem:[%s1 + $0xc8] sm:$0xff]
  %v1968 = vld [vmem:[%s1 + $0xd0] sm:$0xff]
  %v1969 = vld [vmem:[%s1 + $0xd8] sm:$0xff]
  %v1970 = vld [vmem:[%s1 + $0xe0] sm:$0xff]
  %v1971 = vld [vmem:[%s1 + $0xe8] sm:$0xff]
  %v1972 = vld [vmem:[%s1 + $0xf0] sm:$0xff]
  %v1973 = vld [vmem:[%s1 + $0xf8] sm:$0xff]
  %v1974 = vld [vmem:[%s1 + $0x100] sm:$0xff]
  %v1975 = vld [vmem:[%s1 + $0x108] sm:$0xff]
  %v1976 = vld [vmem:[%s1 + $0x110] sm:$0xff]
  %v1977 = vld [vmem:[%s1 + $0x118] sm:$0xff]
  %v1978 = vld [vmem:[%s1 + $0x120] sm:$0xff]
  %v1979 = vld [vmem:[%s1 + $0x128] sm:$0xff]
  %v1980 = vld [vmem:[%s1 + $0x130] sm:$0xff]
  %v1981 = vld [vmem:[%s1 + $0x138] sm:$0xff]
  %v1982 = vld [vmem:[%s1 + $0x140] sm:$0xff]
  %v1983 = vld [vmem:[%s1 + $0x148] sm:$0xff]
  %v1984 = vld [vmem:[%s1 + $0x150] sm:$0xff]
  %v1985 = vld [vmem:[%s1 + $0x158] sm:$0xff]
  %v1986 = vld [vmem:[%s1 + $0x160] sm:$0xff]
  %v1987 = vld [vmem:[%s1 + $0x168] sm:$0xff]
  %v1988 = vld [vmem:[%s1 + $0x170] sm:$0xff]
  %v1989 = vld [vmem:[%s1 + $0x178] sm:$0xff]
  %v1990 = vld [vmem:[%s1 + $0x180] sm:$0xff]
  %v1991 = vld [vmem:[%s1 + $0x188] sm:$0xff]
  %v1992 = vld [vmem:[%s1 + $0x190] sm:$0xff]
  %v1993 = vld [vmem:[%s1 + $0x198] sm:$0xff]
  %v1994 = vld [vmem:[%s1 + $0x1a0] sm:$0xff]
  %v1995 = vld [vmem:[%s1 + $0x1a8] sm:$0xff]
  %v1996 = vld [vmem:[%s1 + $0x1b0] sm:$0xff]
  %v1997 = vld [vmem:[%s1 + $0x1b8] sm:$0xff]
  %v1998 = vld [vmem:[%s1 + $0x1c0] sm:$0xff]
  %v1999 = vld [vmem:[%s1 + $0x1c8] sm:$0xff]
  %v2000 = vld [vmem:[%s1 + $0x1d0] sm:$0xff]
  %v2001 = vld [vmem:[%s1 + $0x1d8] sm:$0xff]
  %v2002 = vld [vmem:[%s1 + $0x1e0] sm:$0xff]
  %v2003 = vld [vmem:[%s1 + $0x1e8] sm:$0xff]
  %v2004 = vld [vmem:[%s1 + $0x1f0] sm:$0xff]
  %v2005 = vld [vmem:[%s1 + $0x1f8] sm:$0xff]
  %2006 = vmatprep.subr.mxu0 %v1943
  %2007 = vmatpush1.msra.mxu0 %v1942
  %2008 = vmatprep.subr.mxu0 %v1947
  %2009 = vmatpush1.msra.mxu0 %v1946
  %2010 = vmatprep.subr.mxu0 %v1951
  %2011 = vmatpush1.msra.mxu0 %v1950
  %2012 = vmatprep.subr.mxu0 %v1955
  %2013 = vmatpush1.msra.mxu0 %v1954
  %2014 = vmatprep.subr.mxu0 %v1959
  %2015 = vmatpush1.msra.mxu0 %v1958
  %2016 = vmatprep.subr.mxu0 %v1963
  %2017 = vmatpush1.msra.mxu0 %v1962
  %2018 = vmatprep.subr.mxu0 %v1967
  %2019 = vmatpush1.msra.mxu0 %v1966
  %2020 = vmatprep.subr.mxu0 %v1971
  %2021 = vmatpush1.msra.mxu0 %v1970
  %2022 = vmatprep.subr.mxu0 %v1975
  %2023 = vmatpush1.msra.mxu0 %v1974
  %2024 = vmatprep.subr.mxu0 %v1979
  %2025 = vmatpush1.msra.mxu0 %v1978
  %2026 = vmatprep.subr.mxu0 %v1983
  %2027 = vmatpush1.msra.mxu0 %v1982
  %2028 = vmatprep.subr.mxu0 %v1987
  %2029 = vmatpush1.msra.mxu0 %v1986
  %2030 = vmatprep.subr.mxu0 %v1991
  %2031 = vmatpush1.msra.mxu0 %v1990
  %2032 = vmatprep.subr.mxu0 %v1995
  %2033 = vmatpush1.msra.mxu0 %v1994
  %2034 = vmatprep.subr.mxu0 %v1999
  %2035 = vmatpush1.msra.mxu0 %v1998
  %2036 = vmatprep.subr.mxu0 %v2003
  %2037 = vmatpush1.msra.mxu0 %v2002
  %2038 = vmatprep.subr.mxu0 0.0
  %2039 = vmatpush1.msra.mxu0 0.0
  %2040 = vmatprep.subr.mxu0 0.0
  %2041 = vmatpush1.msra.mxu0 0.0
  %2042 = vmatprep.subr.mxu0 0.0
  %2043 = vmatpush1.msra.mxu0 0.0
  %2044 = vmatprep.subr.mxu0 0.0
  %2045 = vmatpush1.msra.mxu0 0.0
  %2046 = vmatprep.subr.mxu0 0.0
  %2047 = vmatpush1.msra.mxu0 0.0
  %2048 = vmatprep.subr.mxu0 0.0
  %2049 = vmatpush1.msra.mxu0 0.0
  %2050 = vmatprep.subr.mxu0 0.0
  %2051 = vmatpush1.msra.mxu0 0.0
  %2052 = vmatprep.subr.mxu0 0.0
  %2053 = vmatpush1.msra.mxu0 0.0
  %2054 = vmatprep.subr.mxu0 0.0
  %2055 = vmatpush1.msra.mxu0 0.0
  %2056 = vmatprep.subr.mxu0 0.0
  %2057 = vmatpush1.msra.mxu0 0.0
  %2058 = vmatprep.subr.mxu0 0.0
  %2059 = vmatpush1.msra.mxu0 0.0
  %2060 = vmatprep.subr.mxu0 0.0
  %2061 = vmatpush1.msra.mxu0 0.0
  %2062 = vmatprep.subr.mxu0 0.0
  %2063 = vmatpush1.msra.mxu0 0.0
  %2064 = vmatprep.subr.mxu0 0.0
  %2065 = vmatpush1.msra.mxu0 0.0
  %2066 = vmatprep.subr.mxu0 0.0
  %2067 = vmatpush1.msra.mxu0 0.0
  %2068 = vmatprep.subr.mxu0 0.0
  %2069 = vmatpush1.msra.mxu0 0.0
  %2070 = vmatprep.mubr.f32.mxu0 0.0
  %2071 = vmatmul.mubr.f32.gmra.mrb[0].mxu0 %v1934
  %v2072 = vpop.f32.mrb[0].mxu0
  %v2073 = vadd.f32 0.0, %v2072
  %v2074 = vpop.f32.mrb[0].mxu0
  %v2075 = vadd.f32 0.0, %v2074
  %2076 = vdwg.mxu0
  %2077 = vmatprep.subr.mxu0 %v1945
  %2078 = vmatpush1.msra.mxu0 %v1944
  %2079 = vmatprep.subr.mxu0 %v1949
  %2080 = vmatpush1.msra.mxu0 %v1948
  %2081 = vmatprep.subr.mxu0 %v1953
  %2082 = vmatpush1.msra.mxu0 %v1952
  %2083 = vmatprep.subr.mxu0 %v1957
  %2084 = vmatpush1.msra.mxu0 %v1956
  %2085 = vmatprep.subr.mxu0 %v1961
  %2086 = vmatpush1.msra.mxu0 %v1960
  %2087 = vmatprep.subr.mxu0 %v1965
  %2088 = vmatpush1.msra.mxu0 %v1964
  %2089 = vmatprep.subr.mxu0 %v1969
  %2090 = vmatpush1.msra.mxu0 %v1968
  %2091 = vmatprep.subr.mxu0 %v1973
  %2092 = vmatpush1.msra.mxu0 %v1972
  %2093 = vmatprep.subr.mxu0 %v1977
  %2094 = vmatpush1.msra.mxu0 %v1976
  %2095 = vmatprep.subr.mxu0 %v1981
  %2096 = vmatpush1.msra.mxu0 %v1980
  %2097 = vmatprep.subr.mxu0 %v1985
  %2098 = vmatpush1.msra.mxu0 %v1984
  %2099 = vmatprep.subr.mxu0 %v1989
  %2100 = vmatpush1.msra.mxu0 %v1988
  %2101 = vmatprep.subr.mxu0 %v1993
  %2102 = vmatpush1.msra.mxu0 %v1992
  %2103 = vmatprep.subr.mxu0 %v1997
  %2104 = vmatpush1.msra.mxu0 %v1996
  %2105 = vmatprep.subr.mxu0 %v2001
  %2106 = vmatpush1.msra.mxu0 %v2000
  %2107 = vmatprep.subr.mxu0 %v2005
  %2108 = vmatpush1.msra.mxu0 %v2004
  %2109 = vmatprep.subr.mxu0 0.0
  %2110 = vmatpush1.msra.mxu0 0.0
  %2111 = vmatprep.subr.mxu0 0.0
  %2112 = vmatpush1.msra.mxu0 0.0
  %2113 = vmatprep.subr.mxu0 0.0
  %2114 = vmatpush1.msra.mxu0 0.0
  %2115 = vmatprep.subr.mxu0 0.0
  %2116 = vmatpush1.msra.mxu0 0.0
  %2117 = vmatprep.subr.mxu0 0.0
  %2118 = vmatpush1.msra.mxu0 0.0
  %2119 = vmatprep.subr.mxu0 0.0
  %2120 = vmatpush1.msra.mxu0 0.0
  %2121 = vmatprep.subr.mxu0 0.0
  %2122 = vmatpush1.msra.mxu0 0.0
  %2123 = vmatprep.subr.mxu0 0.0
  %2124 = vmatpush1.msra.mxu0 0.0
  %2125 = vmatprep.subr.mxu0 0.0
  %2126 = vmatpush1.msra.mxu0 0.0
  %2127 = vmatprep.subr.mxu0 0.0
  %2128 = vmatpush1.msra.mxu0 0.0
  %2129 = vmatprep.subr.mxu0 0.0
  %2130 = vmatpush1.msra.mxu0 0.0
  %2131 = vmatprep.subr.mxu0 0.0
  %2132 = vmatpush1.msra.mxu0 0.0
  %2133 = vmatprep.subr.mxu0 0.0
  %2134 = vmatpush1.msra.mxu0 0.0
  %2135 = vmatprep.subr.mxu0 0.0
  %2136 = vmatpush1.msra.mxu0 0.0
  %2137 = vmatprep.subr.mxu0 0.0
  %2138 = vmatpush1.msra.mxu0 0.0
  %2139 = vmatprep.subr.mxu0 0.0
  %2140 = vmatpush1.msra.mxu0 0.0
  %2141 = vmatprep.mubr.f32.mxu0 0.0
  %2142 = vmatmul.mubr.f32.gmra.mrb[0].mxu0 %v1934
  %v2143 = vpop.f32.mrb[0].mxu0
  %v2144 = vadd.f32 0.0, %v2143
  %v2145 = vpop.f32.mrb[0].mxu0
  %v2146 = vadd.f32 0.0, %v2145
  %2147 = vdwg.mxu0
  %v2148 = vadd.f32 %v1938, %v2073
  %v2149 = vadd.f32 %v1939, %v2075
  %v2150 = vadd.f32 %v1940, %v2144
  %v2151 = vadd.f32 %v1941, %v2146
  %v2152 = vxor.u32 %v2148, 2147483648
  %v2153 = vmul.f32 %v2152, 1.442695
  %v2154 = vpow.pop %v2153
  %v2155 = vadd.f32 %v2154, 1.0
  %v2156 = vrcp.pop %v2155
  %v2157 = vmul.f32 1.0, %v2156
  %v2158 = vxor.u32 %v2149, 2147483648
  %v2159 = vmul.f32 %v2158, 1.442695
  %v2160 = vpow.pop %v2159
  %v2161 = vadd.f32 %v2160, 1.0
  %v2162 = vrcp.pop %v2161
  %v2163 = vmul.f32 1.0, %v2162
  %v2164 = vtanh.pop %v2150
  %v2165 = vxor.u32 %v2151, 2147483648
  %v2166 = vmul.f32 %v2165, 1.442695
  %v2167 = vpow.pop %v2166
  %v2168 = vadd.f32 %v2167, 1.0
  %v2169 = vrcp.pop %v2168
  %v2170 = vmul.f32 1.0, %v2169
  %v2171 = vmul.f32 %v2163, %v1932
  %v2172 = vmul.f32 %v2157, %v2164
  %v2173 = vadd.f32 %v2171, %v2172
  %v2174 = vtanh.pop %v2173
  %v2175 = vmul.f32 %v2170, %v2174
  %s2176 = scalar_lea.vmem %s2, 64
  %2177 = vst [vmem:[%s2176] sm:$0xff] %v2175
  %s2178 = scalar_lea.vmem %s0, 288
  %v2179 = vld [vmem:[%s2178] sm:$0xff]
  %v2180 = vld [vmem:[%s2178 + $0x8] sm:$0xff]
  %v2181 = vld [vmem:[%s2178 + $0x10] sm:$0xff]
  %v2182 = vld [vmem:[%s2178 + $0x18] sm:$0xff]
  %v2183 = vld [vmem:[%s1] sm:$0xff]
  %v2184 = vld [vmem:[%s1 + $0x8] sm:$0xff]
  %v2185 = vld [vmem:[%s1 + $0x10] sm:$0xff]
  %v2186 = vld [vmem:[%s1 + $0x18] sm:$0xff]
  %v2187 = vld [vmem:[%s1 + $0x20] sm:$0xff]
  %v2188 = vld [vmem:[%s1 + $0x28] sm:$0xff]
  %v2189 = vld [vmem:[%s1 + $0x30] sm:$0xff]
  %v2190 = vld [vmem:[%s1 + $0x38] sm:$0xff]
  %v2191 = vld [vmem:[%s1 + $0x40] sm:$0xff]
  %v2192 = vld [vmem:[%s1 + $0x48] sm:$0xff]
  %v2193 = vld [vmem:[%s1 + $0x50] sm:$0xff]
  %v2194 = vld [vmem:[%s1 + $0x58] sm:$0xff]
  %v2195 = vld [vmem:[%s1 + $0x60] sm:$0xff]
  %v2196 = vld [vmem:[%s1 + $0x68] sm:$0xff]
  %v2197 = vld [vmem:[%s1 + $0x70] sm:$0xff]
  %v2198 = vld [vmem:[%s1 + $0x78] sm:$0xff]
  %v2199 = vld [vmem:[%s1 + $0x80] sm:$0xff]
  %v2200 = vld [vmem:[%s1 + $0x88] sm:$0xff]
  %v2201 = vld [vmem:[%s1 + $0x90] sm:$0xff]
  %v2202 = vld [vmem:[%s1 + $0x98] sm:$0xff]
  %v2203 = vld [vmem:[%s1 + $0xa0] sm:$0xff]
  %v2204 = vld [vmem:[%s1 + $0xa8] sm:$0xff]
  %v2205 = vld [vmem:[%s1 + $0xb0] sm:$0xff]
  %v2206 = vld [vmem:[%s1 + $0xb8] sm:$0xff]
  %v2207 = vld [vmem:[%s1 + $0xc0] sm:$0xff]
  %v2208 = vld [vmem:[%s1 + $0xc8] sm:$0xff]
  %v2209 = vld [vmem:[%s1 + $0xd0] sm:$0xff]
  %v2210 = vld [vmem:[%s1 + $0xd8] sm:$0xff]
  %v2211 = vld [vmem:[%s1 + $0xe0] sm:$0xff]
  %v2212 = vld [vmem:[%s1 + $0xe8] sm:$0xff]
  %v2213 = vld [vmem:[%s1 + $0xf0] sm:$0xff]
  %v2214 = vld [vmem:[%s1 + $0xf8] sm:$0xff]
  %v2215 = vld [vmem:[%s1 + $0x100] sm:$0xff]
  %v2216 = vld [vmem:[%s1 + $0x108] sm:$0xff]
  %v2217 = vld [vmem:[%s1 + $0x110] sm:$0xff]
  %v2218 = vld [vmem:[%s1 + $0x118] sm:$0xff]
  %v2219 = vld [vmem:[%s1 + $0x120] sm:$0xff]
  %v2220 = vld [vmem:[%s1 + $0x128] sm:$0xff]
  %v2221 = vld [vmem:[%s1 + $0x130] sm:$0xff]
  %v2222 = vld [vmem:[%s1 + $0x138] sm:$0xff]
  %v2223 = vld [vmem:[%s1 + $0x140] sm:$0xff]
  %v2224 = vld [vmem:[%s1 + $0x148] sm:$0xff]
  %v2225 = vld [vmem:[%s1 + $0x150] sm:$0xff]
  %v2226 = vld [vmem:[%s1 + $0x158] sm:$0xff]
  %v2227 = vld [vmem:[%s1 + $0x160] sm:$0xff]
  %v2228 = vld [vmem:[%s1 + $0x168] sm:$0xff]
  %v2229 = vld [vmem:[%s1 + $0x170] sm:$0xff]
  %v2230 = vld [vmem:[%s1 + $0x178] sm:$0xff]
  %v2231 = vld [vmem:[%s1 + $0x180] sm:$0xff]
  %v2232 = vld [vmem:[%s1 + $0x188] sm:$0xff]
  %v2233 = vld [vmem:[%s1 + $0x190] sm:$0xff]
  %v2234 = vld [vmem:[%s1 + $0x198] sm:$0xff]
  %v2235 = vld [vmem:[%s1 + $0x1a0] sm:$0xff]
  %v2236 = vld [vmem:[%s1 + $0x1a8] sm:$0xff]
  %v2237 = vld [vmem:[%s1 + $0x1b0] sm:$0xff]
  %v2238 = vld [vmem:[%s1 + $0x1b8] sm:$0xff]
  %v2239 = vld [vmem:[%s1 + $0x1c0] sm:$0xff]
  %v2240 = vld [vmem:[%s1 + $0x1c8] sm:$0xff]
  %v2241 = vld [vmem:[%s1 + $0x1d0] sm:$0xff]
  %v2242 = vld [vmem:[%s1 + $0x1d8] sm:$0xff]
  %v2243 = vld [vmem:[%s1 + $0x1e0] sm:$0xff]
  %v2244 = vld [vmem:[%s1 + $0x1e8] sm:$0xff]
  %v2245 = vld [vmem:[%s1 + $0x1f0] sm:$0xff]
  %v2246 = vld [vmem:[%s1 + $0x1f8] sm:$0xff]
  %2247 = vmatprep.subr.mxu0 %v2184
  %2248 = vmatpush1.msra.mxu0 %v2183
  %2249 = vmatprep.subr.mxu0 %v2188
  %2250 = vmatpush1.msra.mxu0 %v2187
  %2251 = vmatprep.subr.mxu0 %v2192
  %2252 = vmatpush1.msra.mxu0 %v2191
  %2253 = vmatprep.subr.mxu0 %v2196
  %2254 = vmatpush1.msra.mxu0 %v2195
  %2255 = vmatprep.subr.mxu0 %v2200
  %2256 = vmatpush1.msra.mxu0 %v2199
  %2257 = vmatprep.subr.mxu0 %v2204
  %2258 = vmatpush1.msra.mxu0 %v2203
  %2259 = vmatprep.subr.mxu0 %v2208
  %2260 = vmatpush1.msra.mxu0 %v2207
  %2261 = vmatprep.subr.mxu0 %v2212
  %2262 = vmatpush1.msra.mxu0 %v2211
  %2263 = vmatprep.subr.mxu0 %v2216
  %2264 = vmatpush1.msra.mxu0 %v2215
  %2265 = vmatprep.subr.mxu0 %v2220
  %2266 = vmatpush1.msra.mxu0 %v2219
  %2267 = vmatprep.subr.mxu0 %v2224
  %2268 = vmatpush1.msra.mxu0 %v2223
  %2269 = vmatprep.subr.mxu0 %v2228
  %2270 = vmatpush1.msra.mxu0 %v2227
  %2271 = vmatprep.subr.mxu0 %v2232
  %2272 = vmatpush1.msra.mxu0 %v2231
  %2273 = vmatprep.subr.mxu0 %v2236
  %2274 = vmatpush1.msra.mxu0 %v2235
  %2275 = vmatprep.subr.mxu0 %v2240
  %2276 = vmatpush1.msra.mxu0 %v2239
  %2277 = vmatprep.subr.mxu0 %v2244
  %2278 = vmatpush1.msra.mxu0 %v2243
  %2279 = vmatprep.subr.mxu0 0.0
  %2280 = vmatpush1.msra.mxu0 0.0
  %2281 = vmatprep.subr.mxu0 0.0
  %2282 = vmatpush1.msra.mxu0 0.0
  %2283 = vmatprep.subr.mxu0 0.0
  %2284 = vmatpush1.msra.mxu0 0.0
  %2285 = vmatprep.subr.mxu0 0.0
  %2286 = vmatpush1.msra.mxu0 0.0
  %2287 = vmatprep.subr.mxu0 0.0
  %2288 = vmatpush1.msra.mxu0 0.0
  %2289 = vmatprep.subr.mxu0 0.0
  %2290 = vmatpush1.msra.mxu0 0.0
  %2291 = vmatprep.subr.mxu0 0.0
  %2292 = vmatpush1.msra.mxu0 0.0
  %2293 = vmatprep.subr.mxu0 0.0
  %2294 = vmatpush1.msra.mxu0 0.0
  %2295 = vmatprep.subr.mxu0 0.0
  %2296 = vmatpush1.msra.mxu0 0.0
  %2297 = vmatprep.subr.mxu0 0.0
  %2298 = vmatpush1.msra.mxu0 0.0
  %2299 = vmatprep.subr.mxu0 0.0
  %2300 = vmatpush1.msra.mxu0 0.0
  %2301 = vmatprep.subr.mxu0 0.0
  %2302 = vmatpush1.msra.mxu0 0.0
  %2303 = vmatprep.subr.mxu0 0.0
  %2304 = vmatpush1.msra.mxu0 0.0
  %2305 = vmatprep.subr.mxu0 0.0
  %2306 = vmatpush1.msra.mxu0 0.0
  %2307 = vmatprep.subr.mxu0 0.0
  %2308 = vmatpush1.msra.mxu0 0.0
  %2309 = vmatprep.subr.mxu0 0.0
  %2310 = vmatpush1.msra.mxu0 0.0
  %2311 = vmatprep.mubr.f32.mxu0 0.0
  %2312 = vmatmul.mubr.f32.gmra.mrb[0].mxu0 %v2175
  %v2313 = vpop.f32.mrb[0].mxu0
  %v2314 = vadd.f32 0.0, %v2313
  %v2315 = vpop.f32.mrb[0].mxu0
  %v2316 = vadd.f32 0.0, %v2315
  %2317 = vdwg.mxu0
  %2318 = vmatprep.subr.mxu0 %v2186
  %2319 = vmatpush1.msra.mxu0 %v2185
  %2320 = vmatprep.subr.mxu0 %v2190
  %2321 = vmatpush1.msra.mxu0 %v2189
  %2322 = vmatprep.subr.mxu0 %v2194
  %2323 = vmatpush1.msra.mxu0 %v2193
  %2324 = vmatprep.subr.mxu0 %v2198
  %2325 = vmatpush1.msra.mxu0 %v2197
  %2326 = vmatprep.subr.mxu0 %v2202
  %2327 = vmatpush1.msra.mxu0 %v2201
  %2328 = vmatprep.subr.mxu0 %v2206
  %2329 = vmatpush1.msra.mxu0 %v2205
  %2330 = vmatprep.subr.mxu0 %v2210
  %2331 = vmatpush1.msra.mxu0 %v2209
  %2332 = vmatprep.subr.mxu0 %v2214
  %2333 = vmatpush1.msra.mxu0 %v2213
  %2334 = vmatprep.subr.mxu0 %v2218
  %2335 = vmatpush1.msra.mxu0 %v2217
  %2336 = vmatprep.subr.mxu0 %v2222
  %2337 = vmatpush1.msra.mxu0 %v2221
  %2338 = vmatprep.subr.mxu0 %v2226
  %2339 = vmatpush1.msra.mxu0 %v2225
  %2340 = vmatprep.subr.mxu0 %v2230
  %2341 = vmatpush1.msra.mxu0 %v2229
  %2342 = vmatprep.subr.mxu0 %v2234
  %2343 = vmatpush1.msra.mxu0 %v2233
  %2344 = vmatprep.subr.mxu0 %v2238
  %2345 = vmatpush1.msra.mxu0 %v2237
  %2346 = vmatprep.subr.mxu0 %v2242
  %2347 = vmatpush1.msra.mxu0 %v2241
  %2348 = vmatprep.subr.mxu0 %v2246
  %2349 = vmatpush1.msra.mxu0 %v2245
  %2350 = vmatprep.subr.mxu0 0.0
  %2351 = vmatpush1.msra.mxu0 0.0
  %2352 = vmatprep.subr.mxu0 0.0
  %2353 = vmatpush1.msra.mxu0 0.0
  %2354 = vmatprep.subr.mxu0 0.0
  %2355 = vmatpush1.msra.mxu0 0.0
  %2356 = vmatprep.subr.mxu0 0.0
  %2357 = vmatpush1.msra.mxu0 0.0
  %2358 = vmatprep.subr.mxu0 0.0
  %2359 = vmatpush1.msra.mxu0 0.0
  %2360 = vmatprep.subr.mxu0 0.0
  %2361 = vmatpush1.msra.mxu0 0.0
  %2362 = vmatprep.subr.mxu0 0.0
  %2363 = vmatpush1.msra.mxu0 0.0
  %2364 = vmatprep.subr.mxu0 0.0
  %2365 = vmatpush1.msra.mxu0 0.0
  %2366 = vmatprep.subr.mxu0 0.0
  %2367 = vmatpush1.msra.mxu0 0.0
  %2368 = vmatprep.subr.mxu0 0.0
  %2369 = vmatpush1.msra.mxu0 0.0
  %2370 = vmatprep.subr.mxu0 0.0
  %2371 = vmatpush1.msra.mxu0 0.0
  %2372 = vmatprep.subr.mxu0 0.0
  %2373 = vmatpush1.msra.mxu0 0.0
  %2374 = vmatprep.subr.mxu0 0.0
  %2375 = vmatpush1.msra.mxu0 0.0
  %2376 = vmatprep.subr.mxu0 0.0
  %2377 = vmatpush1.msra.mxu0 0.0
  %2378 = vmatprep.subr.mxu0 0.0
  %2379 = vmatpush1.msra.mxu0 0.0
  %2380 = vmatprep.subr.mxu0 0.0
  %2381 = vmatpush1.msra.mxu0 0.0
  %2382 = vmatprep.mubr.f32.mxu0 0.0
  %2383 = vmatmul.mubr.f32.gmra.mrb[0].mxu0 %v2175
  %v2384 = vpop.f32.mrb[0].mxu0
  %v2385 = vadd.f32 0.0, %v2384
  %v2386 = vpop.f32.mrb[0].mxu0
  %v2387 = vadd.f32 0.0, %v2386
  %2388 = vdwg.mxu0
  %v2389 = vadd.f32 %v2179, %v2314
  %v2390 = vadd.f32 %v2180, %v2316
  %v2391 = vadd.f32 %v2181, %v2385
  %v2392 = vadd.f32 %v2182, %v2387
  %v2393 = vxor.u32 %v2389, 2147483648
  %v2394 = vmul.f32 %v2393, 1.442695
  %v2395 = vpow.pop %v2394
  %v2396 = vadd.f32 %v2395, 1.0
  %v2397 = vrcp.pop %v2396
  %v2398 = vmul.f32 1.0, %v2397
  %v2399 = vxor.u32 %v2390, 2147483648
  %v2400 = vmul.f32 %v2399, 1.442695
  %v2401 = vpow.pop %v2400
  %v2402 = vadd.f32 %v2401, 1.0
  %v2403 = vrcp.pop %v2402
  %v2404 = vmul.f32 1.0, %v2403
  %v2405 = vtanh.pop %v2391
  %v2406 = vxor.u32 %v2392, 2147483648
  %v2407 = vmul.f32 %v2406, 1.442695
  %v2408 = vpow.pop %v2407
  %v2409 = vadd.f32 %v2408, 1.0
  %v2410 = vrcp.pop %v2409
  %v2411 = vmul.f32 1.0, %v2410
  %v2412 = vmul.f32 %v2404, %v2173
  %v2413 = vmul.f32 %v2398, %v2405
  %v2414 = vadd.f32 %v2412, %v2413
  %v2415 = vtanh.pop %v2414
  %v2416 = vmul.f32 %v2411, %v2415
  %s2417 = scalar_lea.vmem %s2, 72
  %2418 = vst [vmem:[%s2417] sm:$0xff] %v2416
  // Predicated region
  $region10: #{decoder_forward.4} parent=0 // pred_check
    _
  $region11: #{decoder_forward.4} parent=0 // pred_check_branch
    %2420 = sbr.rel (0) target = $region13
  $region12: #{decoder_forward.4} parent=0 // pred_region
    _
  $region13: #{decoder_forward.4} parent=0 // pred_fallthru
    _
  // Predicated region
  $region14: #{decoder_forward.4} parent=0 // pred_check
    _
  $region15: #{decoder_forward.4} parent=0 // pred_check_branch
    %2422 = sbr.rel (0) target = $region17
  $region16: #{decoder_forward.4} parent=0 // pred_region
    _
  $region17: #{decoder_forward.4} parent=0 // pred_fallthru
    _

</llo_original>
